<compile_context>
chip_gen: v5e
topology: v5e:2x2
jax: 0.10.0
libtpu: 0.0.40
codegen_flags: <defaults>
</compile_context>

<pallas_src>
import functools

import jax
import jax.numpy as jnp
from jax.experimental import pallas as pl
from jax.experimental.pallas import tpu as pltpu

LEAKY_SLOPE = 0.01  # PyTorch nn.LeakyReLU default negative_slope


# ---------------------------------------------------------------------------
# In-kernel helpers
# ---------------------------------------------------------------------------
def _roll_flat(x2d, shift, hw):
    """Circular roll along the flattened-spatial (lane) axis.

    Same semantics as jnp.roll(x2d, shift, axis=1):
      out[:, p] = x[:, (p - shift) % hw].
    Lowered to an XLU rotate (free slot relative to this kernel's bottleneck).
    """
    return pltpu.roll(x2d, shift % hw, axis=1)


def _write_taps(dst_ref, row0, blk, mask_w0, mask_wl, W, hw):
    """Write the 9 circular-shift taps of `blk` (C, hw) f32 into
    dst_ref[row0 + tap*C : row0 + (tap+1)*C, :], tap = dy*3 + dx.

    Tap (dy, dx) holds in[ci, (y+dy-1)%H, (x+dx-1)%W] flattened over (y, x),
    i.e. exactly the im2col rows a circular 3x3 conv needs.  Each tap is
    stored immediately (one (C, hw) store at an 8-row-aligned offset), so at
    most ~3 shifted copies are live at any time (low vreg pressure).
    """
    C = blk.shape[0]
    # Circular shift along w (within each image row of length W): a flat lane
    # roll is correct except at the row boundary, patched by a second roll.
    w_shift = {
        1: jnp.where(mask_w0, _roll_flat(blk, 1 - W, hw),           # dx == 0
                     _roll_flat(blk, 1, hw)),
        0: blk,                                                      # dx == 1
        -1: jnp.where(mask_wl, _roll_flat(blk, W - 1, hw),           # dx == 2
                      _roll_flat(blk, -1, hw)),
    }
    for dy in range(3):
        h_shift = (1 - dy) * W      # circular shift along h == flat roll by +-W
        for dx in range(3):
            v = w_shift[1 - dx]
            if h_shift:
                v = _roll_flat(v, h_shift, hw)
            tap = dy * 3 + dx
            dst_ref[pl.ds(row0 + tap * C, C), :] = v.astype(dst_ref.dtype)


def _matmul_f32(w, xcol):
    """(Cout, K) @ (K, hw) -> (Cout, hw) f32 accumulation on the MXU."""
    return jax.lax.dot_general(
        w, xcol,
        dimension_numbers=(((1,), (0,)), ((), ())),
        preferred_element_type=jnp.float32)


# ---------------------------------------------------------------------------
# Fused Dense_block kernel: one grid step == one batch element
# ---------------------------------------------------------------------------
def _dense_block_kernel(x_ref, *rest, C, H, W, n_dense):
    w1_refs = rest[:n_dense]                                  # exact widths
    w2_ref, wd_ref, b_ref, o_ref, xcol_ref, c2_ref = rest[n_dense:]
    hw = H * W

    x0 = x_ref[0]                     # (C, hw) f32, one batch element
    b_all = b_ref[...]                # (C, 2*n_dense + 1) f32, bias per conv

    # Row-boundary masks for the circular w-shift (hoisted out of all loops).
    w_idx = jax.lax.broadcasted_iota(jnp.int32, (1, hw), 1) % W
    mask_w0 = w_idx == 0
    mask_wl = w_idx == W - 1

    # Seed the persistent im2col cache with the input block (block 0).
    _write_taps(xcol_ref, 0, x0, mask_w0, mask_wl, W, hw)

    for i in range(n_dense):
        kin = 9 * C * (i + 1)
        # conv1 (Cin = C*(i+1)): its im2col is exactly the first `kin` rows of
        # the cache -> ONE MXU matmul, zero new rolls.
        u = _matmul_f32(w1_refs[i][...], xcol_ref[pl.ds(0, kin), :])
        u = u + b_all[:, 2 * i:2 * i + 1]
        u = jnp.where(u >= 0, u, LEAKY_SLOPE * u)             # LeakyReLU

        # conv2: im2col of the fresh (C, hw) activation into the small scratch.
        _write_taps(c2_ref, 0, u, mask_w0, mask_wl, W, hw)
        t = _matmul_f32(w2_ref[i], c2_ref[...])
        t = t + b_all[:, 2 * i + 1:2 * i + 2]                 # no activation

        # Dense concat == append t's taps as block (i+1) of the cache.
        _write_taps(xcol_ref, kin, t, mask_w0, mask_wl, W, hw)

    # down_layer: Conv(6C -> C) with eval-mode BN folded host-side, LeakyReLU.
    down = _matmul_f32(wd_ref[...], xcol_ref[...])            # im2col is free
    down = down + b_all[:, 2 * n_dense:2 * n_dense + 1]
    down = jnp.where(down >= 0, down, LEAKY_SLOPE * down)

    # Residual add fused in-kernel; lane-dense (C, hw) store.
    o_ref[0] = (down + x0).astype(o_ref.dtype)


# ---------------------------------------------------------------------------
# Host-side parameter preparation (done ONCE, outside the per-call path)
# ---------------------------------------------------------------------------
def _fold_blockmajor(w, block_c):
    """(3, 3, Cin, Cout) -> (Cout, nb*9*block_c), Cin = nb*block_c.

    Column order: block j (source layer), then tap (dy*3+dx), then channel
    within block -- matching the row layout of the in-kernel im2col cache.
    """
    kh, kw, cin, cout = w.shape
    nb = cin // block_c
    wt = jnp.transpose(w, (3, 0, 1, 2)).reshape(cout, kh * kw, nb, block_c)
    wt = jnp.transpose(wt, (0, 2, 1, 3)).reshape(cout, nb * kh * kw * block_c)
    return wt


def prepare_params(params, C, n_dense):
    w1_list, w2_list, b_cols = [], [], []
    for p in params["res"]:
        w1_list.append(_fold_blockmajor(p["w1"], C))          # (C, 9*C*(i+1))
        w2_list.append(_fold_blockmajor(p["w2"], C))          # (C, 9*C)
        b_cols += [p["b1"], p["b2"]]

    # Fold eval-mode BatchNorm into the down conv (hoisted out of the kernel).
    pd = params["down"]
    eps = 1e-5
    scale = pd["bn_gamma"] / jnp.sqrt(pd["bn_var"] + eps)              # (C,)
    wd = _fold_blockmajor(pd["w"] * scale[None, None, None, :], C)     # (C, 9*6C)
    bd = (pd["b"] - pd["bn_mean"]) * scale + pd["bn_beta"]
    b_cols.append(bd)

    return {
        "w1": tuple(w.astype(jnp.float32) for w in w1_list),   # exact widths
        "w2": jnp.stack(w2_list).astype(jnp.float32),          # (5, C, 9*C)
        "wd": wd.astype(jnp.float32),                          # (C, 9*6C)
        "b": jnp.stack(b_cols, axis=1).astype(jnp.float32),    # (C, 11)
    }


@jax.jit
def dense_block_forward(x, prepped):
    """x: (N, C, H, W) f32 (NCHW, like the PyTorch module)."""
    N, C, H, W = x.shape
    assert C % 8 == 0, "mid_channel must be a multiple of 8 for aligned tap stores"
    w1_list = prepped["w1"]
    n_dense = len(w1_list)
    hw = H * W
    x_flat = x.reshape(N, C, hw).astype(jnp.float32)

    kernel = functools.partial(_dense_block_kernel, C=C, H=H, W=W,
                               n_dense=n_dense)

    # Advisory cost estimate for XLA's scheduler.
    k_total = 9 * C * (n_dense * (n_dense + 1) // 2 + n_dense + (n_dense + 1))
    flops = int(2 * C * k_total * hw * N)
    bytes_accessed = int(
        2 * x_flat.size * 4
        + sum(int(w.size) for w in w1_list) * 4
        + int(prepped["w2"].size) * 4 + int(prepped["wd"].size) * 4
        + int(prepped["b"].size) * 4)

    # NOTE: the weight/bias inputs are grid-invariant; Pallas only re-fetches
    # a block when its index changes, so they are DMA'd once.  (pl.Buffered(1)
    # would additionally drop their second VMEM buffer, ~40 KB -- negligible.)
    out = pl.pallas_call(
        kernel,
        out_shape=jax.ShapeDtypeStruct((N, C, hw), jnp.float32),
        grid=(N,),
        in_specs=(
            [pl.BlockSpec((1, C, hw), lambda n: (n, 0, 0))]
            + [pl.BlockSpec(w.shape, lambda n: (0, 0)) for w in w1_list]
            + [pl.BlockSpec(prepped["w2"].shape, lambda n: (0, 0, 0)),
               pl.BlockSpec(prepped["wd"].shape, lambda n: (0, 0)),
               pl.BlockSpec(prepped["b"].shape, lambda n: (0, 0))]),
        out_specs=pl.BlockSpec((1, C, hw), lambda n: (n, 0, 0)),
        scratch_shapes=[
            # Persistent im2col cache for the growing dense concat (f32 keeps
            # every tap store natively (8,128)-tiled; ~432 KB at C=8, 16x16).
            pltpu.VMEM((9 * C * (n_dense + 1), hw), jnp.float32),
            # im2col scratch for conv2 of each res step.
            pltpu.VMEM((9 * C, hw), jnp.float32),
        ],
        compiler_params=pltpu.CompilerParams(
            dimension_semantics=("parallel",)),   # v7x: one batch elem per TC
        cost_estimate=pl.CostEstimate(flops=flops, transcendentals=0,
                                      bytes_accessed=bytes_accessed),
    )(x_flat, *w1_list, prepped["w2"], prepped["wd"], prepped["b"])
    return out.reshape(N, C, H, W)


# ---------------------------------------------------------------------------
# Pure-JAX reference (same math, XLA convs) for a correctness cross-check
# ---------------------------------------------------------------------------
def _conv_circ_ref(x, w, b):
    xp = jnp.pad(x, ((0, 0), (0, 0), (1, 1), (1, 1)), mode="wrap")
    y = jax.lax.conv_general_dilated(
        xp, w, window_strides=(1, 1), padding="VALID",
        dimension_numbers=("NCHW", "HWIO", "NCHW"))
    return y + b[None, :, None, None]


def dense_block_reference(x, params):
    result = x
    for p in params["res"]:
        u = _conv_circ_ref(result, p["w1"], p["b1"])
        u = jnp.where(u >= 0, u, LEAKY_SLOPE * u)
        t = _conv_circ_ref(u, p["w2"], p["b2"])
        result = jnp.concatenate([result, t], axis=1)
    pd = params["down"]
    eps = 1e-5
    y = _conv_circ_ref(result, pd["w"], pd["b"])
    scale = (pd["bn_gamma"] / jnp.sqrt(pd["bn_var"] + eps))[None, :, None, None]
    y = (y - pd["bn_mean"][None, :, None, None]) * scale \
        + pd["bn_beta"][None, :, None, None]
    y = jnp.where(y >= 0, y, LEAKY_SLOPE * y)
    return y + x


# ---------------------------------------------------------------------------
# Deterministic parameter construction (synthetic init, PyTorch-like scales)
# ---------------------------------------------------------------------------
def _conv_params(key, cin, cout, ks=3):
    kw_, kb_ = jax.random.split(key)
    fan_in = cin * ks * ks
    w = jax.random.normal(kw_, (ks, ks, cin, cout), jnp.float32) / jnp.sqrt(fan_in)
    b = 0.01 * jax.random.normal(kb_, (cout,), jnp.float32)
    return w, b


def init_params(key, mid_channel=8, len_dense=5, ks=3):
    params = {"res": []}
    for i in range(len_dense):
        key, k1, k2 = jax.random.split(key, 3)
        cin = mid_channel * (i + 1)
        w1, b1 = _conv_params(k1, cin, mid_channel, ks)
        w2, b2 = _conv_params(k2, mid_channel, mid_channel, ks)
        params["res"].append({"w1": w1, "b1": b1, "w2": w2, "b2": b2})
    key, kd = jax.random.split(key)
    wd, bd = _conv_params(kd, mid_channel * (len_dense + 1), mid_channel, ks)
    params["down"] = {
        "w": wd,
        "b": bd,
        "bn_gamma": jnp.ones((mid_channel,), jnp.float32),
        "bn_beta": jnp.zeros((mid_channel,), jnp.float32),
        "bn_mean": jnp.zeros((mid_channel,), jnp.float32),
        "bn_var": jnp.ones((mid_channel,), jnp.float32),
    }
    return params


# ---------------------------------------------------------------------------
if __name__ == "__main__":
    key = jax.random.PRNGKey(0)
    N, C, H, W = 2, 8, 16, 16            # NCHW; C plays the role of mid_channel

    key, kx, kp = jax.random.split(key, 3)
    x = jax.random.normal(kx, (N, C, H, W), jnp.float32)
    params = init_params(kp, mid_channel=C, len_dense=5, ks=3)
    prepped = prepare_params(params, C=C, n_dense=5)

    out = dense_block_forward(x, prepped)
    out = jax.block_until_ready(out)

    assert out.shape == (N, C, H, W), out.shape
    assert bool(jnp.all(jnp.isfinite(out)))

    # Cross-check against the pure-JAX reference (loose tol: TPU matmul/conv
    # default precision differs between the two paths).
    ref = dense_block_reference(x, params)
    err = float(jnp.max(jnp.abs(out - ref)))
    assert err < 1e-1, f"max abs err vs reference = {err}"

    print("KERNEL_OK")
</pallas_src>

<mosaic_0001>
module attributes {stable_mosaic.version = 11 : i64} {
  func.func @_dense_block_kernel(%arg0: i32, %arg1: memref<1x8x256xf32, #tpu.memory_space<vmem>>, %arg2: memref<8x72xf32, #tpu.memory_space<vmem>>, %arg3: memref<8x144xf32, #tpu.memory_space<vmem>>, %arg4: memref<8x216xf32, #tpu.memory_space<vmem>>, %arg5: memref<8x288xf32, #tpu.memory_space<vmem>>, %arg6: memref<8x360xf32, #tpu.memory_space<vmem>>, %arg7: memref<5x8x72xf32, #tpu.memory_space<vmem>>, %arg8: memref<8x432xf32, #tpu.memory_space<vmem>>, %arg9: memref<8x11xf32, #tpu.memory_space<vmem>>, %arg10: memref<1x8x256xf32, #tpu.memory_space<vmem>>, %arg11: memref<432x256xf32, #tpu.memory_space<vmem>>, %arg12: memref<72x256xf32, #tpu.memory_space<vmem>>) attributes {dimension_semantics = [#tpu.dimension_semantics<parallel>], iteration_bounds = array<i64: 2>, scalar_prefetch = 0 : i64, scratch_operands = 2 : i64, tpu.core_type = #tpu.core_type<tc>, window_params = [{transform_indices = @transform_0, window_bounds = array<i64: 1, 8, 256>}, {pipeline_mode = #tpu.pipeline_mode<synchronous>, transform_indices = @transform_1, window_bounds = array<i64: 8, 72>}, {pipeline_mode = #tpu.pipeline_mode<synchronous>, transform_indices = @transform_2, window_bounds = array<i64: 8, 144>}, {pipeline_mode = #tpu.pipeline_mode<synchronous>, transform_indices = @transform_3, window_bounds = array<i64: 8, 216>}, {pipeline_mode = #tpu.pipeline_mode<synchronous>, transform_indices = @transform_4, window_bounds = array<i64: 8, 288>}, {pipeline_mode = #tpu.pipeline_mode<synchronous>, transform_indices = @transform_5, window_bounds = array<i64: 8, 360>}, {pipeline_mode = #tpu.pipeline_mode<synchronous>, transform_indices = @transform_6, window_bounds = array<i64: 5, 8, 72>}, {pipeline_mode = #tpu.pipeline_mode<synchronous>, transform_indices = @transform_7, window_bounds = array<i64: 8, 432>}, {pipeline_mode = #tpu.pipeline_mode<synchronous>, transform_indices = @transform_8, window_bounds = array<i64: 8, 11>}, {transform_indices = @transform_9, window_bounds = array<i64: 1, 8, 256>}]} {
    %c0 = arith.constant 0 : index
    %c0_0 = arith.constant 0 : index
    %c0_1 = arith.constant 0 : index
    %0 = vector.load %arg1[%c0, %c0_0, %c0_1] : memref<1x8x256xf32, #tpu.memory_space<vmem>>, vector<1x8x256xf32>
    %1 = vector.shape_cast %0 : vector<1x8x256xf32> to vector<8x256xf32>
    %c0_2 = arith.constant 0 : index
    %c0_3 = arith.constant 0 : index
    %2 = vector.load %arg9[%c0_2, %c0_3] : memref<8x11xf32, #tpu.memory_space<vmem>>, vector<8x11xf32>
    %3 = tpu.iota {dimensions = array<i32: 1>} : vector<1x256xi32>
    %c16_i32 = arith.constant 16 : i32
    %c0_i32 = arith.constant 0 : i32
    %4 = arith.cmpi eq, %c16_i32, %c0_i32 : i32
    %c1_i32 = arith.constant 1 : i32
    %5 = arith.select %4, %c1_i32, %c16_i32 : i32
    %6 = vector.broadcast %5 : i32 to vector<1x256xi32>
    %7 = arith.remsi %3, %6 : vector<1x256xi32>
    %c0_i32_4 = arith.constant 0 : i32
    %8 = vector.broadcast %c0_i32_4 : i32 to vector<1x256xi32>
    %9 = arith.cmpi ne, %7, %8 : vector<1x256xi32>
    %c0_i32_5 = arith.constant 0 : i32
    %10 = vector.broadcast %c0_i32_5 : i32 to vector<1x256xi32>
    %11 = arith.cmpi slt, %7, %10 : vector<1x256xi32>
    %c0_i32_6 = arith.constant 0 : i32
    %12 = arith.cmpi slt, %5, %c0_i32_6 : i32
    %13 = vector.broadcast %12 : i1 to vector<1x256xi1>
    %14 = vector.broadcast %13 : vector<1x256xi1> to vector<1x256xi1>
    %15 = arith.xori %11, %14 : vector<1x256xi1>
    %16 = arith.andi %15, %9 : vector<1x256xi1>
    %17 = vector.broadcast %5 : i32 to vector<1x256xi32>
    %18 = arith.addi %7, %17 : vector<1x256xi32>
    %19 = arith.select %16, %18, %7 : vector<1x256xi1>, vector<1x256xi32>
    %c0_i32_7 = arith.constant 0 : i32
    %20 = vector.broadcast %c0_i32_7 : i32 to vector<1x256xi32>
    %21 = arith.cmpi eq, %19, %20 : vector<1x256xi32>
    %c15_i32 = arith.constant 15 : i32
    %22 = vector.broadcast %c15_i32 : i32 to vector<1x256xi32>
    %23 = arith.cmpi eq, %19, %22 : vector<1x256xi32>
    %c241_i32 = arith.constant 241 : i32
    %24 = tpu.dynamic_rotate %1 by %c241_i32 dim 1 : vector<8x256xf32>, i32 -> vector<8x256xf32>
    %c1_i32_8 = arith.constant 1 : i32
    %25 = tpu.dynamic_rotate %1 by %c1_i32_8 dim 1 : vector<8x256xf32>, i32 -> vector<8x256xf32>
    %26 = vector.shape_cast %21 : vector<1x256xi1> to vector<1x256xi1>
    %27 = vector.broadcast %26 : vector<1x256xi1> to vector<8x256xi1>
    %28 = arith.select %27, %24, %25 : vector<8x256xi1>, vector<8x256xf32>
    %c15_i32_9 = arith.constant 15 : i32
    %29 = tpu.dynamic_rotate %1 by %c15_i32_9 dim 1 : vector<8x256xf32>, i32 -> vector<8x256xf32>
    %c255_i32 = arith.constant 255 : i32
    %30 = tpu.dynamic_rotate %1 by %c255_i32 dim 1 : vector<8x256xf32>, i32 -> vector<8x256xf32>
    %31 = vector.shape_cast %23 : vector<1x256xi1> to vector<1x256xi1>
    %32 = vector.broadcast %31 : vector<1x256xi1> to vector<8x256xi1>
    %33 = arith.select %32, %29, %30 : vector<8x256xi1>, vector<8x256xf32>
    %c16_i32_10 = arith.constant 16 : i32
    %34 = tpu.dynamic_rotate %28 by %c16_i32_10 dim 1 : vector<8x256xf32>, i32 -> vector<8x256xf32>
    %c0_11 = arith.constant 0 : index
    %c0_12 = arith.constant 0 : index
    %35 = vector.load %arg11[%c0_11, %c0_12] : memref<432x256xf32, #tpu.memory_space<vmem>>, vector<8x256xf32>
    tpu.vector_store %arg11[%c0_11, %c0_12], %34 {strides = array<i32>} : memref<432x256xf32, #tpu.memory_space<vmem>>, vector<8x256xf32>,
    %c16_i32_13 = arith.constant 16 : i32
    %36 = tpu.dynamic_rotate %1 by %c16_i32_13 dim 1 : vector<8x256xf32>, i32 -> vector<8x256xf32>
    %c8 = arith.constant 8 : index
    %c0_14 = arith.constant 0 : index
    %37 = vector.load %arg11[%c8, %c0_14] : memref<432x256xf32, #tpu.memory_space<vmem>>, vector<8x256xf32>
    tpu.vector_store %arg11[%c8, %c0_14], %36 {strides = array<i32>} : memref<432x256xf32, #tpu.memory_space<vmem>>, vector<8x256xf32>,
    %c16_i32_15 = arith.constant 16 : i32
    %38 = tpu.dynamic_rotate %33 by %c16_i32_15 dim 1 : vector<8x256xf32>, i32 -> vector<8x256xf32>
    %c16 = arith.constant 16 : index
    %c0_16 = arith.constant 0 : index
    %39 = vector.load %arg11[%c16, %c0_16] : memref<432x256xf32, #tpu.memory_space<vmem>>, vector<8x256xf32>
    tpu.vector_store %arg11[%c16, %c0_16], %38 {strides = array<i32>} : memref<432x256xf32, #tpu.memory_space<vmem>>, vector<8x256xf32>,
    %c24 = arith.constant 24 : index
    %c0_17 = arith.constant 0 : index
    %40 = vector.load %arg11[%c24, %c0_17] : memref<432x256xf32, #tpu.memory_space<vmem>>, vector<8x256xf32>
    tpu.vector_store %arg11[%c24, %c0_17], %28 {strides = array<i32>} : memref<432x256xf32, #tpu.memory_space<vmem>>, vector<8x256xf32>,
    %c32 = arith.constant 32 : index
    %c0_18 = arith.constant 0 : index
    %41 = vector.load %arg11[%c32, %c0_18] : memref<432x256xf32, #tpu.memory_space<vmem>>, vector<8x256xf32>
    tpu.vector_store %arg11[%c32, %c0_18], %1 {strides = array<i32>} : memref<432x256xf32, #tpu.memory_space<vmem>>, vector<8x256xf32>,
    %c40 = arith.constant 40 : index
    %c0_19 = arith.constant 0 : index
    %42 = vector.load %arg11[%c40, %c0_19] : memref<432x256xf32, #tpu.memory_space<vmem>>, vector<8x256xf32>
    tpu.vector_store %arg11[%c40, %c0_19], %33 {strides = array<i32>} : memref<432x256xf32, #tpu.memory_space<vmem>>, vector<8x256xf32>,
    %c240_i32 = arith.constant 240 : i32
    %43 = tpu.dynamic_rotate %28 by %c240_i32 dim 1 : vector<8x256xf32>, i32 -> vector<8x256xf32>
    %c48 = arith.constant 48 : index
    %c0_20 = arith.constant 0 : index
    %44 = vector.load %arg11[%c48, %c0_20] : memref<432x256xf32, #tpu.memory_space<vmem>>, vector<8x256xf32>
    tpu.vector_store %arg11[%c48, %c0_20], %43 {strides = array<i32>} : memref<432x256xf32, #tpu.memory_space<vmem>>, vector<8x256xf32>,
    %c240_i32_21 = arith.constant 240 : i32
    %45 = tpu.dynamic_rotate %1 by %c240_i32_21 dim 1 : vector<8x256xf32>, i32 -> vector<8x256xf32>
    %c56 = arith.constant 56 : index
    %c0_22 = arith.constant 0 : index
    %46 = vector.load %arg11[%c56, %c0_22] : memref<432x256xf32, #tpu.memory_space<vmem>>, vector<8x256xf32>
    tpu.vector_store %arg11[%c56, %c0_22], %45 {strides = array<i32>} : memref<432x256xf32, #tpu.memory_space<vmem>>, vector<8x256xf32>,
    %c240_i32_23 = arith.constant 240 : i32
    %47 = tpu.dynamic_rotate %33 by %c240_i32_23 dim 1 : vector<8x256xf32>, i32 -> vector<8x256xf32>
    %c64 = arith.constant 64 : index
    %c0_24 = arith.constant 0 : index
    %48 = vector.load %arg11[%c64, %c0_24] : memref<432x256xf32, #tpu.memory_space<vmem>>, vector<8x256xf32>
    tpu.vector_store %arg11[%c64, %c0_24], %47 {strides = array<i32>} : memref<432x256xf32, #tpu.memory_space<vmem>>, vector<8x256xf32>,
    %c0_25 = arith.constant 0 : index
    %c0_26 = arith.constant 0 : index
    %49 = vector.load %arg2[%c0_25, %c0_26] : memref<8x72xf32, #tpu.memory_space<vmem>>, vector<8x72xf32>
    %c0_27 = arith.constant 0 : index
    %c0_28 = arith.constant 0 : index
    %50 = vector.load %arg11[%c0_27, %c0_28] : memref<432x256xf32, #tpu.memory_space<vmem>>, vector<72x256xf32>
    %cst = arith.constant dense<0.000000e+00> : vector<8x256xf32>
    %51 = tpu.matmul %49, %50, %cst {dimension_numbers = #tpu.dot_dimension_numbers<[1], [0], [0], [1], [0, 0, 1, 1], [], []>} : vector<8x72xf32>, vector<72x256xf32>, vector<8x256xf32> -> vector<8x256xf32>
    %52 = vector.extract_strided_slice %2 {offsets = [0, 0], sizes = [8, 1], strides = [1, 1]} : vector<8x11xf32> to vector<8x1xf32>
    %53 = vector.broadcast %52 : vector<8x1xf32> to vector<8x256xf32>
    %54 = arith.addf %51, %53 : vector<8x256xf32>
    %cst_29 = arith.constant 0.000000e+00 : f32
    %55 = vector.broadcast %cst_29 : f32 to vector<8x256xf32>
    %56 = arith.cmpf oge, %54, %55 : vector<8x256xf32>
    %cst_30 = arith.constant 0.00999999977 : f32
    %57 = vector.broadcast %cst_30 : f32 to vector<8x256xf32>
    %58 = arith.mulf %57, %54 : vector<8x256xf32>
    %59 = arith.select %56, %54, %58 : vector<8x256xi1>, vector<8x256xf32>
    %c241_i32_31 = arith.constant 241 : i32
    %60 = tpu.dynamic_rotate %59 by %c241_i32_31 dim 1 : vector<8x256xf32>, i32 -> vector<8x256xf32>
    %c1_i32_32 = arith.constant 1 : i32
    %61 = tpu.dynamic_rotate %59 by %c1_i32_32 dim 1 : vector<8x256xf32>, i32 -> vector<8x256xf32>
    %62 = vector.shape_cast %21 : vector<1x256xi1> to vector<1x256xi1>
    %63 = vector.broadcast %62 : vector<1x256xi1> to vector<8x256xi1>
    %64 = arith.select %63, %60, %61 : vector<8x256xi1>, vector<8x256xf32>
    %c15_i32_33 = arith.constant 15 : i32
    %65 = tpu.dynamic_rotate %59 by %c15_i32_33 dim 1 : vector<8x256xf32>, i32 -> vector<8x256xf32>
    %c255_i32_34 = arith.constant 255 : i32
    %66 = tpu.dynamic_rotate %59 by %c255_i32_34 dim 1 : vector<8x256xf32>, i32 -> vector<8x256xf32>
    %67 = vector.shape_cast %23 : vector<1x256xi1> to vector<1x256xi1>
    %68 = vector.broadcast %67 : vector<1x256xi1> to vector<8x256xi1>
    %69 = arith.select %68, %65, %66 : vector<8x256xi1>, vector<8x256xf32>
    %c16_i32_35 = arith.constant 16 : i32
    %70 = tpu.dynamic_rotate %64 by %c16_i32_35 dim 1 : vector<8x256xf32>, i32 -> vector<8x256xf32>
    %c0_36 = arith.constant 0 : index
    %c0_37 = arith.constant 0 : index
    %71 = vector.load %arg12[%c0_36, %c0_37] : memref<72x256xf32, #tpu.memory_space<vmem>>, vector<8x256xf32>
    tpu.vector_store %arg12[%c0_36, %c0_37], %70 {strides = array<i32>} : memref<72x256xf32, #tpu.memory_space<vmem>>, vector<8x256xf32>,
    %c16_i32_38 = arith.constant 16 : i32
    %72 = tpu.dynamic_rotate %59 by %c16_i32_38 dim 1 : vector<8x256xf32>, i32 -> vector<8x256xf32>
    %c8_39 = arith.constant 8 : index
    %c0_40 = arith.constant 0 : index
    %73 = vector.load %arg12[%c8_39, %c0_40] : memref<72x256xf32, #tpu.memory_space<vmem>>, vector<8x256xf32>
    tpu.vector_store %arg12[%c8_39, %c0_40], %72 {strides = array<i32>} : memref<72x256xf32, #tpu.memory_space<vmem>>, vector<8x256xf32>,
    %c16_i32_41 = arith.constant 16 : i32
    %74 = tpu.dynamic_rotate %69 by %c16_i32_41 dim 1 : vector<8x256xf32>, i32 -> vector<8x256xf32>
    %c16_42 = arith.constant 16 : index
    %c0_43 = arith.constant 0 : index
    %75 = vector.load %arg12[%c16_42, %c0_43] : memref<72x256xf32, #tpu.memory_space<vmem>>, vector<8x256xf32>
    tpu.vector_store %arg12[%c16_42, %c0_43], %74 {strides = array<i32>} : memref<72x256xf32, #tpu.memory_space<vmem>>, vector<8x256xf32>,
    %c24_44 = arith.constant 24 : index
    %c0_45 = arith.constant 0 : index
    %76 = vector.load %arg12[%c24_44, %c0_45] : memref<72x256xf32, #tpu.memory_space<vmem>>, vector<8x256xf32>
    tpu.vector_store %arg12[%c24_44, %c0_45], %64 {strides = array<i32>} : memref<72x256xf32, #tpu.memory_space<vmem>>, vector<8x256xf32>,
    %c32_46 = arith.constant 32 : index
    %c0_47 = arith.constant 0 : index
    %77 = vector.load %arg12[%c32_46, %c0_47] : memref<72x256xf32, #tpu.memory_space<vmem>>, vector<8x256xf32>
    tpu.vector_store %arg12[%c32_46, %c0_47], %59 {strides = array<i32>} : memref<72x256xf32, #tpu.memory_space<vmem>>, vector<8x256xf32>,
    %c40_48 = arith.constant 40 : index
    %c0_49 = arith.constant 0 : index
    %78 = vector.load %arg12[%c40_48, %c0_49] : memref<72x256xf32, #tpu.memory_space<vmem>>, vector<8x256xf32>
    tpu.vector_store %arg12[%c40_48, %c0_49], %69 {strides = array<i32>} : memref<72x256xf32, #tpu.memory_space<vmem>>, vector<8x256xf32>,
    %c240_i32_50 = arith.constant 240 : i32
    %79 = tpu.dynamic_rotate %64 by %c240_i32_50 dim 1 : vector<8x256xf32>, i32 -> vector<8x256xf32>
    %c48_51 = arith.constant 48 : index
    %c0_52 = arith.constant 0 : index
    %80 = vector.load %arg12[%c48_51, %c0_52] : memref<72x256xf32, #tpu.memory_space<vmem>>, vector<8x256xf32>
    tpu.vector_store %arg12[%c48_51, %c0_52], %79 {strides = array<i32>} : memref<72x256xf32, #tpu.memory_space<vmem>>, vector<8x256xf32>,
    %c240_i32_53 = arith.constant 240 : i32
    %81 = tpu.dynamic_rotate %59 by %c240_i32_53 dim 1 : vector<8x256xf32>, i32 -> vector<8x256xf32>
    %c56_54 = arith.constant 56 : index
    %c0_55 = arith.constant 0 : index
    %82 = vector.load %arg12[%c56_54, %c0_55] : memref<72x256xf32, #tpu.memory_space<vmem>>, vector<8x256xf32>
    tpu.vector_store %arg12[%c56_54, %c0_55], %81 {strides = array<i32>} : memref<72x256xf32, #tpu.memory_space<vmem>>, vector<8x256xf32>,
    %c240_i32_56 = arith.constant 240 : i32
    %83 = tpu.dynamic_rotate %69 by %c240_i32_56 dim 1 : vector<8x256xf32>, i32 -> vector<8x256xf32>
    %c64_57 = arith.constant 64 : index
    %c0_58 = arith.constant 0 : index
    %84 = vector.load %arg12[%c64_57, %c0_58] : memref<72x256xf32, #tpu.memory_space<vmem>>, vector<8x256xf32>
    tpu.vector_store %arg12[%c64_57, %c0_58], %83 {strides = array<i32>} : memref<72x256xf32, #tpu.memory_space<vmem>>, vector<8x256xf32>,
    %c0_59 = arith.constant 0 : index
    %c0_60 = arith.constant 0 : index
    %c0_61 = arith.constant 0 : index
    %85 = vector.load %arg7[%c0_59, %c0_60, %c0_61] : memref<5x8x72xf32, #tpu.memory_space<vmem>>, vector<1x8x72xf32>
    %86 = vector.shape_cast %85 : vector<1x8x72xf32> to vector<8x72xf32>
    %c0_62 = arith.constant 0 : index
    %c0_63 = arith.constant 0 : index
    %87 = vector.load %arg12[%c0_62, %c0_63] : memref<72x256xf32, #tpu.memory_space<vmem>>, vector<72x256xf32>
    %cst_64 = arith.constant dense<0.000000e+00> : vector<8x256xf32>
    %88 = tpu.matmul %86, %87, %cst_64 {dimension_numbers = #tpu.dot_dimension_numbers<[1], [0], [0], [1], [0, 0, 1, 1], [], []>} : vector<8x72xf32>, vector<72x256xf32>, vector<8x256xf32> -> vector<8x256xf32>
    %89 = vector.extract_strided_slice %2 {offsets = [0, 1], sizes = [8, 1], strides = [1, 1]} : vector<8x11xf32> to vector<8x1xf32>
    %90 = vector.broadcast %89 : vector<8x1xf32> to vector<8x256xf32>
    %91 = arith.addf %88, %90 : vector<8x256xf32>
    %c241_i32_65 = arith.constant 241 : i32
    %92 = tpu.dynamic_rotate %91 by %c241_i32_65 dim 1 : vector<8x256xf32>, i32 -> vector<8x256xf32>
    %c1_i32_66 = arith.constant 1 : i32
    %93 = tpu.dynamic_rotate %91 by %c1_i32_66 dim 1 : vector<8x256xf32>, i32 -> vector<8x256xf32>
    %94 = vector.shape_cast %21 : vector<1x256xi1> to vector<1x256xi1>
    %95 = vector.broadcast %94 : vector<1x256xi1> to vector<8x256xi1>
    %96 = arith.select %95, %92, %93 : vector<8x256xi1>, vector<8x256xf32>
    %c15_i32_67 = arith.constant 15 : i32
    %97 = tpu.dynamic_rotate %91 by %c15_i32_67 dim 1 : vector<8x256xf32>, i32 -> vector<8x256xf32>
    %c255_i32_68 = arith.constant 255 : i32
    %98 = tpu.dynamic_rotate %91 by %c255_i32_68 dim 1 : vector<8x256xf32>, i32 -> vector<8x256xf32>
    %99 = vector.shape_cast %23 : vector<1x256xi1> to vector<1x256xi1>
    %100 = vector.broadcast %99 : vector<1x256xi1> to vector<8x256xi1>
    %101 = arith.select %100, %97, %98 : vector<8x256xi1>, vector<8x256xf32>
    %c16_i32_69 = arith.constant 16 : i32
    %102 = tpu.dynamic_rotate %96 by %c16_i32_69 dim 1 : vector<8x256xf32>, i32 -> vector<8x256xf32>
    %c72 = arith.constant 72 : index
    %c0_70 = arith.constant 0 : index
    %103 = vector.load %arg11[%c72, %c0_70] : memref<432x256xf32, #tpu.memory_space<vmem>>, vector<8x256xf32>
    tpu.vector_store %arg11[%c72, %c0_70], %102 {strides = array<i32>} : memref<432x256xf32, #tpu.memory_space<vmem>>, vector<8x256xf32>,
    %c16_i32_71 = arith.constant 16 : i32
    %104 = tpu.dynamic_rotate %91 by %c16_i32_71 dim 1 : vector<8x256xf32>, i32 -> vector<8x256xf32>
    %c80 = arith.constant 80 : index
    %c0_72 = arith.constant 0 : index
    %105 = vector.load %arg11[%c80, %c0_72] : memref<432x256xf32, #tpu.memory_space<vmem>>, vector<8x256xf32>
    tpu.vector_store %arg11[%c80, %c0_72], %104 {strides = array<i32>} : memref<432x256xf32, #tpu.memory_space<vmem>>, vector<8x256xf32>,
    %c16_i32_73 = arith.constant 16 : i32
    %106 = tpu.dynamic_rotate %101 by %c16_i32_73 dim 1 : vector<8x256xf32>, i32 -> vector<8x256xf32>
    %c88 = arith.constant 88 : index
    %c0_74 = arith.constant 0 : index
    %107 = vector.load %arg11[%c88, %c0_74] : memref<432x256xf32, #tpu.memory_space<vmem>>, vector<8x256xf32>
    tpu.vector_store %arg11[%c88, %c0_74], %106 {strides = array<i32>} : memref<432x256xf32, #tpu.memory_space<vmem>>, vector<8x256xf32>,
    %c96 = arith.constant 96 : index
    %c0_75 = arith.constant 0 : index
    %108 = vector.load %arg11[%c96, %c0_75] : memref<432x256xf32, #tpu.memory_space<vmem>>, vector<8x256xf32>
    tpu.vector_store %arg11[%c96, %c0_75], %96 {strides = array<i32>} : memref<432x256xf32, #tpu.memory_space<vmem>>, vector<8x256xf32>,
    %c104 = arith.constant 104 : index
    %c0_76 = arith.constant 0 : index
    %109 = vector.load %arg11[%c104, %c0_76] : memref<432x256xf32, #tpu.memory_space<vmem>>, vector<8x256xf32>
    tpu.vector_store %arg11[%c104, %c0_76], %91 {strides = array<i32>} : memref<432x256xf32, #tpu.memory_space<vmem>>, vector<8x256xf32>,
    %c112 = arith.constant 112 : index
    %c0_77 = arith.constant 0 : index
    %110 = vector.load %arg11[%c112, %c0_77] : memref<432x256xf32, #tpu.memory_space<vmem>>, vector<8x256xf32>
    tpu.vector_store %arg11[%c112, %c0_77], %101 {strides = array<i32>} : memref<432x256xf32, #tpu.memory_space<vmem>>, vector<8x256xf32>,
    %c240_i32_78 = arith.constant 240 : i32
    %111 = tpu.dynamic_rotate %96 by %c240_i32_78 dim 1 : vector<8x256xf32>, i32 -> vector<8x256xf32>
    %c120 = arith.constant 120 : index
    %c0_79 = arith.constant 0 : index
    %112 = vector.load %arg11[%c120, %c0_79] : memref<432x256xf32, #tpu.memory_space<vmem>>, vector<8x256xf32>
    tpu.vector_store %arg11[%c120, %c0_79], %111 {strides = array<i32>} : memref<432x256xf32, #tpu.memory_space<vmem>>, vector<8x256xf32>,
    %c240_i32_80 = arith.constant 240 : i32
    %113 = tpu.dynamic_rotate %91 by %c240_i32_80 dim 1 : vector<8x256xf32>, i32 -> vector<8x256xf32>
    %c128 = arith.constant 128 : index
    %c0_81 = arith.constant 0 : index
    %114 = vector.load %arg11[%c128, %c0_81] : memref<432x256xf32, #tpu.memory_space<vmem>>, vector<8x256xf32>
    tpu.vector_store %arg11[%c128, %c0_81], %113 {strides = array<i32>} : memref<432x256xf32, #tpu.memory_space<vmem>>, vector<8x256xf32>,
    %c240_i32_82 = arith.constant 240 : i32
    %115 = tpu.dynamic_rotate %101 by %c240_i32_82 dim 1 : vector<8x256xf32>, i32 -> vector<8x256xf32>
    %c136 = arith.constant 136 : index
    %c0_83 = arith.constant 0 : index
    %116 = vector.load %arg11[%c136, %c0_83] : memref<432x256xf32, #tpu.memory_space<vmem>>, vector<8x256xf32>
    tpu.vector_store %arg11[%c136, %c0_83], %115 {strides = array<i32>} : memref<432x256xf32, #tpu.memory_space<vmem>>, vector<8x256xf32>,
    %c0_84 = arith.constant 0 : index
    %c0_85 = arith.constant 0 : index
    %117 = vector.load %arg3[%c0_84, %c0_85] : memref<8x144xf32, #tpu.memory_space<vmem>>, vector<8x144xf32>
    %c0_86 = arith.constant 0 : index
    %c0_87 = arith.constant 0 : index
    %118 = vector.load %arg11[%c0_86, %c0_87] : memref<432x256xf32, #tpu.memory_space<vmem>>, vector<144x256xf32>
    %cst_88 = arith.constant dense<0.000000e+00> : vector<8x256xf32>
    %119 = tpu.matmul %117, %118, %cst_88 {dimension_numbers = #tpu.dot_dimension_numbers<[1], [0], [0], [1], [0, 0, 1, 1], [], []>} : vector<8x144xf32>, vector<144x256xf32>, vector<8x256xf32> -> vector<8x256xf32>
    %120 = vector.extract_strided_slice %2 {offsets = [0, 2], sizes = [8, 1], strides = [1, 1]} : vector<8x11xf32> to vector<8x1xf32>
    %121 = vector.broadcast %120 : vector<8x1xf32> to vector<8x256xf32>
    %122 = arith.addf %119, %121 : vector<8x256xf32>
    %cst_89 = arith.constant 0.000000e+00 : f32
    %123 = vector.broadcast %cst_89 : f32 to vector<8x256xf32>
    %124 = arith.cmpf oge, %122, %123 : vector<8x256xf32>
    %cst_90 = arith.constant 0.00999999977 : f32
    %125 = vector.broadcast %cst_90 : f32 to vector<8x256xf32>
    %126 = arith.mulf %125, %122 : vector<8x256xf32>
    %127 = arith.select %124, %122, %126 : vector<8x256xi1>, vector<8x256xf32>
    %c241_i32_91 = arith.constant 241 : i32
    %128 = tpu.dynamic_rotate %127 by %c241_i32_91 dim 1 : vector<8x256xf32>, i32 -> vector<8x256xf32>
    %c1_i32_92 = arith.constant 1 : i32
    %129 = tpu.dynamic_rotate %127 by %c1_i32_92 dim 1 : vector<8x256xf32>, i32 -> vector<8x256xf32>
    %130 = vector.shape_cast %21 : vector<1x256xi1> to vector<1x256xi1>
    %131 = vector.broadcast %130 : vector<1x256xi1> to vector<8x256xi1>
    %132 = arith.select %131, %128, %129 : vector<8x256xi1>, vector<8x256xf32>
    %c15_i32_93 = arith.constant 15 : i32
    %133 = tpu.dynamic_rotate %127 by %c15_i32_93 dim 1 : vector<8x256xf32>, i32 -> vector<8x256xf32>
    %c255_i32_94 = arith.constant 255 : i32
    %134 = tpu.dynamic_rotate %127 by %c255_i32_94 dim 1 : vector<8x256xf32>, i32 -> vector<8x256xf32>
    %135 = vector.shape_cast %23 : vector<1x256xi1> to vector<1x256xi1>
    %136 = vector.broadcast %135 : vector<1x256xi1> to vector<8x256xi1>
    %137 = arith.select %136, %133, %134 : vector<8x256xi1>, vector<8x256xf32>
    %c16_i32_95 = arith.constant 16 : i32
    %138 = tpu.dynamic_rotate %132 by %c16_i32_95 dim 1 : vector<8x256xf32>, i32 -> vector<8x256xf32>
    %c0_96 = arith.constant 0 : index
    %c0_97 = arith.constant 0 : index
    %139 = vector.load %arg12[%c0_96, %c0_97] : memref<72x256xf32, #tpu.memory_space<vmem>>, vector<8x256xf32>
    tpu.vector_store %arg12[%c0_96, %c0_97], %138 {strides = array<i32>} : memref<72x256xf32, #tpu.memory_space<vmem>>, vector<8x256xf32>,
    %c16_i32_98 = arith.constant 16 : i32
    %140 = tpu.dynamic_rotate %127 by %c16_i32_98 dim 1 : vector<8x256xf32>, i32 -> vector<8x256xf32>
    %c8_99 = arith.constant 8 : index
    %c0_100 = arith.constant 0 : index
    %141 = vector.load %arg12[%c8_99, %c0_100] : memref<72x256xf32, #tpu.memory_space<vmem>>, vector<8x256xf32>
    tpu.vector_store %arg12[%c8_99, %c0_100], %140 {strides = array<i32>} : memref<72x256xf32, #tpu.memory_space<vmem>>, vector<8x256xf32>,
    %c16_i32_101 = arith.constant 16 : i32
    %142 = tpu.dynamic_rotate %137 by %c16_i32_101 dim 1 : vector<8x256xf32>, i32 -> vector<8x256xf32>
    %c16_102 = arith.constant 16 : index
    %c0_103 = arith.constant 0 : index
    %143 = vector.load %arg12[%c16_102, %c0_103] : memref<72x256xf32, #tpu.memory_space<vmem>>, vector<8x256xf32>
    tpu.vector_store %arg12[%c16_102, %c0_103], %142 {strides = array<i32>} : memref<72x256xf32, #tpu.memory_space<vmem>>, vector<8x256xf32>,
    %c24_104 = arith.constant 24 : index
    %c0_105 = arith.constant 0 : index
    %144 = vector.load %arg12[%c24_104, %c0_105] : memref<72x256xf32, #tpu.memory_space<vmem>>, vector<8x256xf32>
    tpu.vector_store %arg12[%c24_104, %c0_105], %132 {strides = array<i32>} : memref<72x256xf32, #tpu.memory_space<vmem>>, vector<8x256xf32>,
    %c32_106 = arith.constant 32 : index
    %c0_107 = arith.constant 0 : index
    %145 = vector.load %arg12[%c32_106, %c0_107] : memref<72x256xf32, #tpu.memory_space<vmem>>, vector<8x256xf32>
    tpu.vector_store %arg12[%c32_106, %c0_107], %127 {strides = array<i32>} : memref<72x256xf32, #tpu.memory_space<vmem>>, vector<8x256xf32>,
    %c40_108 = arith.constant 40 : index
    %c0_109 = arith.constant 0 : index
    %146 = vector.load %arg12[%c40_108, %c0_109] : memref<72x256xf32, #tpu.memory_space<vmem>>, vector<8x256xf32>
    tpu.vector_store %arg12[%c40_108, %c0_109], %137 {strides = array<i32>} : memref<72x256xf32, #tpu.memory_space<vmem>>, vector<8x256xf32>,
    %c240_i32_110 = arith.constant 240 : i32
    %147 = tpu.dynamic_rotate %132 by %c240_i32_110 dim 1 : vector<8x256xf32>, i32 -> vector<8x256xf32>
    %c48_111 = arith.constant 48 : index
    %c0_112 = arith.constant 0 : index
    %148 = vector.load %arg12[%c48_111, %c0_112] : memref<72x256xf32, #tpu.memory_space<vmem>>, vector<8x256xf32>
    tpu.vector_store %arg12[%c48_111, %c0_112], %147 {strides = array<i32>} : memref<72x256xf32, #tpu.memory_space<vmem>>, vector<8x256xf32>,
    %c240_i32_113 = arith.constant 240 : i32
    %149 = tpu.dynamic_rotate %127 by %c240_i32_113 dim 1 : vector<8x256xf32>, i32 -> vector<8x256xf32>
    %c56_114 = arith.constant 56 : index
    %c0_115 = arith.constant 0 : index
    %150 = vector.load %arg12[%c56_114, %c0_115] : memref<72x256xf32, #tpu.memory_space<vmem>>, vector<8x256xf32>
    tpu.vector_store %arg12[%c56_114, %c0_115], %149 {strides = array<i32>} : memref<72x256xf32, #tpu.memory_space<vmem>>, vector<8x256xf32>,
    %c240_i32_116 = arith.constant 240 : i32
    %151 = tpu.dynamic_rotate %137 by %c240_i32_116 dim 1 : vector<8x256xf32>, i32 -> vector<8x256xf32>
    %c64_117 = arith.constant 64 : index
    %c0_118 = arith.constant 0 : index
    %152 = vector.load %arg12[%c64_117, %c0_118] : memref<72x256xf32, #tpu.memory_space<vmem>>, vector<8x256xf32>
    tpu.vector_store %arg12[%c64_117, %c0_118], %151 {strides = array<i32>} : memref<72x256xf32, #tpu.memory_space<vmem>>, vector<8x256xf32>,
    %c1 = arith.constant 1 : index
    %c0_119 = arith.constant 0 : index
    %c0_120 = arith.constant 0 : index
    %153 = vector.load %arg7[%c1, %c0_119, %c0_120] : memref<5x8x72xf32, #tpu.memory_space<vmem>>, vector<1x8x72xf32>
    %154 = vector.shape_cast %153 : vector<1x8x72xf32> to vector<8x72xf32>
    %c0_121 = arith.constant 0 : index
    %c0_122 = arith.constant 0 : index
    %155 = vector.load %arg12[%c0_121, %c0_122] : memref<72x256xf32, #tpu.memory_space<vmem>>, vector<72x256xf32>
    %cst_123 = arith.constant dense<0.000000e+00> : vector<8x256xf32>
    %156 = tpu.matmul %154, %155, %cst_123 {dimension_numbers = #tpu.dot_dimension_numbers<[1], [0], [0], [1], [0, 0, 1, 1], [], []>} : vector<8x72xf32>, vector<72x256xf32>, vector<8x256xf32> -> vector<8x256xf32>
    %157 = vector.extract_strided_slice %2 {offsets = [0, 3], sizes = [8, 1], strides = [1, 1]} : vector<8x11xf32> to vector<8x1xf32>
    %158 = vector.broadcast %157 : vector<8x1xf32> to vector<8x256xf32>
    %159 = arith.addf %156, %158 : vector<8x256xf32>
    %c241_i32_124 = arith.constant 241 : i32
    %160 = tpu.dynamic_rotate %159 by %c241_i32_124 dim 1 : vector<8x256xf32>, i32 -> vector<8x256xf32>
    %c1_i32_125 = arith.constant 1 : i32
    %161 = tpu.dynamic_rotate %159 by %c1_i32_125 dim 1 : vector<8x256xf32>, i32 -> vector<8x256xf32>
    %162 = vector.shape_cast %21 : vector<1x256xi1> to vector<1x256xi1>
    %163 = vector.broadcast %162 : vector<1x256xi1> to vector<8x256xi1>
    %164 = arith.select %163, %160, %161 : vector<8x256xi1>, vector<8x256xf32>
    %c15_i32_126 = arith.constant 15 : i32
    %165 = tpu.dynamic_rotate %159 by %c15_i32_126 dim 1 : vector<8x256xf32>, i32 -> vector<8x256xf32>
    %c255_i32_127 = arith.constant 255 : i32
    %166 = tpu.dynamic_rotate %159 by %c255_i32_127 dim 1 : vector<8x256xf32>, i32 -> vector<8x256xf32>
    %167 = vector.shape_cast %23 : vector<1x256xi1> to vector<1x256xi1>
    %168 = vector.broadcast %167 : vector<1x256xi1> to vector<8x256xi1>
    %169 = arith.select %168, %165, %166 : vector<8x256xi1>, vector<8x256xf32>
    %c16_i32_128 = arith.constant 16 : i32
    %170 = tpu.dynamic_rotate %164 by %c16_i32_128 dim 1 : vector<8x256xf32>, i32 -> vector<8x256xf32>
    %c144 = arith.constant 144 : index
    %c0_129 = arith.constant 0 : index
    %171 = vector.load %arg11[%c144, %c0_129] : memref<432x256xf32, #tpu.memory_space<vmem>>, vector<8x256xf32>
    tpu.vector_store %arg11[%c144, %c0_129], %170 {strides = array<i32>} : memref<432x256xf32, #tpu.memory_space<vmem>>, vector<8x256xf32>,
    %c16_i32_130 = arith.constant 16 : i32
    %172 = tpu.dynamic_rotate %159 by %c16_i32_130 dim 1 : vector<8x256xf32>, i32 -> vector<8x256xf32>
    %c152 = arith.constant 152 : index
    %c0_131 = arith.constant 0 : index
    %173 = vector.load %arg11[%c152, %c0_131] : memref<432x256xf32, #tpu.memory_space<vmem>>, vector<8x256xf32>
    tpu.vector_store %arg11[%c152, %c0_131], %172 {strides = array<i32>} : memref<432x256xf32, #tpu.memory_space<vmem>>, vector<8x256xf32>,
    %c16_i32_132 = arith.constant 16 : i32
    %174 = tpu.dynamic_rotate %169 by %c16_i32_132 dim 1 : vector<8x256xf32>, i32 -> vector<8x256xf32>
    %c160 = arith.constant 160 : index
    %c0_133 = arith.constant 0 : index
    %175 = vector.load %arg11[%c160, %c0_133] : memref<432x256xf32, #tpu.memory_space<vmem>>, vector<8x256xf32>
    tpu.vector_store %arg11[%c160, %c0_133], %174 {strides = array<i32>} : memref<432x256xf32, #tpu.memory_space<vmem>>, vector<8x256xf32>,
    %c168 = arith.constant 168 : index
    %c0_134 = arith.constant 0 : index
    %176 = vector.load %arg11[%c168, %c0_134] : memref<432x256xf32, #tpu.memory_space<vmem>>, vector<8x256xf32>
    tpu.vector_store %arg11[%c168, %c0_134], %164 {strides = array<i32>} : memref<432x256xf32, #tpu.memory_space<vmem>>, vector<8x256xf32>,
    %c176 = arith.constant 176 : index
    %c0_135 = arith.constant 0 : index
    %177 = vector.load %arg11[%c176, %c0_135] : memref<432x256xf32, #tpu.memory_space<vmem>>, vector<8x256xf32>
    tpu.vector_store %arg11[%c176, %c0_135], %159 {strides = array<i32>} : memref<432x256xf32, #tpu.memory_space<vmem>>, vector<8x256xf32>,
    %c184 = arith.constant 184 : index
    %c0_136 = arith.constant 0 : index
    %178 = vector.load %arg11[%c184, %c0_136] : memref<432x256xf32, #tpu.memory_space<vmem>>, vector<8x256xf32>
    tpu.vector_store %arg11[%c184, %c0_136], %169 {strides = array<i32>} : memref<432x256xf32, #tpu.memory_space<vmem>>, vector<8x256xf32>,
    %c240_i32_137 = arith.constant 240 : i32
    %179 = tpu.dynamic_rotate %164 by %c240_i32_137 dim 1 : vector<8x256xf32>, i32 -> vector<8x256xf32>
    %c192 = arith.constant 192 : index
    %c0_138 = arith.constant 0 : index
    %180 = vector.load %arg11[%c192, %c0_138] : memref<432x256xf32, #tpu.memory_space<vmem>>, vector<8x256xf32>
    tpu.vector_store %arg11[%c192, %c0_138], %179 {strides = array<i32>} : memref<432x256xf32, #tpu.memory_space<vmem>>, vector<8x256xf32>,
    %c240_i32_139 = arith.constant 240 : i32
    %181 = tpu.dynamic_rotate %159 by %c240_i32_139 dim 1 : vector<8x256xf32>, i32 -> vector<8x256xf32>
    %c200 = arith.constant 200 : index
    %c0_140 = arith.constant 0 : index
    %182 = vector.load %arg11[%c200, %c0_140] : memref<432x256xf32, #tpu.memory_space<vmem>>, vector<8x256xf32>
    tpu.vector_store %arg11[%c200, %c0_140], %181 {strides = array<i32>} : memref<432x256xf32, #tpu.memory_space<vmem>>, vector<8x256xf32>,
    %c240_i32_141 = arith.constant 240 : i32
    %183 = tpu.dynamic_rotate %169 by %c240_i32_141 dim 1 : vector<8x256xf32>, i32 -> vector<8x256xf32>
    %c208 = arith.constant 208 : index
    %c0_142 = arith.constant 0 : index
    %184 = vector.load %arg11[%c208, %c0_142] : memref<432x256xf32, #tpu.memory_space<vmem>>, vector<8x256xf32>
    tpu.vector_store %arg11[%c208, %c0_142], %183 {strides = array<i32>} : memref<432x256xf32, #tpu.memory_space<vmem>>, vector<8x256xf32>,
    %c0_143 = arith.constant 0 : index
    %c0_144 = arith.constant 0 : index
    %185 = vector.load %arg4[%c0_143, %c0_144] : memref<8x216xf32, #tpu.memory_space<vmem>>, vector<8x216xf32>
    %c0_145 = arith.constant 0 : index
    %c0_146 = arith.constant 0 : index
    %186 = vector.load %arg11[%c0_145, %c0_146] : memref<432x256xf32, #tpu.memory_space<vmem>>, vector<216x256xf32>
    %cst_147 = arith.constant dense<0.000000e+00> : vector<8x256xf32>
    %187 = tpu.matmul %185, %186, %cst_147 {dimension_numbers = #tpu.dot_dimension_numbers<[1], [0], [0], [1], [0, 0, 1, 1], [], []>} : vector<8x216xf32>, vector<216x256xf32>, vector<8x256xf32> -> vector<8x256xf32>
    %188 = vector.extract_strided_slice %2 {offsets = [0, 4], sizes = [8, 1], strides = [1, 1]} : vector<8x11xf32> to vector<8x1xf32>
    %189 = vector.broadcast %188 : vector<8x1xf32> to vector<8x256xf32>
    %190 = arith.addf %187, %189 : vector<8x256xf32>
    %cst_148 = arith.constant 0.000000e+00 : f32
    %191 = vector.broadcast %cst_148 : f32 to vector<8x256xf32>
    %192 = arith.cmpf oge, %190, %191 : vector<8x256xf32>
    %cst_149 = arith.constant 0.00999999977 : f32
    %193 = vector.broadcast %cst_149 : f32 to vector<8x256xf32>
    %194 = arith.mulf %193, %190 : vector<8x256xf32>
    %195 = arith.select %192, %190, %194 : vector<8x256xi1>, vector<8x256xf32>
    %c241_i32_150 = arith.constant 241 : i32
    %196 = tpu.dynamic_rotate %195 by %c241_i32_150 dim 1 : vector<8x256xf32>, i32 -> vector<8x256xf32>
    %c1_i32_151 = arith.constant 1 : i32
    %197 = tpu.dynamic_rotate %195 by %c1_i32_151 dim 1 : vector<8x256xf32>, i32 -> vector<8x256xf32>
    %198 = vector.shape_cast %21 : vector<1x256xi1> to vector<1x256xi1>
    %199 = vector.broadcast %198 : vector<1x256xi1> to vector<8x256xi1>
    %200 = arith.select %199, %196, %197 : vector<8x256xi1>, vector<8x256xf32>
    %c15_i32_152 = arith.constant 15 : i32
    %201 = tpu.dynamic_rotate %195 by %c15_i32_152 dim 1 : vector<8x256xf32>, i32 -> vector<8x256xf32>
    %c255_i32_153 = arith.constant 255 : i32
    %202 = tpu.dynamic_rotate %195 by %c255_i32_153 dim 1 : vector<8x256xf32>, i32 -> vector<8x256xf32>
    %203 = vector.shape_cast %23 : vector<1x256xi1> to vector<1x256xi1>
    %204 = vector.broadcast %203 : vector<1x256xi1> to vector<8x256xi1>
    %205 = arith.select %204, %201, %202 : vector<8x256xi1>, vector<8x256xf32>
    %c16_i32_154 = arith.constant 16 : i32
    %206 = tpu.dynamic_rotate %200 by %c16_i32_154 dim 1 : vector<8x256xf32>, i32 -> vector<8x256xf32>
    %c0_155 = arith.constant 0 : index
    %c0_156 = arith.constant 0 : index
    %207 = vector.load %arg12[%c0_155, %c0_156] : memref<72x256xf32, #tpu.memory_space<vmem>>, vector<8x256xf32>
    tpu.vector_store %arg12[%c0_155, %c0_156], %206 {strides = array<i32>} : memref<72x256xf32, #tpu.memory_space<vmem>>, vector<8x256xf32>,
    %c16_i32_157 = arith.constant 16 : i32
    %208 = tpu.dynamic_rotate %195 by %c16_i32_157 dim 1 : vector<8x256xf32>, i32 -> vector<8x256xf32>
    %c8_158 = arith.constant 8 : index
    %c0_159 = arith.constant 0 : index
    %209 = vector.load %arg12[%c8_158, %c0_159] : memref<72x256xf32, #tpu.memory_space<vmem>>, vector<8x256xf32>
    tpu.vector_store %arg12[%c8_158, %c0_159], %208 {strides = array<i32>} : memref<72x256xf32, #tpu.memory_space<vmem>>, vector<8x256xf32>,
    %c16_i32_160 = arith.constant 16 : i32
    %210 = tpu.dynamic_rotate %205 by %c16_i32_160 dim 1 : vector<8x256xf32>, i32 -> vector<8x256xf32>
    %c16_161 = arith.constant 16 : index
    %c0_162 = arith.constant 0 : index
    %211 = vector.load %arg12[%c16_161, %c0_162] : memref<72x256xf32, #tpu.memory_space<vmem>>, vector<8x256xf32>
    tpu.vector_store %arg12[%c16_161, %c0_162], %210 {strides = array<i32>} : memref<72x256xf32, #tpu.memory_space<vmem>>, vector<8x256xf32>,
    %c24_163 = arith.constant 24 : index
    %c0_164 = arith.constant 0 : index
    %212 = vector.load %arg12[%c24_163, %c0_164] : memref<72x256xf32, #tpu.memory_space<vmem>>, vector<8x256xf32>
    tpu.vector_store %arg12[%c24_163, %c0_164], %200 {strides = array<i32>} : memref<72x256xf32, #tpu.memory_space<vmem>>, vector<8x256xf32>,
    %c32_165 = arith.constant 32 : index
    %c0_166 = arith.constant 0 : index
    %213 = vector.load %arg12[%c32_165, %c0_166] : memref<72x256xf32, #tpu.memory_space<vmem>>, vector<8x256xf32>
    tpu.vector_store %arg12[%c32_165, %c0_166], %195 {strides = array<i32>} : memref<72x256xf32, #tpu.memory_space<vmem>>, vector<8x256xf32>,
    %c40_167 = arith.constant 40 : index
    %c0_168 = arith.constant 0 : index
    %214 = vector.load %arg12[%c40_167, %c0_168] : memref<72x256xf32, #tpu.memory_space<vmem>>, vector<8x256xf32>
    tpu.vector_store %arg12[%c40_167, %c0_168], %205 {strides = array<i32>} : memref<72x256xf32, #tpu.memory_space<vmem>>, vector<8x256xf32>,
    %c240_i32_169 = arith.constant 240 : i32
    %215 = tpu.dynamic_rotate %200 by %c240_i32_169 dim 1 : vector<8x256xf32>, i32 -> vector<8x256xf32>
    %c48_170 = arith.constant 48 : index
    %c0_171 = arith.constant 0 : index
    %216 = vector.load %arg12[%c48_170, %c0_171] : memref<72x256xf32, #tpu.memory_space<vmem>>, vector<8x256xf32>
    tpu.vector_store %arg12[%c48_170, %c0_171], %215 {strides = array<i32>} : memref<72x256xf32, #tpu.memory_space<vmem>>, vector<8x256xf32>,
    %c240_i32_172 = arith.constant 240 : i32
    %217 = tpu.dynamic_rotate %195 by %c240_i32_172 dim 1 : vector<8x256xf32>, i32 -> vector<8x256xf32>
    %c56_173 = arith.constant 56 : index
    %c0_174 = arith.constant 0 : index
    %218 = vector.load %arg12[%c56_173, %c0_174] : memref<72x256xf32, #tpu.memory_space<vmem>>, vector<8x256xf32>
    tpu.vector_store %arg12[%c56_173, %c0_174], %217 {strides = array<i32>} : memref<72x256xf32, #tpu.memory_space<vmem>>, vector<8x256xf32>,
    %c240_i32_175 = arith.constant 240 : i32
    %219 = tpu.dynamic_rotate %205 by %c240_i32_175 dim 1 : vector<8x256xf32>, i32 -> vector<8x256xf32>
    %c64_176 = arith.constant 64 : index
    %c0_177 = arith.constant 0 : index
    %220 = vector.load %arg12[%c64_176, %c0_177] : memref<72x256xf32, #tpu.memory_space<vmem>>, vector<8x256xf32>
    tpu.vector_store %arg12[%c64_176, %c0_177], %219 {strides = array<i32>} : memref<72x256xf32, #tpu.memory_space<vmem>>, vector<8x256xf32>,
    %c2 = arith.constant 2 : index
    %c0_178 = arith.constant 0 : index
    %c0_179 = arith.constant 0 : index
    %221 = vector.load %arg7[%c2, %c0_178, %c0_179] : memref<5x8x72xf32, #tpu.memory_space<vmem>>, vector<1x8x72xf32>
    %222 = vector.shape_cast %221 : vector<1x8x72xf32> to vector<8x72xf32>
    %c0_180 = arith.constant 0 : index
    %c0_181 = arith.constant 0 : index
    %223 = vector.load %arg12[%c0_180, %c0_181] : memref<72x256xf32, #tpu.memory_space<vmem>>, vector<72x256xf32>
    %cst_182 = arith.constant dense<0.000000e+00> : vector<8x256xf32>
    %224 = tpu.matmul %222, %223, %cst_182 {dimension_numbers = #tpu.dot_dimension_numbers<[1], [0], [0], [1], [0, 0, 1, 1], [], []>} : vector<8x72xf32>, vector<72x256xf32>, vector<8x256xf32> -> vector<8x256xf32>
    %225 = vector.extract_strided_slice %2 {offsets = [0, 5], sizes = [8, 1], strides = [1, 1]} : vector<8x11xf32> to vector<8x1xf32>
    %226 = vector.broadcast %225 : vector<8x1xf32> to vector<8x256xf32>
    %227 = arith.addf %224, %226 : vector<8x256xf32>
    %c241_i32_183 = arith.constant 241 : i32
    %228 = tpu.dynamic_rotate %227 by %c241_i32_183 dim 1 : vector<8x256xf32>, i32 -> vector<8x256xf32>
    %c1_i32_184 = arith.constant 1 : i32
    %229 = tpu.dynamic_rotate %227 by %c1_i32_184 dim 1 : vector<8x256xf32>, i32 -> vector<8x256xf32>
    %230 = vector.shape_cast %21 : vector<1x256xi1> to vector<1x256xi1>
    %231 = vector.broadcast %230 : vector<1x256xi1> to vector<8x256xi1>
    %232 = arith.select %231, %228, %229 : vector<8x256xi1>, vector<8x256xf32>
    %c15_i32_185 = arith.constant 15 : i32
    %233 = tpu.dynamic_rotate %227 by %c15_i32_185 dim 1 : vector<8x256xf32>, i32 -> vector<8x256xf32>
    %c255_i32_186 = arith.constant 255 : i32
    %234 = tpu.dynamic_rotate %227 by %c255_i32_186 dim 1 : vector<8x256xf32>, i32 -> vector<8x256xf32>
    %235 = vector.shape_cast %23 : vector<1x256xi1> to vector<1x256xi1>
    %236 = vector.broadcast %235 : vector<1x256xi1> to vector<8x256xi1>
    %237 = arith.select %236, %233, %234 : vector<8x256xi1>, vector<8x256xf32>
    %c16_i32_187 = arith.constant 16 : i32
    %238 = tpu.dynamic_rotate %232 by %c16_i32_187 dim 1 : vector<8x256xf32>, i32 -> vector<8x256xf32>
    %c216 = arith.constant 216 : index
    %c0_188 = arith.constant 0 : index
    %239 = vector.load %arg11[%c216, %c0_188] : memref<432x256xf32, #tpu.memory_space<vmem>>, vector<8x256xf32>
    tpu.vector_store %arg11[%c216, %c0_188], %238 {strides = array<i32>} : memref<432x256xf32, #tpu.memory_space<vmem>>, vector<8x256xf32>,
    %c16_i32_189 = arith.constant 16 : i32
    %240 = tpu.dynamic_rotate %227 by %c16_i32_189 dim 1 : vector<8x256xf32>, i32 -> vector<8x256xf32>
    %c224 = arith.constant 224 : index
    %c0_190 = arith.constant 0 : index
    %241 = vector.load %arg11[%c224, %c0_190] : memref<432x256xf32, #tpu.memory_space<vmem>>, vector<8x256xf32>
    tpu.vector_store %arg11[%c224, %c0_190], %240 {strides = array<i32>} : memref<432x256xf32, #tpu.memory_space<vmem>>, vector<8x256xf32>,
    %c16_i32_191 = arith.constant 16 : i32
    %242 = tpu.dynamic_rotate %237 by %c16_i32_191 dim 1 : vector<8x256xf32>, i32 -> vector<8x256xf32>
    %c232 = arith.constant 232 : index
    %c0_192 = arith.constant 0 : index
    %243 = vector.load %arg11[%c232, %c0_192] : memref<432x256xf32, #tpu.memory_space<vmem>>, vector<8x256xf32>
    tpu.vector_store %arg11[%c232, %c0_192], %242 {strides = array<i32>} : memref<432x256xf32, #tpu.memory_space<vmem>>, vector<8x256xf32>,
    %c240 = arith.constant 240 : index
    %c0_193 = arith.constant 0 : index
    %244 = vector.load %arg11[%c240, %c0_193] : memref<432x256xf32, #tpu.memory_space<vmem>>, vector<8x256xf32>
    tpu.vector_store %arg11[%c240, %c0_193], %232 {strides = array<i32>} : memref<432x256xf32, #tpu.memory_space<vmem>>, vector<8x256xf32>,
    %c248 = arith.constant 248 : index
    %c0_194 = arith.constant 0 : index
    %245 = vector.load %arg11[%c248, %c0_194] : memref<432x256xf32, #tpu.memory_space<vmem>>, vector<8x256xf32>
    tpu.vector_store %arg11[%c248, %c0_194], %227 {strides = array<i32>} : memref<432x256xf32, #tpu.memory_space<vmem>>, vector<8x256xf32>,
    %c256 = arith.constant 256 : index
    %c0_195 = arith.constant 0 : index
    %246 = vector.load %arg11[%c256, %c0_195] : memref<432x256xf32, #tpu.memory_space<vmem>>, vector<8x256xf32>
    tpu.vector_store %arg11[%c256, %c0_195], %237 {strides = array<i32>} : memref<432x256xf32, #tpu.memory_space<vmem>>, vector<8x256xf32>,
    %c240_i32_196 = arith.constant 240 : i32
    %247 = tpu.dynamic_rotate %232 by %c240_i32_196 dim 1 : vector<8x256xf32>, i32 -> vector<8x256xf32>
    %c264 = arith.constant 264 : index
    %c0_197 = arith.constant 0 : index
    %248 = vector.load %arg11[%c264, %c0_197] : memref<432x256xf32, #tpu.memory_space<vmem>>, vector<8x256xf32>
    tpu.vector_store %arg11[%c264, %c0_197], %247 {strides = array<i32>} : memref<432x256xf32, #tpu.memory_space<vmem>>, vector<8x256xf32>,
    %c240_i32_198 = arith.constant 240 : i32
    %249 = tpu.dynamic_rotate %227 by %c240_i32_198 dim 1 : vector<8x256xf32>, i32 -> vector<8x256xf32>
    %c272 = arith.constant 272 : index
    %c0_199 = arith.constant 0 : index
    %250 = vector.load %arg11[%c272, %c0_199] : memref<432x256xf32, #tpu.memory_space<vmem>>, vector<8x256xf32>
    tpu.vector_store %arg11[%c272, %c0_199], %249 {strides = array<i32>} : memref<432x256xf32, #tpu.memory_space<vmem>>, vector<8x256xf32>,
    %c240_i32_200 = arith.constant 240 : i32
    %251 = tpu.dynamic_rotate %237 by %c240_i32_200 dim 1 : vector<8x256xf32>, i32 -> vector<8x256xf32>
    %c280 = arith.constant 280 : index
    %c0_201 = arith.constant 0 : index
    %252 = vector.load %arg11[%c280, %c0_201] : memref<432x256xf32, #tpu.memory_space<vmem>>, vector<8x256xf32>
    tpu.vector_store %arg11[%c280, %c0_201], %251 {strides = array<i32>} : memref<432x256xf32, #tpu.memory_space<vmem>>, vector<8x256xf32>,
    %c0_202 = arith.constant 0 : index
    %c0_203 = arith.constant 0 : index
    %253 = vector.load %arg5[%c0_202, %c0_203] : memref<8x288xf32, #tpu.memory_space<vmem>>, vector<8x288xf32>
    %c0_204 = arith.constant 0 : index
    %c0_205 = arith.constant 0 : index
    %254 = vector.load %arg11[%c0_204, %c0_205] : memref<432x256xf32, #tpu.memory_space<vmem>>, vector<288x256xf32>
    %cst_206 = arith.constant dense<0.000000e+00> : vector<8x256xf32>
    %255 = tpu.matmul %253, %254, %cst_206 {dimension_numbers = #tpu.dot_dimension_numbers<[1], [0], [0], [1], [0, 0, 1, 1], [], []>} : vector<8x288xf32>, vector<288x256xf32>, vector<8x256xf32> -> vector<8x256xf32>
    %256 = vector.extract_strided_slice %2 {offsets = [0, 6], sizes = [8, 1], strides = [1, 1]} : vector<8x11xf32> to vector<8x1xf32>
    %257 = vector.broadcast %256 : vector<8x1xf32> to vector<8x256xf32>
    %258 = arith.addf %255, %257 : vector<8x256xf32>
    %cst_207 = arith.constant 0.000000e+00 : f32
    %259 = vector.broadcast %cst_207 : f32 to vector<8x256xf32>
    %260 = arith.cmpf oge, %258, %259 : vector<8x256xf32>
    %cst_208 = arith.constant 0.00999999977 : f32
    %261 = vector.broadcast %cst_208 : f32 to vector<8x256xf32>
    %262 = arith.mulf %261, %258 : vector<8x256xf32>
    %263 = arith.select %260, %258, %262 : vector<8x256xi1>, vector<8x256xf32>
    %c241_i32_209 = arith.constant 241 : i32
    %264 = tpu.dynamic_rotate %263 by %c241_i32_209 dim 1 : vector<8x256xf32>, i32 -> vector<8x256xf32>
    %c1_i32_210 = arith.constant 1 : i32
    %265 = tpu.dynamic_rotate %263 by %c1_i32_210 dim 1 : vector<8x256xf32>, i32 -> vector<8x256xf32>
    %266 = vector.shape_cast %21 : vector<1x256xi1> to vector<1x256xi1>
    %267 = vector.broadcast %266 : vector<1x256xi1> to vector<8x256xi1>
    %268 = arith.select %267, %264, %265 : vector<8x256xi1>, vector<8x256xf32>
    %c15_i32_211 = arith.constant 15 : i32
    %269 = tpu.dynamic_rotate %263 by %c15_i32_211 dim 1 : vector<8x256xf32>, i32 -> vector<8x256xf32>
    %c255_i32_212 = arith.constant 255 : i32
    %270 = tpu.dynamic_rotate %263 by %c255_i32_212 dim 1 : vector<8x256xf32>, i32 -> vector<8x256xf32>
    %271 = vector.shape_cast %23 : vector<1x256xi1> to vector<1x256xi1>
    %272 = vector.broadcast %271 : vector<1x256xi1> to vector<8x256xi1>
    %273 = arith.select %272, %269, %270 : vector<8x256xi1>, vector<8x256xf32>
    %c16_i32_213 = arith.constant 16 : i32
    %274 = tpu.dynamic_rotate %268 by %c16_i32_213 dim 1 : vector<8x256xf32>, i32 -> vector<8x256xf32>
    %c0_214 = arith.constant 0 : index
    %c0_215 = arith.constant 0 : index
    %275 = vector.load %arg12[%c0_214, %c0_215] : memref<72x256xf32, #tpu.memory_space<vmem>>, vector<8x256xf32>
    tpu.vector_store %arg12[%c0_214, %c0_215], %274 {strides = array<i32>} : memref<72x256xf32, #tpu.memory_space<vmem>>, vector<8x256xf32>,
    %c16_i32_216 = arith.constant 16 : i32
    %276 = tpu.dynamic_rotate %263 by %c16_i32_216 dim 1 : vector<8x256xf32>, i32 -> vector<8x256xf32>
    %c8_217 = arith.constant 8 : index
    %c0_218 = arith.constant 0 : index
    %277 = vector.load %arg12[%c8_217, %c0_218] : memref<72x256xf32, #tpu.memory_space<vmem>>, vector<8x256xf32>
    tpu.vector_store %arg12[%c8_217, %c0_218], %276 {strides = array<i32>} : memref<72x256xf32, #tpu.memory_space<vmem>>, vector<8x256xf32>,
    %c16_i32_219 = arith.constant 16 : i32
    %278 = tpu.dynamic_rotate %273 by %c16_i32_219 dim 1 : vector<8x256xf32>, i32 -> vector<8x256xf32>
    %c16_220 = arith.constant 16 : index
    %c0_221 = arith.constant 0 : index
    %279 = vector.load %arg12[%c16_220, %c0_221] : memref<72x256xf32, #tpu.memory_space<vmem>>, vector<8x256xf32>
    tpu.vector_store %arg12[%c16_220, %c0_221], %278 {strides = array<i32>} : memref<72x256xf32, #tpu.memory_space<vmem>>, vector<8x256xf32>,
    %c24_222 = arith.constant 24 : index
    %c0_223 = arith.constant 0 : index
    %280 = vector.load %arg12[%c24_222, %c0_223] : memref<72x256xf32, #tpu.memory_space<vmem>>, vector<8x256xf32>
    tpu.vector_store %arg12[%c24_222, %c0_223], %268 {strides = array<i32>} : memref<72x256xf32, #tpu.memory_space<vmem>>, vector<8x256xf32>,
    %c32_224 = arith.constant 32 : index
    %c0_225 = arith.constant 0 : index
    %281 = vector.load %arg12[%c32_224, %c0_225] : memref<72x256xf32, #tpu.memory_space<vmem>>, vector<8x256xf32>
    tpu.vector_store %arg12[%c32_224, %c0_225], %263 {strides = array<i32>} : memref<72x256xf32, #tpu.memory_space<vmem>>, vector<8x256xf32>,
    %c40_226 = arith.constant 40 : index
    %c0_227 = arith.constant 0 : index
    %282 = vector.load %arg12[%c40_226, %c0_227] : memref<72x256xf32, #tpu.memory_space<vmem>>, vector<8x256xf32>
    tpu.vector_store %arg12[%c40_226, %c0_227], %273 {strides = array<i32>} : memref<72x256xf32, #tpu.memory_space<vmem>>, vector<8x256xf32>,
    %c240_i32_228 = arith.constant 240 : i32
    %283 = tpu.dynamic_rotate %268 by %c240_i32_228 dim 1 : vector<8x256xf32>, i32 -> vector<8x256xf32>
    %c48_229 = arith.constant 48 : index
    %c0_230 = arith.constant 0 : index
    %284 = vector.load %arg12[%c48_229, %c0_230] : memref<72x256xf32, #tpu.memory_space<vmem>>, vector<8x256xf32>
    tpu.vector_store %arg12[%c48_229, %c0_230], %283 {strides = array<i32>} : memref<72x256xf32, #tpu.memory_space<vmem>>, vector<8x256xf32>,
    %c240_i32_231 = arith.constant 240 : i32
    %285 = tpu.dynamic_rotate %263 by %c240_i32_231 dim 1 : vector<8x256xf32>, i32 -> vector<8x256xf32>
    %c56_232 = arith.constant 56 : index
    %c0_233 = arith.constant 0 : index
    %286 = vector.load %arg12[%c56_232, %c0_233] : memref<72x256xf32, #tpu.memory_space<vmem>>, vector<8x256xf32>
    tpu.vector_store %arg12[%c56_232, %c0_233], %285 {strides = array<i32>} : memref<72x256xf32, #tpu.memory_space<vmem>>, vector<8x256xf32>,
    %c240_i32_234 = arith.constant 240 : i32
    %287 = tpu.dynamic_rotate %273 by %c240_i32_234 dim 1 : vector<8x256xf32>, i32 -> vector<8x256xf32>
    %c64_235 = arith.constant 64 : index
    %c0_236 = arith.constant 0 : index
    %288 = vector.load %arg12[%c64_235, %c0_236] : memref<72x256xf32, #tpu.memory_space<vmem>>, vector<8x256xf32>
    tpu.vector_store %arg12[%c64_235, %c0_236], %287 {strides = array<i32>} : memref<72x256xf32, #tpu.memory_space<vmem>>, vector<8x256xf32>,
    %c3 = arith.constant 3 : index
    %c0_237 = arith.constant 0 : index
    %c0_238 = arith.constant 0 : index
    %289 = vector.load %arg7[%c3, %c0_237, %c0_238] : memref<5x8x72xf32, #tpu.memory_space<vmem>>, vector<1x8x72xf32>
    %290 = vector.shape_cast %289 : vector<1x8x72xf32> to vector<8x72xf32>
    %c0_239 = arith.constant 0 : index
    %c0_240 = arith.constant 0 : index
    %291 = vector.load %arg12[%c0_239, %c0_240] : memref<72x256xf32, #tpu.memory_space<vmem>>, vector<72x256xf32>
    %cst_241 = arith.constant dense<0.000000e+00> : vector<8x256xf32>
    %292 = tpu.matmul %290, %291, %cst_241 {dimension_numbers = #tpu.dot_dimension_numbers<[1], [0], [0], [1], [0, 0, 1, 1], [], []>} : vector<8x72xf32>, vector<72x256xf32>, vector<8x256xf32> -> vector<8x256xf32>
    %293 = vector.extract_strided_slice %2 {offsets = [0, 7], sizes = [8, 1], strides = [1, 1]} : vector<8x11xf32> to vector<8x1xf32>
    %294 = vector.broadcast %293 : vector<8x1xf32> to vector<8x256xf32>
    %295 = arith.addf %292, %294 : vector<8x256xf32>
    %c241_i32_242 = arith.constant 241 : i32
    %296 = tpu.dynamic_rotate %295 by %c241_i32_242 dim 1 : vector<8x256xf32>, i32 -> vector<8x256xf32>
    %c1_i32_243 = arith.constant 1 : i32
    %297 = tpu.dynamic_rotate %295 by %c1_i32_243 dim 1 : vector<8x256xf32>, i32 -> vector<8x256xf32>
    %298 = vector.shape_cast %21 : vector<1x256xi1> to vector<1x256xi1>
    %299 = vector.broadcast %298 : vector<1x256xi1> to vector<8x256xi1>
    %300 = arith.select %299, %296, %297 : vector<8x256xi1>, vector<8x256xf32>
    %c15_i32_244 = arith.constant 15 : i32
    %301 = tpu.dynamic_rotate %295 by %c15_i32_244 dim 1 : vector<8x256xf32>, i32 -> vector<8x256xf32>
    %c255_i32_245 = arith.constant 255 : i32
    %302 = tpu.dynamic_rotate %295 by %c255_i32_245 dim 1 : vector<8x256xf32>, i32 -> vector<8x256xf32>
    %303 = vector.shape_cast %23 : vector<1x256xi1> to vector<1x256xi1>
    %304 = vector.broadcast %303 : vector<1x256xi1> to vector<8x256xi1>
    %305 = arith.select %304, %301, %302 : vector<8x256xi1>, vector<8x256xf32>
    %c16_i32_246 = arith.constant 16 : i32
    %306 = tpu.dynamic_rotate %300 by %c16_i32_246 dim 1 : vector<8x256xf32>, i32 -> vector<8x256xf32>
    %c288 = arith.constant 288 : index
    %c0_247 = arith.constant 0 : index
    %307 = vector.load %arg11[%c288, %c0_247] : memref<432x256xf32, #tpu.memory_space<vmem>>, vector<8x256xf32>
    tpu.vector_store %arg11[%c288, %c0_247], %306 {strides = array<i32>} : memref<432x256xf32, #tpu.memory_space<vmem>>, vector<8x256xf32>,
    %c16_i32_248 = arith.constant 16 : i32
    %308 = tpu.dynamic_rotate %295 by %c16_i32_248 dim 1 : vector<8x256xf32>, i32 -> vector<8x256xf32>
    %c296 = arith.constant 296 : index
    %c0_249 = arith.constant 0 : index
    %309 = vector.load %arg11[%c296, %c0_249] : memref<432x256xf32, #tpu.memory_space<vmem>>, vector<8x256xf32>
    tpu.vector_store %arg11[%c296, %c0_249], %308 {strides = array<i32>} : memref<432x256xf32, #tpu.memory_space<vmem>>, vector<8x256xf32>,
    %c16_i32_250 = arith.constant 16 : i32
    %310 = tpu.dynamic_rotate %305 by %c16_i32_250 dim 1 : vector<8x256xf32>, i32 -> vector<8x256xf32>
    %c304 = arith.constant 304 : index
    %c0_251 = arith.constant 0 : index
    %311 = vector.load %arg11[%c304, %c0_251] : memref<432x256xf32, #tpu.memory_space<vmem>>, vector<8x256xf32>
    tpu.vector_store %arg11[%c304, %c0_251], %310 {strides = array<i32>} : memref<432x256xf32, #tpu.memory_space<vmem>>, vector<8x256xf32>,
    %c312 = arith.constant 312 : index
    %c0_252 = arith.constant 0 : index
    %312 = vector.load %arg11[%c312, %c0_252] : memref<432x256xf32, #tpu.memory_space<vmem>>, vector<8x256xf32>
    tpu.vector_store %arg11[%c312, %c0_252], %300 {strides = array<i32>} : memref<432x256xf32, #tpu.memory_space<vmem>>, vector<8x256xf32>,
    %c320 = arith.constant 320 : index
    %c0_253 = arith.constant 0 : index
    %313 = vector.load %arg11[%c320, %c0_253] : memref<432x256xf32, #tpu.memory_space<vmem>>, vector<8x256xf32>
    tpu.vector_store %arg11[%c320, %c0_253], %295 {strides = array<i32>} : memref<432x256xf32, #tpu.memory_space<vmem>>, vector<8x256xf32>,
    %c328 = arith.constant 328 : index
    %c0_254 = arith.constant 0 : index
    %314 = vector.load %arg11[%c328, %c0_254] : memref<432x256xf32, #tpu.memory_space<vmem>>, vector<8x256xf32>
    tpu.vector_store %arg11[%c328, %c0_254], %305 {strides = array<i32>} : memref<432x256xf32, #tpu.memory_space<vmem>>, vector<8x256xf32>,
    %c240_i32_255 = arith.constant 240 : i32
    %315 = tpu.dynamic_rotate %300 by %c240_i32_255 dim 1 : vector<8x256xf32>, i32 -> vector<8x256xf32>
    %c336 = arith.constant 336 : index
    %c0_256 = arith.constant 0 : index
    %316 = vector.load %arg11[%c336, %c0_256] : memref<432x256xf32, #tpu.memory_space<vmem>>, vector<8x256xf32>
    tpu.vector_store %arg11[%c336, %c0_256], %315 {strides = array<i32>} : memref<432x256xf32, #tpu.memory_space<vmem>>, vector<8x256xf32>,
    %c240_i32_257 = arith.constant 240 : i32
    %317 = tpu.dynamic_rotate %295 by %c240_i32_257 dim 1 : vector<8x256xf32>, i32 -> vector<8x256xf32>
    %c344 = arith.constant 344 : index
    %c0_258 = arith.constant 0 : index
    %318 = vector.load %arg11[%c344, %c0_258] : memref<432x256xf32, #tpu.memory_space<vmem>>, vector<8x256xf32>
    tpu.vector_store %arg11[%c344, %c0_258], %317 {strides = array<i32>} : memref<432x256xf32, #tpu.memory_space<vmem>>, vector<8x256xf32>,
    %c240_i32_259 = arith.constant 240 : i32
    %319 = tpu.dynamic_rotate %305 by %c240_i32_259 dim 1 : vector<8x256xf32>, i32 -> vector<8x256xf32>
    %c352 = arith.constant 352 : index
    %c0_260 = arith.constant 0 : index
    %320 = vector.load %arg11[%c352, %c0_260] : memref<432x256xf32, #tpu.memory_space<vmem>>, vector<8x256xf32>
    tpu.vector_store %arg11[%c352, %c0_260], %319 {strides = array<i32>} : memref<432x256xf32, #tpu.memory_space<vmem>>, vector<8x256xf32>,
    %c0_261 = arith.constant 0 : index
    %c0_262 = arith.constant 0 : index
    %321 = vector.load %arg6[%c0_261, %c0_262] : memref<8x360xf32, #tpu.memory_space<vmem>>, vector<8x360xf32>
    %c0_263 = arith.constant 0 : index
    %c0_264 = arith.constant 0 : index
    %322 = vector.load %arg11[%c0_263, %c0_264] : memref<432x256xf32, #tpu.memory_space<vmem>>, vector<360x256xf32>
    %cst_265 = arith.constant dense<0.000000e+00> : vector<8x256xf32>
    %323 = tpu.matmul %321, %322, %cst_265 {dimension_numbers = #tpu.dot_dimension_numbers<[1], [0], [0], [1], [0, 0, 1, 1], [], []>} : vector<8x360xf32>, vector<360x256xf32>, vector<8x256xf32> -> vector<8x256xf32>
    %324 = vector.extract_strided_slice %2 {offsets = [0, 8], sizes = [8, 1], strides = [1, 1]} : vector<8x11xf32> to vector<8x1xf32>
    %325 = vector.broadcast %324 : vector<8x1xf32> to vector<8x256xf32>
    %326 = arith.addf %323, %325 : vector<8x256xf32>
    %cst_266 = arith.constant 0.000000e+00 : f32
    %327 = vector.broadcast %cst_266 : f32 to vector<8x256xf32>
    %328 = arith.cmpf oge, %326, %327 : vector<8x256xf32>
    %cst_267 = arith.constant 0.00999999977 : f32
    %329 = vector.broadcast %cst_267 : f32 to vector<8x256xf32>
    %330 = arith.mulf %329, %326 : vector<8x256xf32>
    %331 = arith.select %328, %326, %330 : vector<8x256xi1>, vector<8x256xf32>
    %c241_i32_268 = arith.constant 241 : i32
    %332 = tpu.dynamic_rotate %331 by %c241_i32_268 dim 1 : vector<8x256xf32>, i32 -> vector<8x256xf32>
    %c1_i32_269 = arith.constant 1 : i32
    %333 = tpu.dynamic_rotate %331 by %c1_i32_269 dim 1 : vector<8x256xf32>, i32 -> vector<8x256xf32>
    %334 = vector.shape_cast %21 : vector<1x256xi1> to vector<1x256xi1>
    %335 = vector.broadcast %334 : vector<1x256xi1> to vector<8x256xi1>
    %336 = arith.select %335, %332, %333 : vector<8x256xi1>, vector<8x256xf32>
    %c15_i32_270 = arith.constant 15 : i32
    %337 = tpu.dynamic_rotate %331 by %c15_i32_270 dim 1 : vector<8x256xf32>, i32 -> vector<8x256xf32>
    %c255_i32_271 = arith.constant 255 : i32
    %338 = tpu.dynamic_rotate %331 by %c255_i32_271 dim 1 : vector<8x256xf32>, i32 -> vector<8x256xf32>
    %339 = vector.shape_cast %23 : vector<1x256xi1> to vector<1x256xi1>
    %340 = vector.broadcast %339 : vector<1x256xi1> to vector<8x256xi1>
    %341 = arith.select %340, %337, %338 : vector<8x256xi1>, vector<8x256xf32>
    %c16_i32_272 = arith.constant 16 : i32
    %342 = tpu.dynamic_rotate %336 by %c16_i32_272 dim 1 : vector<8x256xf32>, i32 -> vector<8x256xf32>
    %c0_273 = arith.constant 0 : index
    %c0_274 = arith.constant 0 : index
    %343 = vector.load %arg12[%c0_273, %c0_274] : memref<72x256xf32, #tpu.memory_space<vmem>>, vector<8x256xf32>
    tpu.vector_store %arg12[%c0_273, %c0_274], %342 {strides = array<i32>} : memref<72x256xf32, #tpu.memory_space<vmem>>, vector<8x256xf32>,
    %c16_i32_275 = arith.constant 16 : i32
    %344 = tpu.dynamic_rotate %331 by %c16_i32_275 dim 1 : vector<8x256xf32>, i32 -> vector<8x256xf32>
    %c8_276 = arith.constant 8 : index
    %c0_277 = arith.constant 0 : index
    %345 = vector.load %arg12[%c8_276, %c0_277] : memref<72x256xf32, #tpu.memory_space<vmem>>, vector<8x256xf32>
    tpu.vector_store %arg12[%c8_276, %c0_277], %344 {strides = array<i32>} : memref<72x256xf32, #tpu.memory_space<vmem>>, vector<8x256xf32>,
    %c16_i32_278 = arith.constant 16 : i32
    %346 = tpu.dynamic_rotate %341 by %c16_i32_278 dim 1 : vector<8x256xf32>, i32 -> vector<8x256xf32>
    %c16_279 = arith.constant 16 : index
    %c0_280 = arith.constant 0 : index
    %347 = vector.load %arg12[%c16_279, %c0_280] : memref<72x256xf32, #tpu.memory_space<vmem>>, vector<8x256xf32>
    tpu.vector_store %arg12[%c16_279, %c0_280], %346 {strides = array<i32>} : memref<72x256xf32, #tpu.memory_space<vmem>>, vector<8x256xf32>,
    %c24_281 = arith.constant 24 : index
    %c0_282 = arith.constant 0 : index
    %348 = vector.load %arg12[%c24_281, %c0_282] : memref<72x256xf32, #tpu.memory_space<vmem>>, vector<8x256xf32>
    tpu.vector_store %arg12[%c24_281, %c0_282], %336 {strides = array<i32>} : memref<72x256xf32, #tpu.memory_space<vmem>>, vector<8x256xf32>,
    %c32_283 = arith.constant 32 : index
    %c0_284 = arith.constant 0 : index
    %349 = vector.load %arg12[%c32_283, %c0_284] : memref<72x256xf32, #tpu.memory_space<vmem>>, vector<8x256xf32>
    tpu.vector_store %arg12[%c32_283, %c0_284], %331 {strides = array<i32>} : memref<72x256xf32, #tpu.memory_space<vmem>>, vector<8x256xf32>,
    %c40_285 = arith.constant 40 : index
    %c0_286 = arith.constant 0 : index
    %350 = vector.load %arg12[%c40_285, %c0_286] : memref<72x256xf32, #tpu.memory_space<vmem>>, vector<8x256xf32>
    tpu.vector_store %arg12[%c40_285, %c0_286], %341 {strides = array<i32>} : memref<72x256xf32, #tpu.memory_space<vmem>>, vector<8x256xf32>,
    %c240_i32_287 = arith.constant 240 : i32
    %351 = tpu.dynamic_rotate %336 by %c240_i32_287 dim 1 : vector<8x256xf32>, i32 -> vector<8x256xf32>
    %c48_288 = arith.constant 48 : index
    %c0_289 = arith.constant 0 : index
    %352 = vector.load %arg12[%c48_288, %c0_289] : memref<72x256xf32, #tpu.memory_space<vmem>>, vector<8x256xf32>
    tpu.vector_store %arg12[%c48_288, %c0_289], %351 {strides = array<i32>} : memref<72x256xf32, #tpu.memory_space<vmem>>, vector<8x256xf32>,
    %c240_i32_290 = arith.constant 240 : i32
    %353 = tpu.dynamic_rotate %331 by %c240_i32_290 dim 1 : vector<8x256xf32>, i32 -> vector<8x256xf32>
    %c56_291 = arith.constant 56 : index
    %c0_292 = arith.constant 0 : index
    %354 = vector.load %arg12[%c56_291, %c0_292] : memref<72x256xf32, #tpu.memory_space<vmem>>, vector<8x256xf32>
    tpu.vector_store %arg12[%c56_291, %c0_292], %353 {strides = array<i32>} : memref<72x256xf32, #tpu.memory_space<vmem>>, vector<8x256xf32>,
    %c240_i32_293 = arith.constant 240 : i32
    %355 = tpu.dynamic_rotate %341 by %c240_i32_293 dim 1 : vector<8x256xf32>, i32 -> vector<8x256xf32>
    %c64_294 = arith.constant 64 : index
    %c0_295 = arith.constant 0 : index
    %356 = vector.load %arg12[%c64_294, %c0_295] : memref<72x256xf32, #tpu.memory_space<vmem>>, vector<8x256xf32>
    tpu.vector_store %arg12[%c64_294, %c0_295], %355 {strides = array<i32>} : memref<72x256xf32, #tpu.memory_space<vmem>>, vector<8x256xf32>,
    %c4 = arith.constant 4 : index
    %c0_296 = arith.constant 0 : index
    %c0_297 = arith.constant 0 : index
    %357 = vector.load %arg7[%c4, %c0_296, %c0_297] : memref<5x8x72xf32, #tpu.memory_space<vmem>>, vector<1x8x72xf32>
    %358 = vector.shape_cast %357 : vector<1x8x72xf32> to vector<8x72xf32>
    %c0_298 = arith.constant 0 : index
    %c0_299 = arith.constant 0 : index
    %359 = vector.load %arg12[%c0_298, %c0_299] : memref<72x256xf32, #tpu.memory_space<vmem>>, vector<72x256xf32>
    %cst_300 = arith.constant dense<0.000000e+00> : vector<8x256xf32>
    %360 = tpu.matmul %358, %359, %cst_300 {dimension_numbers = #tpu.dot_dimension_numbers<[1], [0], [0], [1], [0, 0, 1, 1], [], []>} : vector<8x72xf32>, vector<72x256xf32>, vector<8x256xf32> -> vector<8x256xf32>
    %361 = vector.extract_strided_slice %2 {offsets = [0, 9], sizes = [8, 1], strides = [1, 1]} : vector<8x11xf32> to vector<8x1xf32>
    %362 = vector.broadcast %361 : vector<8x1xf32> to vector<8x256xf32>
    %363 = arith.addf %360, %362 : vector<8x256xf32>
    %c241_i32_301 = arith.constant 241 : i32
    %364 = tpu.dynamic_rotate %363 by %c241_i32_301 dim 1 : vector<8x256xf32>, i32 -> vector<8x256xf32>
    %c1_i32_302 = arith.constant 1 : i32
    %365 = tpu.dynamic_rotate %363 by %c1_i32_302 dim 1 : vector<8x256xf32>, i32 -> vector<8x256xf32>
    %366 = vector.shape_cast %21 : vector<1x256xi1> to vector<1x256xi1>
    %367 = vector.broadcast %366 : vector<1x256xi1> to vector<8x256xi1>
    %368 = arith.select %367, %364, %365 : vector<8x256xi1>, vector<8x256xf32>
    %c15_i32_303 = arith.constant 15 : i32
    %369 = tpu.dynamic_rotate %363 by %c15_i32_303 dim 1 : vector<8x256xf32>, i32 -> vector<8x256xf32>
    %c255_i32_304 = arith.constant 255 : i32
    %370 = tpu.dynamic_rotate %363 by %c255_i32_304 dim 1 : vector<8x256xf32>, i32 -> vector<8x256xf32>
    %371 = vector.shape_cast %23 : vector<1x256xi1> to vector<1x256xi1>
    %372 = vector.broadcast %371 : vector<1x256xi1> to vector<8x256xi1>
    %373 = arith.select %372, %369, %370 : vector<8x256xi1>, vector<8x256xf32>
    %c16_i32_305 = arith.constant 16 : i32
    %374 = tpu.dynamic_rotate %368 by %c16_i32_305 dim 1 : vector<8x256xf32>, i32 -> vector<8x256xf32>
    %c360 = arith.constant 360 : index
    %c0_306 = arith.constant 0 : index
    %375 = vector.load %arg11[%c360, %c0_306] : memref<432x256xf32, #tpu.memory_space<vmem>>, vector<8x256xf32>
    tpu.vector_store %arg11[%c360, %c0_306], %374 {strides = array<i32>} : memref<432x256xf32, #tpu.memory_space<vmem>>, vector<8x256xf32>,
    %c16_i32_307 = arith.constant 16 : i32
    %376 = tpu.dynamic_rotate %363 by %c16_i32_307 dim 1 : vector<8x256xf32>, i32 -> vector<8x256xf32>
    %c368 = arith.constant 368 : index
    %c0_308 = arith.constant 0 : index
    %377 = vector.load %arg11[%c368, %c0_308] : memref<432x256xf32, #tpu.memory_space<vmem>>, vector<8x256xf32>
    tpu.vector_store %arg11[%c368, %c0_308], %376 {strides = array<i32>} : memref<432x256xf32, #tpu.memory_space<vmem>>, vector<8x256xf32>,
    %c16_i32_309 = arith.constant 16 : i32
    %378 = tpu.dynamic_rotate %373 by %c16_i32_309 dim 1 : vector<8x256xf32>, i32 -> vector<8x256xf32>
    %c376 = arith.constant 376 : index
    %c0_310 = arith.constant 0 : index
    %379 = vector.load %arg11[%c376, %c0_310] : memref<432x256xf32, #tpu.memory_space<vmem>>, vector<8x256xf32>
    tpu.vector_store %arg11[%c376, %c0_310], %378 {strides = array<i32>} : memref<432x256xf32, #tpu.memory_space<vmem>>, vector<8x256xf32>,
    %c384 = arith.constant 384 : index
    %c0_311 = arith.constant 0 : index
    %380 = vector.load %arg11[%c384, %c0_311] : memref<432x256xf32, #tpu.memory_space<vmem>>, vector<8x256xf32>
    tpu.vector_store %arg11[%c384, %c0_311], %368 {strides = array<i32>} : memref<432x256xf32, #tpu.memory_space<vmem>>, vector<8x256xf32>,
    %c392 = arith.constant 392 : index
    %c0_312 = arith.constant 0 : index
    %381 = vector.load %arg11[%c392, %c0_312] : memref<432x256xf32, #tpu.memory_space<vmem>>, vector<8x256xf32>
    tpu.vector_store %arg11[%c392, %c0_312], %363 {strides = array<i32>} : memref<432x256xf32, #tpu.memory_space<vmem>>, vector<8x256xf32>,
    %c400 = arith.constant 400 : index
    %c0_313 = arith.constant 0 : index
    %382 = vector.load %arg11[%c400, %c0_313] : memref<432x256xf32, #tpu.memory_space<vmem>>, vector<8x256xf32>
    tpu.vector_store %arg11[%c400, %c0_313], %373 {strides = array<i32>} : memref<432x256xf32, #tpu.memory_space<vmem>>, vector<8x256xf32>,
    %c240_i32_314 = arith.constant 240 : i32
    %383 = tpu.dynamic_rotate %368 by %c240_i32_314 dim 1 : vector<8x256xf32>, i32 -> vector<8x256xf32>
    %c408 = arith.constant 408 : index
    %c0_315 = arith.constant 0 : index
    %384 = vector.load %arg11[%c408, %c0_315] : memref<432x256xf32, #tpu.memory_space<vmem>>, vector<8x256xf32>
    tpu.vector_store %arg11[%c408, %c0_315], %383 {strides = array<i32>} : memref<432x256xf32, #tpu.memory_space<vmem>>, vector<8x256xf32>,
    %c240_i32_316 = arith.constant 240 : i32
    %385 = tpu.dynamic_rotate %363 by %c240_i32_316 dim 1 : vector<8x256xf32>, i32 -> vector<8x256xf32>
    %c416 = arith.constant 416 : index
    %c0_317 = arith.constant 0 : index
    %386 = vector.load %arg11[%c416, %c0_317] : memref<432x256xf32, #tpu.memory_space<vmem>>, vector<8x256xf32>
    tpu.vector_store %arg11[%c416, %c0_317], %385 {strides = array<i32>} : memref<432x256xf32, #tpu.memory_space<vmem>>, vector<8x256xf32>,
    %c240_i32_318 = arith.constant 240 : i32
    %387 = tpu.dynamic_rotate %373 by %c240_i32_318 dim 1 : vector<8x256xf32>, i32 -> vector<8x256xf32>
    %c424 = arith.constant 424 : index
    %c0_319 = arith.constant 0 : index
    %388 = vector.load %arg11[%c424, %c0_319] : memref<432x256xf32, #tpu.memory_space<vmem>>, vector<8x256xf32>
    tpu.vector_store %arg11[%c424, %c0_319], %387 {strides = array<i32>} : memref<432x256xf32, #tpu.memory_space<vmem>>, vector<8x256xf32>,
    %c0_320 = arith.constant 0 : index
    %c0_321 = arith.constant 0 : index
    %389 = vector.load %arg8[%c0_320, %c0_321] : memref<8x432xf32, #tpu.memory_space<vmem>>, vector<8x432xf32>
    %c0_322 = arith.constant 0 : index
    %c0_323 = arith.constant 0 : index
    %390 = vector.load %arg11[%c0_322, %c0_323] : memref<432x256xf32, #tpu.memory_space<vmem>>, vector<432x256xf32>
    %cst_324 = arith.constant dense<0.000000e+00> : vector<8x256xf32>
    %391 = tpu.matmul %389, %390, %cst_324 {dimension_numbers = #tpu.dot_dimension_numbers<[1], [0], [0], [1], [0, 0, 1, 1], [], []>} : vector<8x432xf32>, vector<432x256xf32>, vector<8x256xf32> -> vector<8x256xf32>
    %392 = vector.extract_strided_slice %2 {offsets = [0, 10], sizes = [8, 1], strides = [1, 1]} : vector<8x11xf32> to vector<8x1xf32>
    %393 = vector.broadcast %392 : vector<8x1xf32> to vector<8x256xf32>
    %394 = arith.addf %391, %393 : vector<8x256xf32>
    %cst_325 = arith.constant 0.000000e+00 : f32
    %395 = vector.broadcast %cst_325 : f32 to vector<8x256xf32>
    %396 = arith.cmpf oge, %394, %395 : vector<8x256xf32>
    %cst_326 = arith.constant 0.00999999977 : f32
    %397 = vector.broadcast %cst_326 : f32 to vector<8x256xf32>
    %398 = arith.mulf %397, %394 : vector<8x256xf32>
    %399 = arith.select %396, %394, %398 : vector<8x256xi1>, vector<8x256xf32>
    %400 = arith.addf %399, %1 : vector<8x256xf32>
    %c0_327 = arith.constant 0 : index
    %c0_328 = arith.constant 0 : index
    %c0_329 = arith.constant 0 : index
    %401 = vector.load %arg10[%c0_327, %c0_328, %c0_329] : memref<1x8x256xf32, #tpu.memory_space<vmem>>, vector<1x8x256xf32>
    %402 = vector.shape_cast %401 : vector<1x8x256xf32> to vector<8x256xf32>
    %403 = vector.shape_cast %400 : vector<8x256xf32> to vector<1x8x256xf32>
    tpu.vector_store %arg10[%c0_327, %c0_328, %c0_329], %403 {strides = array<i32>} : memref<1x8x256xf32, #tpu.memory_space<vmem>>, vector<1x8x256xf32>,
    return
  }
  func.func @transform_0(%arg0: i32) -> (i32, i32, i32) {
    %c0_i32 = arith.constant 0 : i32
    %c0_i32_0 = arith.constant 0 : i32
    %c0_i32_1 = arith.constant 0 : i32
    return %arg0, %c0_i32, %c0_i32_0 : i32, i32, i32
  }
  func.func @transform_1(%arg0: i32) -> (i32, i32) {
    %c0_i32 = arith.constant 0 : i32
    %c0_i32_0 = arith.constant 0 : i32
    %c0_i32_1 = arith.constant 0 : i32
    return %c0_i32, %c0_i32_0 : i32, i32
  }
  func.func @transform_2(%arg0: i32) -> (i32, i32) {
    %c0_i32 = arith.constant 0 : i32
    %c0_i32_0 = arith.constant 0 : i32
    %c0_i32_1 = arith.constant 0 : i32
    return %c0_i32, %c0_i32_0 : i32, i32
  }
  func.func @transform_3(%arg0: i32) -> (i32, i32) {
    %c0_i32 = arith.constant 0 : i32
    %c0_i32_0 = arith.constant 0 : i32
    %c0_i32_1 = arith.constant 0 : i32
    return %c0_i32, %c0_i32_0 : i32, i32
  }
  func.func @transform_4(%arg0: i32) -> (i32, i32) {
    %c0_i32 = arith.constant 0 : i32
    %c0_i32_0 = arith.constant 0 : i32
    %c0_i32_1 = arith.constant 0 : i32
    return %c0_i32, %c0_i32_0 : i32, i32
  }
  func.func @transform_5(%arg0: i32) -> (i32, i32) {
    %c0_i32 = arith.constant 0 : i32
    %c0_i32_0 = arith.constant 0 : i32
    %c0_i32_1 = arith.constant 0 : i32
    return %c0_i32, %c0_i32_0 : i32, i32
  }
  func.func @transform_6(%arg0: i32) -> (i32, i32, i32) {
    %c0_i32 = arith.constant 0 : i32
    %c0_i32_0 = arith.constant 0 : i32
    %c0_i32_1 = arith.constant 0 : i32
    %c0_i32_2 = arith.constant 0 : i32
    return %c0_i32, %c0_i32_0, %c0_i32_1 : i32, i32, i32
  }
  func.func @transform_7(%arg0: i32) -> (i32, i32) {
    %c0_i32 = arith.constant 0 : i32
    %c0_i32_0 = arith.constant 0 : i32
    %c0_i32_1 = arith.constant 0 : i32
    return %c0_i32, %c0_i32_0 : i32, i32
  }
  func.func @transform_8(%arg0: i32) -> (i32, i32) {
    %c0_i32 = arith.constant 0 : i32
    %c0_i32_0 = arith.constant 0 : i32
    %c0_i32_1 = arith.constant 0 : i32
    return %c0_i32, %c0_i32_0 : i32, i32
  }
  func.func @transform_9(%arg0: i32) -> (i32, i32, i32) {
    %c0_i32 = arith.constant 0 : i32
    %c0_i32_0 = arith.constant 0 : i32
    %c0_i32_1 = arith.constant 0 : i32
    return %arg0, %c0_i32, %c0_i32_0 : i32, i32, i32
  }
}

</mosaic_0001>

<llo_original>
// kernel: dense_block_forward.1
$region0: #{dense_block_forward.1}
  #allocation0 [shape = 'u32[]', space=smem, size = 0x4, offset = 0x4, fixed_abs, tag = 'smem constant byte address 0x4 - core index']
  #allocation1 [shape = 'u32[72,128]{1,0:T(1,128)}', space=vmem, size = 0x9000, scoped, tag = 'internal scratch']
  #allocation2 [shape = 'f32[432,256]{1,0:T(8,128)}', space=vmem, size = 0x6c000, scoped, tag = 'scratch operand']
  #allocation3 [shape = 'f32[72,256]{1,0:T(8,128)}', space=vmem, size = 0x12000, scoped, tag = 'scratch operand']
  %s0 = inlined_call_operand.vmem [shape: f32[2,8,256], index: 0, kind: input, shape index: {}]
  %s1 = inlined_call_operand.vmem [shape: f32[8,72], index: 1, kind: input, shape index: {}]
  %s2 = inlined_call_operand.vmem [shape: f32[8,144], index: 2, kind: input, shape index: {}]
  %s3 = inlined_call_operand.vmem [shape: f32[8,216], index: 3, kind: input, shape index: {}]
  %s4 = inlined_call_operand.vmem [shape: f32[8,288], index: 4, kind: input, shape index: {}]
  %s5 = inlined_call_operand.vmem [shape: f32[8,360], index: 5, kind: input, shape index: {}]
  %s6 = inlined_call_operand.vmem [shape: f32[5,8,72], index: 6, kind: input, shape index: {}]
  %s7 = inlined_call_operand.vmem [shape: f32[8,432], index: 7, kind: input, shape index: {}]
  %s8 = inlined_call_operand.vmem [shape: f32[8,11], index: 8, kind: input, shape index: {}]
  %s9 = inlined_call_operand.vmem [shape: f32[2,8,256], index: 9, kind: output, shape index: {}]
  %s10 = sld [smem:[#allocation0]]
  $region69: #{dense_block_forward.1} parent=0
    _
  %s12 = ssub.s32 1, %s10
  %s13 = scalar_select 0, %s12, %s10
  loop: start=0, step=1, limit=4
  $region2: #{dense_block_forward.1} parent=0 // loop_pre_header
    _
  $region3: #{dense_block_forward.1} parent=0 // loop_header
    %s15 = sphi 0, %s19
    %p16 = scmp.ge.s32.totalorder %s15, 4
    %s25 = sphi 0, %s27
    %s28 = sphi 0, %s25
    %s29 = sphi 0, %s28
    %s45 = sphi 0, %s29
    %s49 = sphi 0, %s49
    %s51 = sphi 0, %s49
    %s52 = sphi 0, %s51
    %s66 = sphi 0, %s52
    %s70 = sphi 0, %s70
    %s72 = sphi 0, %s70
    %s73 = sphi 0, %s72
    %s87 = sphi 0, %s73
    %s91 = sphi 0, %s91
    %s93 = sphi 0, %s91
    %s94 = sphi 0, %s93
    %s108 = sphi 0, %s94
    %s112 = sphi 0, %s112
    %s114 = sphi 0, %s112
    %s115 = sphi 0, %s114
    %s129 = sphi 0, %s115
    %s133 = sphi 0, %s133
    %s135 = sphi 0, %s133
    %s136 = sphi 0, %s135
    %s150 = sphi 0, %s136
    %s154 = sphi 0, %s154
    %s156 = sphi 0, %s154
    %s157 = sphi 0, %s156
    %s171 = sphi 0, %s157
    %s175 = sphi 0, %s175
    %s177 = sphi 0, %s175
    %s178 = sphi 0, %s177
    %s192 = sphi 0, %s178
    %s196 = sphi 0, %s196
    %s198 = sphi 0, %s196
    %s199 = sphi 0, %s198
    %s213 = sphi 0, %s199
    %s219 = sphi 0, %s221
    %s222 = sphi 0, %s219
    %s223 = sphi 0, %s222
    %s239 = sphi 0, %s223
  $region4: #{dense_block_forward.1} parent=0 // loop_header_branch
    %18 = sbr.rel (%p16) target = $region8
  $region5: #{dense_block_forward.1} parent=0 // loop_body
    %s20 = ssub.s32 %s15, 1
    %s21 = ssub.s32 %s15, 2
    %s22 = sadd.s32 %s15, 1
    %s23 = ssub.s32 %s15, %s22
    %p24 = scmp.eq.s32.totalorder %s23, 0
    %s26 = sadd.s32 %s25, 1
    %s27 = scalar_select %p24, %s25, %s26
    %p30 = pneg %p24
    %p31 = scmp.eq.s32.totalorder %s15, 1
    %p32 = por %p30, %p31
    %p33 = scmp.ne.s32.totalorder %s25, %s28
    %p34 = scmp.eq.s32.totalorder %s15, 0
    %p35 = por %p33, %p34
    %p36 = scmp.ne.s32.totalorder %s25, %s28
    %p37 = scmp.eq.s32.totalorder %s20, 1
    %p38 = por %p36, %p37
    %p39 = scmp.ne.s32.totalorder %s28, %s29
    %p40 = scmp.eq.s32.totalorder %s20, 0
    %p41 = por %p39, %p40
    %p42 = scmp.ne.s32.totalorder %s28, %s29
    %p43 = scmp.eq.s32.totalorder %s21, 1
    %p44 = por %p42, %p43
    %p46 = scmp.ne.s32.totalorder %s29, %s45
    %p47 = scmp.eq.s32.totalorder %s21, 0
    %p48 = por %p46, %p47
    %s50 = sadd.s32 %s49, 1
    %p53 = scmp.eq.s32.totalorder %s15, 1
    %p54 = scmp.ne.s32.totalorder %s49, %s51
    %p55 = scmp.eq.s32.totalorder %s15, 0
    %p56 = por %p54, %p55
    %p57 = scmp.ne.s32.totalorder %s49, %s51
    %p58 = scmp.eq.s32.totalorder %s20, 1
    %p59 = por %p57, %p58
    %p60 = scmp.ne.s32.totalorder %s51, %s52
    %p61 = scmp.eq.s32.totalorder %s20, 0
    %p62 = por %p60, %p61
    %p63 = scmp.ne.s32.totalorder %s51, %s52
    %p64 = scmp.eq.s32.totalorder %s21, 1
    %p65 = por %p63, %p64
    %p67 = scmp.ne.s32.totalorder %s52, %s66
    %p68 = scmp.eq.s32.totalorder %s21, 0
    %p69 = por %p67, %p68
    %s71 = sadd.s32 %s70, 1
    %p74 = scmp.eq.s32.totalorder %s15, 1
    %p75 = scmp.ne.s32.totalorder %s70, %s72
    %p76 = scmp.eq.s32.totalorder %s15, 0
    %p77 = por %p75, %p76
    %p78 = scmp.ne.s32.totalorder %s70, %s72
    %p79 = scmp.eq.s32.totalorder %s20, 1
    %p80 = por %p78, %p79
    %p81 = scmp.ne.s32.totalorder %s72, %s73
    %p82 = scmp.eq.s32.totalorder %s20, 0
    %p83 = por %p81, %p82
    %p84 = scmp.ne.s32.totalorder %s72, %s73
    %p85 = scmp.eq.s32.totalorder %s21, 1
    %p86 = por %p84, %p85
    %p88 = scmp.ne.s32.totalorder %s73, %s87
    %p89 = scmp.eq.s32.totalorder %s21, 0
    %p90 = por %p88, %p89
    %s92 = sadd.s32 %s91, 1
    %p95 = scmp.eq.s32.totalorder %s15, 1
    %p96 = scmp.ne.s32.totalorder %s91, %s93
    %p97 = scmp.eq.s32.totalorder %s15, 0
    %p98 = por %p96, %p97
    %p99 = scmp.ne.s32.totalorder %s91, %s93
    %p100 = scmp.eq.s32.totalorder %s20, 1
    %p101 = por %p99, %p100
    %p102 = scmp.ne.s32.totalorder %s93, %s94
    %p103 = scmp.eq.s32.totalorder %s20, 0
    %p104 = por %p102, %p103
    %p105 = scmp.ne.s32.totalorder %s93, %s94
    %p106 = scmp.eq.s32.totalorder %s21, 1
    %p107 = por %p105, %p106
    %p109 = scmp.ne.s32.totalorder %s94, %s108
    %p110 = scmp.eq.s32.totalorder %s21, 0
    %p111 = por %p109, %p110
    %s113 = sadd.s32 %s112, 1
    %p116 = scmp.eq.s32.totalorder %s15, 1
    %p117 = scmp.ne.s32.totalorder %s112, %s114
    %p118 = scmp.eq.s32.totalorder %s15, 0
    %p119 = por %p117, %p118
    %p120 = scmp.ne.s32.totalorder %s112, %s114
    %p121 = scmp.eq.s32.totalorder %s20, 1
    %p122 = por %p120, %p121
    %p123 = scmp.ne.s32.totalorder %s114, %s115
    %p124 = scmp.eq.s32.totalorder %s20, 0
    %p125 = por %p123, %p124
    %p126 = scmp.ne.s32.totalorder %s114, %s115
    %p127 = scmp.eq.s32.totalorder %s21, 1
    %p128 = por %p126, %p127
    %p130 = scmp.ne.s32.totalorder %s115, %s129
    %p131 = scmp.eq.s32.totalorder %s21, 0
    %p132 = por %p130, %p131
    %s134 = sadd.s32 %s133, 1
    %p137 = scmp.eq.s32.totalorder %s15, 1
    %p138 = scmp.ne.s32.totalorder %s133, %s135
    %p139 = scmp.eq.s32.totalorder %s15, 0
    %p140 = por %p138, %p139
    %p141 = scmp.ne.s32.totalorder %s133, %s135
    %p142 = scmp.eq.s32.totalorder %s20, 1
    %p143 = por %p141, %p142
    %p144 = scmp.ne.s32.totalorder %s135, %s136
    %p145 = scmp.eq.s32.totalorder %s20, 0
    %p146 = por %p144, %p145
    %p147 = scmp.ne.s32.totalorder %s135, %s136
    %p148 = scmp.eq.s32.totalorder %s21, 1
    %p149 = por %p147, %p148
    %p151 = scmp.ne.s32.totalorder %s136, %s150
    %p152 = scmp.eq.s32.totalorder %s21, 0
    %p153 = por %p151, %p152
    %s155 = sadd.s32 %s154, 1
    %p158 = scmp.eq.s32.totalorder %s15, 1
    %p159 = scmp.ne.s32.totalorder %s154, %s156
    %p160 = scmp.eq.s32.totalorder %s15, 0
    %p161 = por %p159, %p160
    %p162 = scmp.ne.s32.totalorder %s154, %s156
    %p163 = scmp.eq.s32.totalorder %s20, 1
    %p164 = por %p162, %p163
    %p165 = scmp.ne.s32.totalorder %s156, %s157
    %p166 = scmp.eq.s32.totalorder %s20, 0
    %p167 = por %p165, %p166
    %p168 = scmp.ne.s32.totalorder %s156, %s157
    %p169 = scmp.eq.s32.totalorder %s21, 1
    %p170 = por %p168, %p169
    %p172 = scmp.ne.s32.totalorder %s157, %s171
    %p173 = scmp.eq.s32.totalorder %s21, 0
    %p174 = por %p172, %p173
    %s176 = sadd.s32 %s175, 1
    %p179 = scmp.eq.s32.totalorder %s15, 1
    %p180 = scmp.ne.s32.totalorder %s175, %s177
    %p181 = scmp.eq.s32.totalorder %s15, 0
    %p182 = por %p180, %p181
    %p183 = scmp.ne.s32.totalorder %s175, %s177
    %p184 = scmp.eq.s32.totalorder %s20, 1
    %p185 = por %p183, %p184
    %p186 = scmp.ne.s32.totalorder %s177, %s178
    %p187 = scmp.eq.s32.totalorder %s20, 0
    %p188 = por %p186, %p187
    %p189 = scmp.ne.s32.totalorder %s177, %s178
    %p190 = scmp.eq.s32.totalorder %s21, 1
    %p191 = por %p189, %p190
    %p193 = scmp.ne.s32.totalorder %s178, %s192
    %p194 = scmp.eq.s32.totalorder %s21, 0
    %p195 = por %p193, %p194
    %s197 = sadd.s32 %s196, 1
    %p200 = scmp.eq.s32.totalorder %s15, 1
    %p201 = scmp.ne.s32.totalorder %s196, %s198
    %p202 = scmp.eq.s32.totalorder %s15, 0
    %p203 = por %p201, %p202
    %p204 = scmp.ne.s32.totalorder %s196, %s198
    %p205 = scmp.eq.s32.totalorder %s20, 1
    %p206 = por %p204, %p205
    %p207 = scmp.ne.s32.totalorder %s198, %s199
    %p208 = scmp.eq.s32.totalorder %s20, 0
    %p209 = por %p207, %p208
    %p210 = scmp.ne.s32.totalorder %s198, %s199
    %p211 = scmp.eq.s32.totalorder %s21, 1
    %p212 = por %p210, %p211
    %p214 = scmp.ne.s32.totalorder %s199, %s213
    %p215 = scmp.eq.s32.totalorder %s21, 0
    %p216 = por %p214, %p215
    %s217 = ssub.s32 %s15, %s22
    %p218 = scmp.eq.s32.totalorder %s217, 0
    %s220 = sadd.s32 %s219, 1
    %s221 = scalar_select %p218, %s219, %s220
    %p224 = pneg %p218
    %p225 = scmp.eq.s32.totalorder %s15, 1
    %p226 = por %p224, %p225
    %p227 = scmp.ne.s32.totalorder %s219, %s222
    %p228 = scmp.eq.s32.totalorder %s15, 0
    %p229 = por %p227, %p228
    %p230 = scmp.ne.s32.totalorder %s219, %s222
    %p231 = scmp.eq.s32.totalorder %s20, 1
    %p232 = por %p230, %p231
    %p233 = scmp.ne.s32.totalorder %s222, %s223
    %p234 = scmp.eq.s32.totalorder %s20, 0
    %p235 = por %p233, %p234
    %p236 = scmp.ne.s32.totalorder %s222, %s223
    %p237 = scmp.eq.s32.totalorder %s21, 1
    %p238 = por %p236, %p237
    %p240 = scmp.ne.s32.totalorder %s223, %s239
    %p241 = scmp.eq.s32.totalorder %s21, 0
    %p242 = por %p240, %p241
    %p243 = scmp.le.s32.totalorder 1, %s15
    %p244 = scmp.lt.s32.totalorder %s15, 3
    %p245 = pnand %p243, %p244
    %p246 = pneg %p245
    // Predicated region
    $region9: #{dense_block_forward.1} parent=5 // pred_check
      _
    $region10: #{dense_block_forward.1} parent=5 // pred_check_branch
      %248 = sbr.rel (%p245) target = $region12
    $region11: #{dense_block_forward.1} parent=5 // pred_region
      %s249 = ssub.s32 %s15, 1
      // Predicated region
      $region13: #{dense_block_forward.1} parent=11 // pred_check
        %p250 = pneg %p62
      $region14: #{dense_block_forward.1} parent=11 // pred_check_branch
        %252 = sbr.rel (%p250) target = $region16
      $region15: #{dense_block_forward.1} parent=11 // pred_region
        _
      $region16: #{dense_block_forward.1} parent=11 // pred_fallthru
        _
      // Predicated region
      $region17: #{dense_block_forward.1} parent=11 // pred_check
        %p253 = pneg %p83
      $region18: #{dense_block_forward.1} parent=11 // pred_check_branch
        %255 = sbr.rel (%p253) target = $region20
      $region19: #{dense_block_forward.1} parent=11 // pred_region
        _
      $region20: #{dense_block_forward.1} parent=11 // pred_fallthru
        _
      // Predicated region
      $region21: #{dense_block_forward.1} parent=11 // pred_check
        %p256 = pneg %p104
      $region22: #{dense_block_forward.1} parent=11 // pred_check_branch
        %258 = sbr.rel (%p256) target = $region24
      $region23: #{dense_block_forward.1} parent=11 // pred_region
        _
      $region24: #{dense_block_forward.1} parent=11 // pred_fallthru
        _
      // Predicated region
      $region25: #{dense_block_forward.1} parent=11 // pred_check
        %p259 = pneg %p125
      $region26: #{dense_block_forward.1} parent=11 // pred_check_branch
        %261 = sbr.rel (%p259) target = $region28
      $region27: #{dense_block_forward.1} parent=11 // pred_region
        _
      $region28: #{dense_block_forward.1} parent=11 // pred_fallthru
        _
      // Predicated region
      $region29: #{dense_block_forward.1} parent=11 // pred_check
        %p262 = pneg %p146
      $region30: #{dense_block_forward.1} parent=11 // pred_check_branch
        %264 = sbr.rel (%p262) target = $region32
      $region31: #{dense_block_forward.1} parent=11 // pred_region
        _
      $region32: #{dense_block_forward.1} parent=11 // pred_fallthru
        _
      // Predicated region
      $region33: #{dense_block_forward.1} parent=11 // pred_check
        %p265 = pneg %p167
      $region34: #{dense_block_forward.1} parent=11 // pred_check_branch
        %267 = sbr.rel (%p265) target = $region36
      $region35: #{dense_block_forward.1} parent=11 // pred_region
        _
      $region36: #{dense_block_forward.1} parent=11 // pred_fallthru
        _
      // Predicated region
      $region37: #{dense_block_forward.1} parent=11 // pred_check
        %p268 = pneg %p188
      $region38: #{dense_block_forward.1} parent=11 // pred_check_branch
        %270 = sbr.rel (%p268) target = $region40
      $region39: #{dense_block_forward.1} parent=11 // pred_region
        _
      $region40: #{dense_block_forward.1} parent=11 // pred_fallthru
        _
      // Predicated region
      $region41: #{dense_block_forward.1} parent=11 // pred_check
        %p271 = pneg %p209
      $region42: #{dense_block_forward.1} parent=11 // pred_check_branch
        %273 = sbr.rel (%p271) target = $region44
      $region43: #{dense_block_forward.1} parent=11 // pred_region
        _
      $region44: #{dense_block_forward.1} parent=11 // pred_fallthru
        _
    $region12: #{dense_block_forward.1} parent=5 // pred_fallthru
      _
    %p274 = scmp.lt.s32.totalorder %s15, 2
    // Predicated region
    $region45: #{dense_block_forward.1} parent=5 // pred_check
      %p275 = pneg %p274
    $region46: #{dense_block_forward.1} parent=5 // pred_check_branch
      %277 = sbr.rel (%p275) target = $region48
    $region47: #{dense_block_forward.1} parent=5 // pred_region
      // Predicated region
      $region49: #{dense_block_forward.1} parent=47 // pred_check
        %p278 = pneg %p35
      $region50: #{dense_block_forward.1} parent=47 // pred_check_branch
        %280 = sbr.rel (%p278) target = $region52
      $region51: #{dense_block_forward.1} parent=47 // pred_region
        %p281 = scmp.lt.s32.totalorder %s15, 1
        %s282 = scalar_select %p281, %s15, 1
        %s283 = smul.addr %s282, 2
        %s284 = smul.addr %s283, 8
        %s285 = scalar_lea.vmem %s0, %s284
      $region52: #{dense_block_forward.1} parent=47 // pred_fallthru
        _
    $region48: #{dense_block_forward.1} parent=5 // pred_fallthru
      _
    %p286 = scmp.le.s32.totalorder 1, %s15
    %p287 = scmp.lt.s32.totalorder %s15, 3
    %p288 = pnand %p286, %p287
    %p289 = pneg %p288
    // Predicated region
    $region53: #{dense_block_forward.1} parent=5 // pred_check
      _
    $region54: #{dense_block_forward.1} parent=5 // pred_check_branch
      %291 = sbr.rel (%p288) target = $region56
    $region55: #{dense_block_forward.1} parent=5 // pred_region
      %s292 = ssub.s32 %s15, 1
      %p293 = scmp.lt.s32.totalorder %s20, 1
      %s294 = scalar_select %p293, %s20, 1
      %s295 = smul.addr %s294, 2
      %s296 = smul.addr %s295, 8
      %s297 = scalar_lea.vmem %s0, %s296
      %p298 = pneg %p41
      %p299 = pneg %p38
      %p300 = pneg %p62
      %p301 = pneg %p59
      %p302 = pneg %p83
      %p303 = pneg %p80
      %p304 = pneg %p104
      %p305 = pneg %p101
      %p306 = pneg %p125
      %p307 = pneg %p122
      %p308 = pneg %p146
      %p309 = pneg %p143
      %p310 = pneg %p167
      %p311 = pneg %p164
      %p312 = pneg %p188
      %p313 = pneg %p185
      %p314 = pneg %p209
      %p315 = pneg %p206
      %p316 = pneg %p235
      %p317 = pneg %p232
      %p318 = scmp.lt.s32.totalorder %s20, 1
      %s319 = scalar_select %p318, %s20, 1
      %s320 = smul.addr %s319, 2
      %s321 = smul.addr %s320, 8
      %s322 = scalar_lea.vmem %s9, %s321
      %p323 = scmp.lt.s32.totalorder %s20, 1
      %s324 = scalar_select %p323, %s20, 1
      %s325 = smul.addr %s324, 2
      %s326 = smul.addr %s325, 8
      %s327 = scalar_lea.vmem %s0, %s326
      %p328 = scmp.lt.s32.totalorder %s20, 1
      %s329 = scalar_select %p328, %s20, 1
      %s330 = smul.addr %s329, 2
      %s331 = smul.addr %s330, 8
      %s332 = scalar_lea.vmem %s9, %s331
      %v333 = vld [vmem:[%s327] sm:$0xff]
      %v334 = vld [vmem:[%s327 + $0x8] sm:$0xff]
      %v335 = vld [vmem:[%s8] sm:$0xff]
      %v336 = vlaneseq
      %v337 = vand.u32 %v336, 127
      %v338 = vadd.s32 %v337, 128
      %vm339 = vcmp.lt.s32.totalorder %v337, 0
      %v340 = vsub.s32 0, %v337
      %v341 = vsel %vm339, %v340, %v337
      %v342 = vshrl.u32 %v341, 4
      %v343 = vand.u32 %v341, 15
      %v344 = vsub.s32 0, %v343
      %v345 = vsel %vm339, %v344, %v343
      %vm346 = vcmp.lt.s32.totalorder %v338, 0
      %v347 = vsub.s32 0, %v338
      %v348 = vsel %vm346, %v347, %v338
      %v349 = vshrl.u32 %v348, 4
      %v350 = vand.u32 %v348, 15
      %v351 = vsub.s32 0, %v350
      %v352 = vsel %vm346, %v351, %v350
      %vm353 = vcmp.ne.s32.totalorder %v345, 0
      %vm354 = vcmp.ne.s32.totalorder %v352, 0
      %vm355 = vcmp.lt.s32.totalorder %v345, 0
      %vm356 = vcmp.lt.s32.totalorder %v352, 0
      %vm357 = vmand %vm355, %vm353
      %vm358 = vmand %vm356, %vm354
      %v359 = vadd.s32 %v345, 16
      %v360 = vadd.s32 %v352, 16
      %v361 = vsel %vm357, %v359, %v345
      %v362 = vsel %vm358, %v360, %v352
      %vm363 = vcmp.eq.s32.totalorder %v361, 0
      %vm364 = vcmp.eq.s32.totalorder %v362, 0
      %vm365 = vcmp.eq.s32.totalorder %v361, 15
      %vm366 = vcmp.eq.s32.totalorder %v362, 15
      %367 = vrot.lane.b32.xlu0 %v333, 113
      %v368 = vpop.permute.xlu0 %367
      %369 = vrot.lane.b32.xlu0 %v334, 113
      %v370 = vpop.permute.xlu0 %369
      %vm371 = vcmp.lt.s32.totalorder %v337, 113
      %v372 = vsel %vm371, %v368, %v370
      %v373 = vsel %vm371, %v370, %v368
      %374 = vrot.lane.b32.xlu0 %v333, 1
      %v375 = vpop.permute.xlu0 %374
      %376 = vrot.lane.b32.xlu0 %v334, 1
      %v377 = vpop.permute.xlu0 %376
      %vm378 = vcmp.lt.s32.totalorder %v337, 1
      %v379 = vsel %vm378, %v375, %v377
      %v380 = vsel %vm378, %v377, %v375
      %v381 = vsel %vm363, 1, 0
      %v382 = vsel %vm364, 1, 0
      %vm383 = vcmp.eq.s32.totalorder %v381, 1
      %vm384 = vcmp.eq.s32.totalorder %v382, 1
      %v385 = vsel %vm383, %v372, %v380
      %v386 = vsel %vm384, %v373, %v379
      %387 = vrot.lane.b32.xlu0 %v333, 15
      %v388 = vpop.permute.xlu0 %387
      %389 = vrot.lane.b32.xlu0 %v334, 15
      %v390 = vpop.permute.xlu0 %389
      %vm391 = vcmp.lt.s32.totalorder %v337, 15
      %v392 = vsel %vm391, %v388, %v390
      %v393 = vsel %vm391, %v390, %v388
      %394 = vrot.lane.b32.xlu0 %v333, 127
      %v395 = vpop.permute.xlu0 %394
      %396 = vrot.lane.b32.xlu0 %v334, 127
      %v397 = vpop.permute.xlu0 %396
      %vm398 = vcmp.lt.s32.totalorder %v337, 127
      %v399 = vsel %vm398, %v395, %v397
      %v400 = vsel %vm398, %v397, %v395
      %v401 = vsel %vm365, 1, 0
      %v402 = vsel %vm366, 1, 0
      %vm403 = vcmp.eq.s32.totalorder %v401, 1
      %vm404 = vcmp.eq.s32.totalorder %v402, 1
      %v405 = vsel %vm403, %v393, %v399
      %v406 = vsel %vm404, %v392, %v400
      %407 = vrot.lane.b32.xlu0 %v385, 16
      %v408 = vpop.permute.xlu0 %407
      %409 = vrot.lane.b32.xlu0 %v386, 16
      %v410 = vpop.permute.xlu0 %409
      %vm411 = vcmp.lt.s32.totalorder %v337, 16
      %v412 = vsel %vm411, %v408, %v410
      %v413 = vsel %vm411, %v410, %v408
      %414 = vst [vmem:[#allocation2] sm:$0xff] %v413
      %415 = vst [vmem:[#allocation2 + $0x8] sm:$0xff] %v412
      %416 = vrot.lane.b32.xlu0 %v333, 16
      %v417 = vpop.permute.xlu0 %416
      %418 = vrot.lane.b32.xlu0 %v334, 16
      %v419 = vpop.permute.xlu0 %418
      %v420 = vsel %vm411, %v417, %v419
      %v421 = vsel %vm411, %v419, %v417
      %422 = vst [vmem:[#allocation2 + $0x10] sm:$0xff] %v421
      %423 = vst [vmem:[#allocation2 + $0x18] sm:$0xff] %v420
      %424 = vrot.lane.b32.xlu0 %v405, 16
      %v425 = vpop.permute.xlu0 %424
      %426 = vrot.lane.b32.xlu0 %v406, 16
      %v427 = vpop.permute.xlu0 %426
      %v428 = vsel %vm411, %v425, %v427
      %v429 = vsel %vm411, %v427, %v425
      %430 = vst [vmem:[#allocation2 + $0x20] sm:$0xff] %v429
      %431 = vst [vmem:[#allocation2 + $0x28] sm:$0xff] %v428
      %432 = vst [vmem:[#allocation2 + $0x30] sm:$0xff] %v385
      %433 = vst [vmem:[#allocation2 + $0x38] sm:$0xff] %v386
      %434 = vst [vmem:[#allocation2 + $0x40] sm:$0xff] %v333
      %435 = vst [vmem:[#allocation2 + $0x48] sm:$0xff] %v334
      %436 = vst [vmem:[#allocation2 + $0x50] sm:$0xff] %v405
      %437 = vst [vmem:[#allocation2 + $0x58] sm:$0xff] %v406
      %438 = vrot.lane.b32.xlu0 %v385, 112
      %v439 = vpop.permute.xlu0 %438
      %440 = vrot.lane.b32.xlu0 %v386, 112
      %v441 = vpop.permute.xlu0 %440
      %vm442 = vcmp.lt.s32.totalorder %v337, 112
      %v443 = vsel %vm442, %v439, %v441
      %v444 = vsel %vm442, %v441, %v439
      %445 = vst [vmem:[#allocation2 + $0x60] sm:$0xff] %v443
      %446 = vst [vmem:[#allocation2 + $0x68] sm:$0xff] %v444
      %447 = vrot.lane.b32.xlu0 %v333, 112
      %v448 = vpop.permute.xlu0 %447
      %449 = vrot.lane.b32.xlu0 %v334, 112
      %v450 = vpop.permute.xlu0 %449
      %v451 = vsel %vm442, %v448, %v450
      %v452 = vsel %vm442, %v450, %v448
      %453 = vst [vmem:[#allocation2 + $0x70] sm:$0xff] %v451
      %454 = vst [vmem:[#allocation2 + $0x78] sm:$0xff] %v452
      %455 = vrot.lane.b32.xlu0 %v405, 112
      %v456 = vpop.permute.xlu0 %455
      %457 = vrot.lane.b32.xlu0 %v406, 112
      %v458 = vpop.permute.xlu0 %457
      %v459 = vsel %vm442, %v456, %v458
      %v460 = vsel %vm442, %v458, %v456
      %461 = vst [vmem:[#allocation2 + $0x80] sm:$0xff] %v459
      %462 = vst [vmem:[#allocation2 + $0x88] sm:$0xff] %v460
      %v463 = vld [vmem:[%s1] sm:$0xff]
      %v464 = vld [vmem:[#allocation2] sm:$0xff]
      %v465 = vld [vmem:[#allocation2 + $0x8] sm:$0xff]
      %v466 = vld [vmem:[#allocation2 + $0x10] sm:$0xff]
      %v467 = vld [vmem:[#allocation2 + $0x18] sm:$0xff]
      %v468 = vld [vmem:[#allocation2 + $0x20] sm:$0xff]
      %v469 = vld [vmem:[#allocation2 + $0x28] sm:$0xff]
      %v470 = vld [vmem:[#allocation2 + $0x30] sm:$0xff]
      %v471 = vld [vmem:[#allocation2 + $0x38] sm:$0xff]
      %v472 = vld [vmem:[#allocation2 + $0x40] sm:$0xff]
      %v473 = vld [vmem:[#allocation2 + $0x48] sm:$0xff]
      %v474 = vld [vmem:[#allocation2 + $0x50] sm:$0xff]
      %v475 = vld [vmem:[#allocation2 + $0x58] sm:$0xff]
      %v476 = vld [vmem:[#allocation2 + $0x60] sm:$0xff]
      %v477 = vld [vmem:[#allocation2 + $0x68] sm:$0xff]
      %v478 = vld [vmem:[#allocation2 + $0x70] sm:$0xff]
      %v479 = vld [vmem:[#allocation2 + $0x78] sm:$0xff]
      %v480 = vld [vmem:[#allocation2 + $0x80] sm:$0xff]
      %v481 = vld [vmem:[#allocation2 + $0x88] sm:$0xff]
      %483 = vset.pattern.permute.xlu0 0
      %484 = vperm.xlu0 %483, %v335
      %v485 = vpop.permute.xlu0 %484
      %vm487 = vcmask 588800
      %v489 = vsel %vm487, %v463, 0
      %491 = vmatpush.msra.mxu0 0.0
      %492 = vmatpush.msra.mxu0 0.0
      %493 = vmatpush.msra.mxu0 0.0
      %494 = vmatpush.msra.mxu0 0.0
      %495 = vmatpush.msra.mxu0 0.0
      %496 = vmatpush.msra.mxu0 0.0
      %497 = vmatpush.msra.mxu0 0.0
      %498 = vmatpush.msra.mxu0 %v480
      %499 = vmatpush.msra.mxu0 %v478
      %500 = vmatpush.msra.mxu0 %v476
      %501 = vmatpush.msra.mxu0 %v474
      %502 = vmatpush.msra.mxu0 %v472
      %503 = vmatpush.msra.mxu0 %v470
      %504 = vmatpush.msra.mxu0 %v468
      %505 = vmatpush.msra.mxu0 %v466
      %506 = vmatpush.msra.mxu0 %v464
      %507 = vmatmul.f32.gmra.mxu0 %v489
      %v508 = vpop.f32.mrf.mxu0
      %v509 = vadd.f32 %v485, %v508
      %510 = vdwg.mxu0
      %511 = vmatpush.msra.mxu0 0.0
      %512 = vmatpush.msra.mxu0 0.0
      %513 = vmatpush.msra.mxu0 0.0
      %514 = vmatpush.msra.mxu0 0.0
      %515 = vmatpush.msra.mxu0 0.0
      %516 = vmatpush.msra.mxu0 0.0
      %517 = vmatpush.msra.mxu0 0.0
      %518 = vmatpush.msra.mxu0 %v481
      %519 = vmatpush.msra.mxu0 %v479
      %520 = vmatpush.msra.mxu0 %v477
      %521 = vmatpush.msra.mxu0 %v475
      %522 = vmatpush.msra.mxu0 %v473
      %523 = vmatpush.msra.mxu0 %v471
      %524 = vmatpush.msra.mxu0 %v469
      %525 = vmatpush.msra.mxu0 %v467
      %526 = vmatpush.msra.mxu0 %v465
      %527 = vmatmul.f32.gmra.mxu0 %v489
      %v528 = vpop.f32.mrf.mxu0
      %v529 = vadd.f32 %v485, %v528
      %530 = vdwg.mxu0
      %vm531 = vcmp.ge.f32.partialorder %v509, 0.0
      %vm532 = vcmp.ge.f32.partialorder %v529, 0.0
      %v533 = vmul.f32 %v509, 0.01
      %v534 = vmul.f32 %v529, 0.01
      %v535 = vsel %vm531, %v509, %v533
      %v536 = vsel %vm532, %v529, %v534
      %537 = vrot.lane.b32.xlu0 %v535, 113
      %v538 = vpop.permute.xlu0 %537
      %539 = vrot.lane.b32.xlu0 %v536, 113
      %v540 = vpop.permute.xlu0 %539
      %v541 = vsel %vm371, %v538, %v540
      %v542 = vsel %vm371, %v540, %v538
      %543 = vrot.lane.b32.xlu0 %v535, 1
      %v544 = vpop.permute.xlu0 %543
      %545 = vrot.lane.b32.xlu0 %v536, 1
      %v546 = vpop.permute.xlu0 %545
      %v547 = vsel %vm378, %v544, %v546
      %v548 = vsel %vm378, %v546, %v544
      %v549 = vsel %vm383, %v541, %v548
      %v550 = vsel %vm384, %v542, %v547
      %551 = vrot.lane.b32.xlu0 %v535, 15
      %v552 = vpop.permute.xlu0 %551
      %553 = vrot.lane.b32.xlu0 %v536, 15
      %v554 = vpop.permute.xlu0 %553
      %v555 = vsel %vm391, %v552, %v554
      %v556 = vsel %vm391, %v554, %v552
      %557 = vrot.lane.b32.xlu0 %v535, 127
      %v558 = vpop.permute.xlu0 %557
      %559 = vrot.lane.b32.xlu0 %v536, 127
      %v560 = vpop.permute.xlu0 %559
      %v561 = vsel %vm398, %v558, %v560
      %v562 = vsel %vm398, %v560, %v558
      %v563 = vsel %vm403, %v556, %v561
      %v564 = vsel %vm404, %v555, %v562
      %565 = vrot.lane.b32.xlu0 %v549, 16
      %v566 = vpop.permute.xlu0 %565
      %567 = vrot.lane.b32.xlu0 %v550, 16
      %v568 = vpop.permute.xlu0 %567
      %v569 = vsel %vm411, %v566, %v568
      %v570 = vsel %vm411, %v568, %v566
      %571 = vst [vmem:[#allocation3] sm:$0xff] %v570
      %572 = vst [vmem:[#allocation3 + $0x8] sm:$0xff] %v569
      %573 = vrot.lane.b32.xlu0 %v535, 16
      %v574 = vpop.permute.xlu0 %573
      %575 = vrot.lane.b32.xlu0 %v536, 16
      %v576 = vpop.permute.xlu0 %575
      %v577 = vsel %vm411, %v574, %v576
      %v578 = vsel %vm411, %v576, %v574
      %579 = vst [vmem:[#allocation3 + $0x10] sm:$0xff] %v578
      %580 = vst [vmem:[#allocation3 + $0x18] sm:$0xff] %v577
      %581 = vrot.lane.b32.xlu0 %v563, 16
      %v582 = vpop.permute.xlu0 %581
      %583 = vrot.lane.b32.xlu0 %v564, 16
      %v584 = vpop.permute.xlu0 %583
      %v585 = vsel %vm411, %v582, %v584
      %v586 = vsel %vm411, %v584, %v582
      %587 = vst [vmem:[#allocation3 + $0x20] sm:$0xff] %v586
      %588 = vst [vmem:[#allocation3 + $0x28] sm:$0xff] %v585
      %589 = vst [vmem:[#allocation3 + $0x30] sm:$0xff] %v549
      %590 = vst [vmem:[#allocation3 + $0x38] sm:$0xff] %v550
      %591 = vst [vmem:[#allocation3 + $0x40] sm:$0xff] %v535
      %592 = vst [vmem:[#allocation3 + $0x48] sm:$0xff] %v536
      %593 = vst [vmem:[#allocation3 + $0x50] sm:$0xff] %v563
      %594 = vst [vmem:[#allocation3 + $0x58] sm:$0xff] %v564
      %595 = vrot.lane.b32.xlu0 %v549, 112
      %v596 = vpop.permute.xlu0 %595
      %597 = vrot.lane.b32.xlu0 %v550, 112
      %v598 = vpop.permute.xlu0 %597
      %v599 = vsel %vm442, %v596, %v598
      %v600 = vsel %vm442, %v598, %v596
      %601 = vst [vmem:[#allocation3 + $0x60] sm:$0xff] %v599
      %602 = vst [vmem:[#allocation3 + $0x68] sm:$0xff] %v600
      %603 = vrot.lane.b32.xlu0 %v535, 112
      %v604 = vpop.permute.xlu0 %603
      %605 = vrot.lane.b32.xlu0 %v536, 112
      %v606 = vpop.permute.xlu0 %605
      %v607 = vsel %vm442, %v604, %v606
      %v608 = vsel %vm442, %v606, %v604
      %609 = vst [vmem:[#allocation3 + $0x70] sm:$0xff] %v607
      %610 = vst [vmem:[#allocation3 + $0x78] sm:$0xff] %v608
      %611 = vrot.lane.b32.xlu0 %v563, 112
      %v612 = vpop.permute.xlu0 %611
      %613 = vrot.lane.b32.xlu0 %v564, 112
      %v614 = vpop.permute.xlu0 %613
      %v615 = vsel %vm442, %v612, %v614
      %v616 = vsel %vm442, %v614, %v612
      %617 = vst [vmem:[#allocation3 + $0x80] sm:$0xff] %v615
      %618 = vst [vmem:[#allocation3 + $0x88] sm:$0xff] %v616
      %v619 = vld [vmem:[%s6] sm:$0xff]
      %v620 = vld [vmem:[#allocation3] sm:$0xff]
      %v621 = vld [vmem:[#allocation3 + $0x8] sm:$0xff]
      %v622 = vld [vmem:[#allocation3 + $0x10] sm:$0xff]
      %v623 = vld [vmem:[#allocation3 + $0x18] sm:$0xff]
      %v624 = vld [vmem:[#allocation3 + $0x20] sm:$0xff]
      %v625 = vld [vmem:[#allocation3 + $0x28] sm:$0xff]
      %v626 = vld [vmem:[#allocation3 + $0x30] sm:$0xff]
      %v627 = vld [vmem:[#allocation3 + $0x38] sm:$0xff]
      %v628 = vld [vmem:[#allocation3 + $0x40] sm:$0xff]
      %v629 = vld [vmem:[#allocation3 + $0x48] sm:$0xff]
      %v630 = vld [vmem:[#allocation3 + $0x50] sm:$0xff]
      %v631 = vld [vmem:[#allocation3 + $0x58] sm:$0xff]
      %v632 = vld [vmem:[#allocation3 + $0x60] sm:$0xff]
      %v633 = vld [vmem:[#allocation3 + $0x68] sm:$0xff]
      %v634 = vld [vmem:[#allocation3 + $0x70] sm:$0xff]
      %v635 = vld [vmem:[#allocation3 + $0x78] sm:$0xff]
      %v636 = vld [vmem:[#allocation3 + $0x80] sm:$0xff]
      %v637 = vld [vmem:[#allocation3 + $0x88] sm:$0xff]
      %638 = vset.pattern.permute.xlu0 1
      %639 = vperm.xlu0 %638, %v335
      %v640 = vpop.permute.xlu0 %639
      %v643 = vsel %vm487, %v619, 0
      %645 = vmatpush.msra.mxu0 0.0
      %646 = vmatpush.msra.mxu0 0.0
      %647 = vmatpush.msra.mxu0 0.0
      %648 = vmatpush.msra.mxu0 0.0
      %649 = vmatpush.msra.mxu0 0.0
      %650 = vmatpush.msra.mxu0 0.0
      %651 = vmatpush.msra.mxu0 0.0
      %652 = vmatpush.msra.mxu0 %v636
      %653 = vmatpush.msra.mxu0 %v634
      %654 = vmatpush.msra.mxu0 %v632
      %655 = vmatpush.msra.mxu0 %v630
      %656 = vmatpush.msra.mxu0 %v628
      %657 = vmatpush.msra.mxu0 %v626
      %658 = vmatpush.msra.mxu0 %v624
      %659 = vmatpush.msra.mxu0 %v622
      %660 = vmatpush.msra.mxu0 %v620
      %661 = vmatmul.f32.gmra.mxu0 %v643
      %v662 = vpop.f32.mrf.mxu0
      %v663 = vadd.f32 %v640, %v662
      %664 = vdwg.mxu0
      %665 = vmatpush.msra.mxu0 0.0
      %666 = vmatpush.msra.mxu0 0.0
      %667 = vmatpush.msra.mxu0 0.0
      %668 = vmatpush.msra.mxu0 0.0
      %669 = vmatpush.msra.mxu0 0.0
      %670 = vmatpush.msra.mxu0 0.0
      %671 = vmatpush.msra.mxu0 0.0
      %672 = vmatpush.msra.mxu0 %v637
      %673 = vmatpush.msra.mxu0 %v635
      %674 = vmatpush.msra.mxu0 %v633
      %675 = vmatpush.msra.mxu0 %v631
      %676 = vmatpush.msra.mxu0 %v629
      %677 = vmatpush.msra.mxu0 %v627
      %678 = vmatpush.msra.mxu0 %v625
      %679 = vmatpush.msra.mxu0 %v623
      %680 = vmatpush.msra.mxu0 %v621
      %681 = vmatmul.f32.gmra.mxu0 %v643
      %v682 = vpop.f32.mrf.mxu0
      %v683 = vadd.f32 %v640, %v682
      %684 = vdwg.mxu0
      %685 = vrot.lane.b32.xlu0 %v663, 113
      %v686 = vpop.permute.xlu0 %685
      %687 = vrot.lane.b32.xlu0 %v683, 113
      %v688 = vpop.permute.xlu0 %687
      %v689 = vsel %vm371, %v686, %v688
      %v690 = vsel %vm371, %v688, %v686
      %691 = vrot.lane.b32.xlu0 %v663, 1
      %v692 = vpop.permute.xlu0 %691
      %693 = vrot.lane.b32.xlu0 %v683, 1
      %v694 = vpop.permute.xlu0 %693
      %v695 = vsel %vm378, %v692, %v694
      %v696 = vsel %vm378, %v694, %v692
      %v697 = vsel %vm383, %v689, %v696
      %v698 = vsel %vm384, %v690, %v695
      %699 = vrot.lane.b32.xlu0 %v663, 15
      %v700 = vpop.permute.xlu0 %699
      %701 = vrot.lane.b32.xlu0 %v683, 15
      %v702 = vpop.permute.xlu0 %701
      %v703 = vsel %vm391, %v700, %v702
      %v704 = vsel %vm391, %v702, %v700
      %705 = vrot.lane.b32.xlu0 %v663, 127
      %v706 = vpop.permute.xlu0 %705
      %707 = vrot.lane.b32.xlu0 %v683, 127
      %v708 = vpop.permute.xlu0 %707
      %v709 = vsel %vm398, %v706, %v708
      %v710 = vsel %vm398, %v708, %v706
      %v711 = vsel %vm403, %v704, %v709
      %v712 = vsel %vm404, %v703, %v710
      %713 = vrot.lane.b32.xlu0 %v697, 16
      %v714 = vpop.permute.xlu0 %713
      %715 = vrot.lane.b32.xlu0 %v698, 16
      %v716 = vpop.permute.xlu0 %715
      %v717 = vsel %vm411, %v714, %v716
      %v718 = vsel %vm411, %v716, %v714
      %719 = vst [vmem:[#allocation2 + $0x90] sm:$0xff] %v718
      %720 = vst [vmem:[#allocation2 + $0x98] sm:$0xff] %v717
      %721 = vrot.lane.b32.xlu0 %v663, 16
      %v722 = vpop.permute.xlu0 %721
      %723 = vrot.lane.b32.xlu0 %v683, 16
      %v724 = vpop.permute.xlu0 %723
      %v725 = vsel %vm411, %v722, %v724
      %v726 = vsel %vm411, %v724, %v722
      %727 = vst [vmem:[#allocation2 + $0xa0] sm:$0xff] %v726
      %728 = vst [vmem:[#allocation2 + $0xa8] sm:$0xff] %v725
      %729 = vrot.lane.b32.xlu0 %v711, 16
      %v730 = vpop.permute.xlu0 %729
      %731 = vrot.lane.b32.xlu0 %v712, 16
      %v732 = vpop.permute.xlu0 %731
      %v733 = vsel %vm411, %v730, %v732
      %v734 = vsel %vm411, %v732, %v730
      %735 = vst [vmem:[#allocation2 + $0xb0] sm:$0xff] %v734
      %736 = vst [vmem:[#allocation2 + $0xb8] sm:$0xff] %v733
      %737 = vst [vmem:[#allocation2 + $0xc0] sm:$0xff] %v697
      %738 = vst [vmem:[#allocation2 + $0xc8] sm:$0xff] %v698
      %739 = vst [vmem:[#allocation2 + $0xd0] sm:$0xff] %v663
      %740 = vst [vmem:[#allocation2 + $0xd8] sm:$0xff] %v683
      %741 = vst [vmem:[#allocation2 + $0xe0] sm:$0xff] %v711
      %742 = vst [vmem:[#allocation2 + $0xe8] sm:$0xff] %v712
      %743 = vrot.lane.b32.xlu0 %v697, 112
      %v744 = vpop.permute.xlu0 %743
      %745 = vrot.lane.b32.xlu0 %v698, 112
      %v746 = vpop.permute.xlu0 %745
      %v747 = vsel %vm442, %v744, %v746
      %v748 = vsel %vm442, %v746, %v744
      %749 = vst [vmem:[#allocation2 + $0xf0] sm:$0xff] %v747
      %750 = vst [vmem:[#allocation2 + $0xf8] sm:$0xff] %v748
      %751 = vrot.lane.b32.xlu0 %v663, 112
      %v752 = vpop.permute.xlu0 %751
      %753 = vrot.lane.b32.xlu0 %v683, 112
      %v754 = vpop.permute.xlu0 %753
      %v755 = vsel %vm442, %v752, %v754
      %v756 = vsel %vm442, %v754, %v752
      %757 = vst [vmem:[#allocation2 + $0x100] sm:$0xff] %v755
      %758 = vst [vmem:[#allocation2 + $0x108] sm:$0xff] %v756
      %759 = vrot.lane.b32.xlu0 %v711, 112
      %v760 = vpop.permute.xlu0 %759
      %761 = vrot.lane.b32.xlu0 %v712, 112
      %v762 = vpop.permute.xlu0 %761
      %v763 = vsel %vm442, %v760, %v762
      %v764 = vsel %vm442, %v762, %v760
      %765 = vst [vmem:[#allocation2 + $0x110] sm:$0xff] %v763
      %766 = vst [vmem:[#allocation2 + $0x118] sm:$0xff] %v764
      %v767 = vld [vmem:[%s2] sm:$0xff]
      %v768 = vld [vmem:[%s2 + $0x8] sm:$0xff]
      %v769 = vld [vmem:[#allocation2] sm:$0xff]
      %v770 = vld [vmem:[#allocation2 + $0x8] sm:$0xff]
      %v771 = vld [vmem:[#allocation2 + $0x10] sm:$0xff]
      %v772 = vld [vmem:[#allocation2 + $0x18] sm:$0xff]
      %v773 = vld [vmem:[#allocation2 + $0x20] sm:$0xff]
      %v774 = vld [vmem:[#allocation2 + $0x28] sm:$0xff]
      %v775 = vld [vmem:[#allocation2 + $0x30] sm:$0xff]
      %v776 = vld [vmem:[#allocation2 + $0x38] sm:$0xff]
      %v777 = vld [vmem:[#allocation2 + $0x40] sm:$0xff]
      %v778 = vld [vmem:[#allocation2 + $0x48] sm:$0xff]
      %v779 = vld [vmem:[#allocation2 + $0x50] sm:$0xff]
      %v780 = vld [vmem:[#allocation2 + $0x58] sm:$0xff]
      %v781 = vld [vmem:[#allocation2 + $0x60] sm:$0xff]
      %v782 = vld [vmem:[#allocation2 + $0x68] sm:$0xff]
      %v783 = vld [vmem:[#allocation2 + $0x70] sm:$0xff]
      %v784 = vld [vmem:[#allocation2 + $0x78] sm:$0xff]
      %v785 = vld [vmem:[#allocation2 + $0x80] sm:$0xff]
      %v786 = vld [vmem:[#allocation2 + $0x88] sm:$0xff]
      %v787 = vld [vmem:[#allocation2 + $0x90] sm:$0xff]
      %v788 = vld [vmem:[#allocation2 + $0x98] sm:$0xff]
      %v789 = vld [vmem:[#allocation2 + $0xa0] sm:$0xff]
      %v790 = vld [vmem:[#allocation2 + $0xa8] sm:$0xff]
      %v791 = vld [vmem:[#allocation2 + $0xb0] sm:$0xff]
      %v792 = vld [vmem:[#allocation2 + $0xb8] sm:$0xff]
      %v793 = vld [vmem:[#allocation2 + $0xc0] sm:$0xff]
      %v794 = vld [vmem:[#allocation2 + $0xc8] sm:$0xff]
      %v795 = vld [vmem:[#allocation2 + $0xd0] sm:$0xff]
      %v796 = vld [vmem:[#allocation2 + $0xd8] sm:$0xff]
      %v797 = vld [vmem:[#allocation2 + $0xe0] sm:$0xff]
      %v798 = vld [vmem:[#allocation2 + $0xe8] sm:$0xff]
      %v799 = vld [vmem:[#allocation2 + $0xf0] sm:$0xff]
      %v800 = vld [vmem:[#allocation2 + $0xf8] sm:$0xff]
      %v801 = vld [vmem:[#allocation2 + $0x100] sm:$0xff]
      %v802 = vld [vmem:[#allocation2 + $0x108] sm:$0xff]
      %v803 = vld [vmem:[#allocation2 + $0x110] sm:$0xff]
      %v804 = vld [vmem:[#allocation2 + $0x118] sm:$0xff]
      %805 = vset.pattern.permute.xlu0 2
      %806 = vperm.xlu0 %805, %v335
      %v807 = vpop.permute.xlu0 %806
      %vm809 = vcmask 130048
      %v811 = vsel %vm809, %v768, 0
      %813 = vmatpush.msra.mxu0 %v799
      %814 = vmatpush.msra.mxu0 %v797
      %815 = vmatpush.msra.mxu0 %v795
      %816 = vmatpush.msra.mxu0 %v793
      %817 = vmatpush.msra.mxu0 %v791
      %818 = vmatpush.msra.mxu0 %v789
      %819 = vmatpush.msra.mxu0 %v787
      %820 = vmatpush.msra.mxu0 %v785
      %821 = vmatpush.msra.mxu0 %v783
      %822 = vmatpush.msra.mxu0 %v781
      %823 = vmatpush.msra.mxu0 %v779
      %824 = vmatpush.msra.mxu0 %v777
      %825 = vmatpush.msra.mxu0 %v775
      %826 = vmatpush.msra.mxu0 %v773
      %827 = vmatpush.msra.mxu0 %v771
      %828 = vmatpush.msra.mxu0 %v769
      %829 = vmatmul.f32.gmra.mxu0 %v767
      %v830 = vpop.f32.mrf.mxu0
      %v831 = vadd.f32 %v807, %v830
      %832 = vdwg.mxu0
      %833 = vmatpush.msra.mxu0 0.0
      %834 = vmatpush.msra.mxu0 0.0
      %835 = vmatpush.msra.mxu0 0.0
      %836 = vmatpush.msra.mxu0 0.0
      %837 = vmatpush.msra.mxu0 0.0
      %838 = vmatpush.msra.mxu0 0.0
      %839 = vmatpush.msra.mxu0 0.0
      %840 = vmatpush.msra.mxu0 0.0
      %841 = vmatpush.msra.mxu0 0.0
      %842 = vmatpush.msra.mxu0 0.0
      %843 = vmatpush.msra.mxu0 0.0
      %844 = vmatpush.msra.mxu0 0.0
      %845 = vmatpush.msra.mxu0 0.0
      %846 = vmatpush.msra.mxu0 0.0
      %847 = vmatpush.msra.mxu0 %v803
      %848 = vmatpush.msra.mxu0 %v801
      %849 = vmatmul.f32.gmra.mxu0 %v811
      %v850 = vpop.f32.mrf.mxu0
      %v851 = vadd.f32 %v831, %v850
      %852 = vdwg.mxu0
      %853 = vmatpush.msra.mxu0 %v800
      %854 = vmatpush.msra.mxu0 %v798
      %855 = vmatpush.msra.mxu0 %v796
      %856 = vmatpush.msra.mxu0 %v794
      %857 = vmatpush.msra.mxu0 %v792
      %858 = vmatpush.msra.mxu0 %v790
      %859 = vmatpush.msra.mxu0 %v788
      %860 = vmatpush.msra.mxu0 %v786
      %861 = vmatpush.msra.mxu0 %v784
      %862 = vmatpush.msra.mxu0 %v782
      %863 = vmatpush.msra.mxu0 %v780
      %864 = vmatpush.msra.mxu0 %v778
      %865 = vmatpush.msra.mxu0 %v776
      %866 = vmatpush.msra.mxu0 %v774
      %867 = vmatpush.msra.mxu0 %v772
      %868 = vmatpush.msra.mxu0 %v770
      %869 = vmatmul.f32.gmra.mxu0 %v767
      %v870 = vpop.f32.mrf.mxu0
      %v871 = vadd.f32 %v807, %v870
      %872 = vdwg.mxu0
      %873 = vmatpush.msra.mxu0 0.0
      %874 = vmatpush.msra.mxu0 0.0
      %875 = vmatpush.msra.mxu0 0.0
      %876 = vmatpush.msra.mxu0 0.0
      %877 = vmatpush.msra.mxu0 0.0
      %878 = vmatpush.msra.mxu0 0.0
      %879 = vmatpush.msra.mxu0 0.0
      %880 = vmatpush.msra.mxu0 0.0
      %881 = vmatpush.msra.mxu0 0.0
      %882 = vmatpush.msra.mxu0 0.0
      %883 = vmatpush.msra.mxu0 0.0
      %884 = vmatpush.msra.mxu0 0.0
      %885 = vmatpush.msra.mxu0 0.0
      %886 = vmatpush.msra.mxu0 0.0
      %887 = vmatpush.msra.mxu0 %v804
      %888 = vmatpush.msra.mxu0 %v802
      %889 = vmatmul.f32.gmra.mxu0 %v811
      %v890 = vpop.f32.mrf.mxu0
      %v891 = vadd.f32 %v871, %v890
      %892 = vdwg.mxu0
      %vm893 = vcmp.ge.f32.partialorder %v851, 0.0
      %vm894 = vcmp.ge.f32.partialorder %v891, 0.0
      %v895 = vmul.f32 %v851, 0.01
      %v896 = vmul.f32 %v891, 0.01
      %v897 = vsel %vm893, %v851, %v895
      %v898 = vsel %vm894, %v891, %v896
      %899 = vrot.lane.b32.xlu0 %v897, 113
      %v900 = vpop.permute.xlu0 %899
      %901 = vrot.lane.b32.xlu0 %v898, 113
      %v902 = vpop.permute.xlu0 %901
      %v903 = vsel %vm371, %v900, %v902
      %v904 = vsel %vm371, %v902, %v900
      %905 = vrot.lane.b32.xlu0 %v897, 1
      %v906 = vpop.permute.xlu0 %905
      %907 = vrot.lane.b32.xlu0 %v898, 1
      %v908 = vpop.permute.xlu0 %907
      %v909 = vsel %vm378, %v906, %v908
      %v910 = vsel %vm378, %v908, %v906
      %v911 = vsel %vm383, %v903, %v910
      %v912 = vsel %vm384, %v904, %v909
      %913 = vrot.lane.b32.xlu0 %v897, 15
      %v914 = vpop.permute.xlu0 %913
      %915 = vrot.lane.b32.xlu0 %v898, 15
      %v916 = vpop.permute.xlu0 %915
      %v917 = vsel %vm391, %v914, %v916
      %v918 = vsel %vm391, %v916, %v914
      %919 = vrot.lane.b32.xlu0 %v897, 127
      %v920 = vpop.permute.xlu0 %919
      %921 = vrot.lane.b32.xlu0 %v898, 127
      %v922 = vpop.permute.xlu0 %921
      %v923 = vsel %vm398, %v920, %v922
      %v924 = vsel %vm398, %v922, %v920
      %v925 = vsel %vm403, %v918, %v923
      %v926 = vsel %vm404, %v917, %v924
      %927 = vrot.lane.b32.xlu0 %v911, 16
      %v928 = vpop.permute.xlu0 %927
      %929 = vrot.lane.b32.xlu0 %v912, 16
      %v930 = vpop.permute.xlu0 %929
      %v931 = vsel %vm411, %v928, %v930
      %v932 = vsel %vm411, %v930, %v928
      %933 = vst [vmem:[#allocation3] sm:$0xff] %v932
      %934 = vst [vmem:[#allocation3 + $0x8] sm:$0xff] %v931
      %935 = vrot.lane.b32.xlu0 %v897, 16
      %v936 = vpop.permute.xlu0 %935
      %937 = vrot.lane.b32.xlu0 %v898, 16
      %v938 = vpop.permute.xlu0 %937
      %v939 = vsel %vm411, %v936, %v938
      %v940 = vsel %vm411, %v938, %v936
      %941 = vst [vmem:[#allocation3 + $0x10] sm:$0xff] %v940
      %942 = vst [vmem:[#allocation3 + $0x18] sm:$0xff] %v939
      %943 = vrot.lane.b32.xlu0 %v925, 16
      %v944 = vpop.permute.xlu0 %943
      %945 = vrot.lane.b32.xlu0 %v926, 16
      %v946 = vpop.permute.xlu0 %945
      %v947 = vsel %vm411, %v944, %v946
      %v948 = vsel %vm411, %v946, %v944
      %949 = vst [vmem:[#allocation3 + $0x20] sm:$0xff] %v948
      %950 = vst [vmem:[#allocation3 + $0x28] sm:$0xff] %v947
      %951 = vst [vmem:[#allocation3 + $0x30] sm:$0xff] %v911
      %952 = vst [vmem:[#allocation3 + $0x38] sm:$0xff] %v912
      %953 = vst [vmem:[#allocation3 + $0x40] sm:$0xff] %v897
      %954 = vst [vmem:[#allocation3 + $0x48] sm:$0xff] %v898
      %955 = vst [vmem:[#allocation3 + $0x50] sm:$0xff] %v925
      %956 = vst [vmem:[#allocation3 + $0x58] sm:$0xff] %v926
      %957 = vrot.lane.b32.xlu0 %v911, 112
      %v958 = vpop.permute.xlu0 %957
      %959 = vrot.lane.b32.xlu0 %v912, 112
      %v960 = vpop.permute.xlu0 %959
      %v961 = vsel %vm442, %v958, %v960
      %v962 = vsel %vm442, %v960, %v958
      %963 = vst [vmem:[#allocation3 + $0x60] sm:$0xff] %v961
      %964 = vst [vmem:[#allocation3 + $0x68] sm:$0xff] %v962
      %965 = vrot.lane.b32.xlu0 %v897, 112
      %v966 = vpop.permute.xlu0 %965
      %967 = vrot.lane.b32.xlu0 %v898, 112
      %v968 = vpop.permute.xlu0 %967
      %v969 = vsel %vm442, %v966, %v968
      %v970 = vsel %vm442, %v968, %v966
      %971 = vst [vmem:[#allocation3 + $0x70] sm:$0xff] %v969
      %972 = vst [vmem:[#allocation3 + $0x78] sm:$0xff] %v970
      %973 = vrot.lane.b32.xlu0 %v925, 112
      %v974 = vpop.permute.xlu0 %973
      %975 = vrot.lane.b32.xlu0 %v926, 112
      %v976 = vpop.permute.xlu0 %975
      %v977 = vsel %vm442, %v974, %v976
      %v978 = vsel %vm442, %v976, %v974
      %979 = vst [vmem:[#allocation3 + $0x80] sm:$0xff] %v977
      %980 = vst [vmem:[#allocation3 + $0x88] sm:$0xff] %v978
      %s981 = scalar_lea.vmem %s6, 8
      %v982 = vld [vmem:[%s981] sm:$0xff]
      %v983 = vld [vmem:[#allocation3] sm:$0xff]
      %v984 = vld [vmem:[#allocation3 + $0x8] sm:$0xff]
      %v985 = vld [vmem:[#allocation3 + $0x10] sm:$0xff]
      %v986 = vld [vmem:[#allocation3 + $0x18] sm:$0xff]
      %v987 = vld [vmem:[#allocation3 + $0x20] sm:$0xff]
      %v988 = vld [vmem:[#allocation3 + $0x28] sm:$0xff]
      %v989 = vld [vmem:[#allocation3 + $0x30] sm:$0xff]
      %v990 = vld [vmem:[#allocation3 + $0x38] sm:$0xff]
      %v991 = vld [vmem:[#allocation3 + $0x40] sm:$0xff]
      %v992 = vld [vmem:[#allocation3 + $0x48] sm:$0xff]
      %v993 = vld [vmem:[#allocation3 + $0x50] sm:$0xff]
      %v994 = vld [vmem:[#allocation3 + $0x58] sm:$0xff]
      %v995 = vld [vmem:[#allocation3 + $0x60] sm:$0xff]
      %v996 = vld [vmem:[#allocation3 + $0x68] sm:$0xff]
      %v997 = vld [vmem:[#allocation3 + $0x70] sm:$0xff]
      %v998 = vld [vmem:[#allocation3 + $0x78] sm:$0xff]
      %v999 = vld [vmem:[#allocation3 + $0x80] sm:$0xff]
      %v1000 = vld [vmem:[#allocation3 + $0x88] sm:$0xff]
      %1001 = vset.pattern.permute.xlu0 3
      %1002 = vperm.xlu0 %1001, %v335
      %v1003 = vpop.permute.xlu0 %1002
      %v1006 = vsel %vm487, %v982, 0
      %1008 = vmatpush.msra.mxu0 0.0
      %1009 = vmatpush.msra.mxu0 0.0
      %1010 = vmatpush.msra.mxu0 0.0
      %1011 = vmatpush.msra.mxu0 0.0
      %1012 = vmatpush.msra.mxu0 0.0
      %1013 = vmatpush.msra.mxu0 0.0
      %1014 = vmatpush.msra.mxu0 0.0
      %1015 = vmatpush.msra.mxu0 %v999
      %1016 = vmatpush.msra.mxu0 %v997
      %1017 = vmatpush.msra.mxu0 %v995
      %1018 = vmatpush.msra.mxu0 %v993
      %1019 = vmatpush.msra.mxu0 %v991
      %1020 = vmatpush.msra.mxu0 %v989
      %1021 = vmatpush.msra.mxu0 %v987
      %1022 = vmatpush.msra.mxu0 %v985
      %1023 = vmatpush.msra.mxu0 %v983
      %1024 = vmatmul.f32.gmra.mxu0 %v1006
      %v1025 = vpop.f32.mrf.mxu0
      %v1026 = vadd.f32 %v1003, %v1025
      %1027 = vdwg.mxu0
      %1028 = vmatpush.msra.mxu0 0.0
      %1029 = vmatpush.msra.mxu0 0.0
      %1030 = vmatpush.msra.mxu0 0.0
      %1031 = vmatpush.msra.mxu0 0.0
      %1032 = vmatpush.msra.mxu0 0.0
      %1033 = vmatpush.msra.mxu0 0.0
      %1034 = vmatpush.msra.mxu0 0.0
      %1035 = vmatpush.msra.mxu0 %v1000
      %1036 = vmatpush.msra.mxu0 %v998
      %1037 = vmatpush.msra.mxu0 %v996
      %1038 = vmatpush.msra.mxu0 %v994
      %1039 = vmatpush.msra.mxu0 %v992
      %1040 = vmatpush.msra.mxu0 %v990
      %1041 = vmatpush.msra.mxu0 %v988
      %1042 = vmatpush.msra.mxu0 %v986
      %1043 = vmatpush.msra.mxu0 %v984
      %1044 = vmatmul.f32.gmra.mxu0 %v1006
      %v1045 = vpop.f32.mrf.mxu0
      %v1046 = vadd.f32 %v1003, %v1045
      %1047 = vdwg.mxu0
      %1048 = vrot.lane.b32.xlu0 %v1026, 113
      %v1049 = vpop.permute.xlu0 %1048
      %1050 = vrot.lane.b32.xlu0 %v1046, 113
      %v1051 = vpop.permute.xlu0 %1050
      %v1052 = vsel %vm371, %v1049, %v1051
      %v1053 = vsel %vm371, %v1051, %v1049
      %1054 = vrot.lane.b32.xlu0 %v1026, 1
      %v1055 = vpop.permute.xlu0 %1054
      %1056 = vrot.lane.b32.xlu0 %v1046, 1
      %v1057 = vpop.permute.xlu0 %1056
      %v1058 = vsel %vm378, %v1055, %v1057
      %v1059 = vsel %vm378, %v1057, %v1055
      %v1060 = vsel %vm383, %v1052, %v1059
      %v1061 = vsel %vm384, %v1053, %v1058
      %1062 = vrot.lane.b32.xlu0 %v1026, 15
      %v1063 = vpop.permute.xlu0 %1062
      %1064 = vrot.lane.b32.xlu0 %v1046, 15
      %v1065 = vpop.permute.xlu0 %1064
      %v1066 = vsel %vm391, %v1063, %v1065
      %v1067 = vsel %vm391, %v1065, %v1063
      %1068 = vrot.lane.b32.xlu0 %v1026, 127
      %v1069 = vpop.permute.xlu0 %1068
      %1070 = vrot.lane.b32.xlu0 %v1046, 127
      %v1071 = vpop.permute.xlu0 %1070
      %v1072 = vsel %vm398, %v1069, %v1071
      %v1073 = vsel %vm398, %v1071, %v1069
      %v1074 = vsel %vm403, %v1067, %v1072
      %v1075 = vsel %vm404, %v1066, %v1073
      %1076 = vrot.lane.b32.xlu0 %v1060, 16
      %v1077 = vpop.permute.xlu0 %1076
      %1078 = vrot.lane.b32.xlu0 %v1061, 16
      %v1079 = vpop.permute.xlu0 %1078
      %v1080 = vsel %vm411, %v1077, %v1079
      %v1081 = vsel %vm411, %v1079, %v1077
      %1082 = vst [vmem:[#allocation2 + $0x120] sm:$0xff] %v1081
      %1083 = vst [vmem:[#allocation2 + $0x128] sm:$0xff] %v1080
      %1084 = vrot.lane.b32.xlu0 %v1026, 16
      %v1085 = vpop.permute.xlu0 %1084
      %1086 = vrot.lane.b32.xlu0 %v1046, 16
      %v1087 = vpop.permute.xlu0 %1086
      %v1088 = vsel %vm411, %v1085, %v1087
      %v1089 = vsel %vm411, %v1087, %v1085
      %1090 = vst [vmem:[#allocation2 + $0x130] sm:$0xff] %v1089
      %1091 = vst [vmem:[#allocation2 + $0x138] sm:$0xff] %v1088
      %1092 = vrot.lane.b32.xlu0 %v1074, 16
      %v1093 = vpop.permute.xlu0 %1092
      %1094 = vrot.lane.b32.xlu0 %v1075, 16
      %v1095 = vpop.permute.xlu0 %1094
      %v1096 = vsel %vm411, %v1093, %v1095
      %v1097 = vsel %vm411, %v1095, %v1093
      %1098 = vst [vmem:[#allocation2 + $0x140] sm:$0xff] %v1097
      %1099 = vst [vmem:[#allocation2 + $0x148] sm:$0xff] %v1096
      %1100 = vst [vmem:[#allocation2 + $0x150] sm:$0xff] %v1060
      %1101 = vst [vmem:[#allocation2 + $0x158] sm:$0xff] %v1061
      %1102 = vst [vmem:[#allocation2 + $0x160] sm:$0xff] %v1026
      %1103 = vst [vmem:[#allocation2 + $0x168] sm:$0xff] %v1046
      %1104 = vst [vmem:[#allocation2 + $0x170] sm:$0xff] %v1074
      %1105 = vst [vmem:[#allocation2 + $0x178] sm:$0xff] %v1075
      %1106 = vrot.lane.b32.xlu0 %v1060, 112
      %v1107 = vpop.permute.xlu0 %1106
      %1108 = vrot.lane.b32.xlu0 %v1061, 112
      %v1109 = vpop.permute.xlu0 %1108
      %v1110 = vsel %vm442, %v1107, %v1109
      %v1111 = vsel %vm442, %v1109, %v1107
      %1112 = vst [vmem:[#allocation2 + $0x180] sm:$0xff] %v1110
      %1113 = vst [vmem:[#allocation2 + $0x188] sm:$0xff] %v1111
      %1114 = vrot.lane.b32.xlu0 %v1026, 112
      %v1115 = vpop.permute.xlu0 %1114
      %1116 = vrot.lane.b32.xlu0 %v1046, 112
      %v1117 = vpop.permute.xlu0 %1116
      %v1118 = vsel %vm442, %v1115, %v1117
      %v1119 = vsel %vm442, %v1117, %v1115
      %1120 = vst [vmem:[#allocation2 + $0x190] sm:$0xff] %v1118
      %1121 = vst [vmem:[#allocation2 + $0x198] sm:$0xff] %v1119
      %1122 = vrot.lane.b32.xlu0 %v1074, 112
      %v1123 = vpop.permute.xlu0 %1122
      %1124 = vrot.lane.b32.xlu0 %v1075, 112
      %v1125 = vpop.permute.xlu0 %1124
      %v1126 = vsel %vm442, %v1123, %v1125
      %v1127 = vsel %vm442, %v1125, %v1123
      %1128 = vst [vmem:[#allocation2 + $0x1a0] sm:$0xff] %v1126
      %1129 = vst [vmem:[#allocation2 + $0x1a8] sm:$0xff] %v1127
      %v1130 = vld [vmem:[%s3] sm:$0xff]
      %v1131 = vld [vmem:[%s3 + $0x8] sm:$0xff]
      %v1132 = vld [vmem:[#allocation2] sm:$0xff]
      %v1133 = vld [vmem:[#allocation2 + $0x8] sm:$0xff]
      %v1134 = vld [vmem:[#allocation2 + $0x10] sm:$0xff]
      %v1135 = vld [vmem:[#allocation2 + $0x18] sm:$0xff]
      %v1136 = vld [vmem:[#allocation2 + $0x20] sm:$0xff]
      %v1137 = vld [vmem:[#allocation2 + $0x28] sm:$0xff]
      %v1138 = vld [vmem:[#allocation2 + $0x30] sm:$0xff]
      %v1139 = vld [vmem:[#allocation2 + $0x38] sm:$0xff]
      %v1140 = vld [vmem:[#allocation2 + $0x40] sm:$0xff]
      %v1141 = vld [vmem:[#allocation2 + $0x48] sm:$0xff]
      %v1142 = vld [vmem:[#allocation2 + $0x50] sm:$0xff]
      %v1143 = vld [vmem:[#allocation2 + $0x58] sm:$0xff]
      %v1144 = vld [vmem:[#allocation2 + $0x60] sm:$0xff]
      %v1145 = vld [vmem:[#allocation2 + $0x68] sm:$0xff]
      %v1146 = vld [vmem:[#allocation2 + $0x70] sm:$0xff]
      %v1147 = vld [vmem:[#allocation2 + $0x78] sm:$0xff]
      %v1148 = vld [vmem:[#allocation2 + $0x80] sm:$0xff]
      %v1149 = vld [vmem:[#allocation2 + $0x88] sm:$0xff]
      %v1150 = vld [vmem:[#allocation2 + $0x90] sm:$0xff]
      %v1151 = vld [vmem:[#allocation2 + $0x98] sm:$0xff]
      %v1152 = vld [vmem:[#allocation2 + $0xa0] sm:$0xff]
      %v1153 = vld [vmem:[#allocation2 + $0xa8] sm:$0xff]
      %v1154 = vld [vmem:[#allocation2 + $0xb0] sm:$0xff]
      %v1155 = vld [vmem:[#allocation2 + $0xb8] sm:$0xff]
      %v1156 = vld [vmem:[#allocation2 + $0xc0] sm:$0xff]
      %v1157 = vld [vmem:[#allocation2 + $0xc8] sm:$0xff]
      %v1158 = vld [vmem:[#allocation2 + $0xd0] sm:$0xff]
      %v1159 = vld [vmem:[#allocation2 + $0xd8] sm:$0xff]
      %v1160 = vld [vmem:[#allocation2 + $0xe0] sm:$0xff]
      %v1161 = vld [vmem:[#allocation2 + $0xe8] sm:$0xff]
      %v1162 = vld [vmem:[#allocation2 + $0xf0] sm:$0xff]
      %v1163 = vld [vmem:[#allocation2 + $0xf8] sm:$0xff]
      %v1164 = vld [vmem:[#allocation2 + $0x100] sm:$0xff]
      %v1165 = vld [vmem:[#allocation2 + $0x108] sm:$0xff]
      %v1166 = vld [vmem:[#allocation2 + $0x110] sm:$0xff]
      %v1167 = vld [vmem:[#allocation2 + $0x118] sm:$0xff]
      %v1168 = vld [vmem:[#allocation2 + $0x120] sm:$0xff]
      %v1169 = vld [vmem:[#allocation2 + $0x128] sm:$0xff]
      %v1170 = vld [vmem:[#allocation2 + $0x130] sm:$0xff]
      %v1171 = vld [vmem:[#allocation2 + $0x138] sm:$0xff]
      %v1172 = vld [vmem:[#allocation2 + $0x140] sm:$0xff]
      %v1173 = vld [vmem:[#allocation2 + $0x148] sm:$0xff]
      %v1174 = vld [vmem:[#allocation2 + $0x150] sm:$0xff]
      %v1175 = vld [vmem:[#allocation2 + $0x158] sm:$0xff]
      %v1176 = vld [vmem:[#allocation2 + $0x160] sm:$0xff]
      %v1177 = vld [vmem:[#allocation2 + $0x168] sm:$0xff]
      %v1178 = vld [vmem:[#allocation2 + $0x170] sm:$0xff]
      %v1179 = vld [vmem:[#allocation2 + $0x178] sm:$0xff]
      %v1180 = vld [vmem:[#allocation2 + $0x180] sm:$0xff]
      %v1181 = vld [vmem:[#allocation2 + $0x188] sm:$0xff]
      %v1182 = vld [vmem:[#allocation2 + $0x190] sm:$0xff]
      %v1183 = vld [vmem:[#allocation2 + $0x198] sm:$0xff]
      %v1184 = vld [vmem:[#allocation2 + $0x1a0] sm:$0xff]
      %v1185 = vld [vmem:[#allocation2 + $0x1a8] sm:$0xff]
      %1186 = vset.pattern.permute.xlu0 4
      %1187 = vperm.xlu0 %1186, %v335
      %v1188 = vpop.permute.xlu0 %1187
      %vm1190 = vcmask 719872
      %v1192 = vsel %vm1190, %v1131, 0
      %1194 = vmatpush.msra.mxu0 %v1162
      %1195 = vmatpush.msra.mxu0 %v1160
      %1196 = vmatpush.msra.mxu0 %v1158
      %1197 = vmatpush.msra.mxu0 %v1156
      %1198 = vmatpush.msra.mxu0 %v1154
      %1199 = vmatpush.msra.mxu0 %v1152
      %1200 = vmatpush.msra.mxu0 %v1150
      %1201 = vmatpush.msra.mxu0 %v1148
      %1202 = vmatpush.msra.mxu0 %v1146
      %1203 = vmatpush.msra.mxu0 %v1144
      %1204 = vmatpush.msra.mxu0 %v1142
      %1205 = vmatpush.msra.mxu0 %v1140
      %1206 = vmatpush.msra.mxu0 %v1138
      %1207 = vmatpush.msra.mxu0 %v1136
      %1208 = vmatpush.msra.mxu0 %v1134
      %1209 = vmatpush.msra.mxu0 %v1132
      %1210 = vmatmul.f32.gmra.mxu0 %v1130
      %v1211 = vpop.f32.mrf.mxu0
      %v1212 = vadd.f32 %v1188, %v1211
      %1213 = vdwg.mxu0
      %1214 = vmatpush.msra.mxu0 0.0
      %1215 = vmatpush.msra.mxu0 0.0
      %1216 = vmatpush.msra.mxu0 0.0
      %1217 = vmatpush.msra.mxu0 0.0
      %1218 = vmatpush.msra.mxu0 0.0
      %1219 = vmatpush.msra.mxu0 %v1184
      %1220 = vmatpush.msra.mxu0 %v1182
      %1221 = vmatpush.msra.mxu0 %v1180
      %1222 = vmatpush.msra.mxu0 %v1178
      %1223 = vmatpush.msra.mxu0 %v1176
      %1224 = vmatpush.msra.mxu0 %v1174
      %1225 = vmatpush.msra.mxu0 %v1172
      %1226 = vmatpush.msra.mxu0 %v1170
      %1227 = vmatpush.msra.mxu0 %v1168
      %1228 = vmatpush.msra.mxu0 %v1166
      %1229 = vmatpush.msra.mxu0 %v1164
      %1230 = vmatmul.f32.gmra.mxu0 %v1192
      %v1231 = vpop.f32.mrf.mxu0
      %v1232 = vadd.f32 %v1212, %v1231
      %1233 = vdwg.mxu0
      %1234 = vmatpush.msra.mxu0 %v1163
      %1235 = vmatpush.msra.mxu0 %v1161
      %1236 = vmatpush.msra.mxu0 %v1159
      %1237 = vmatpush.msra.mxu0 %v1157
      %1238 = vmatpush.msra.mxu0 %v1155
      %1239 = vmatpush.msra.mxu0 %v1153
      %1240 = vmatpush.msra.mxu0 %v1151
      %1241 = vmatpush.msra.mxu0 %v1149
      %1242 = vmatpush.msra.mxu0 %v1147
      %1243 = vmatpush.msra.mxu0 %v1145
      %1244 = vmatpush.msra.mxu0 %v1143
      %1245 = vmatpush.msra.mxu0 %v1141
      %1246 = vmatpush.msra.mxu0 %v1139
      %1247 = vmatpush.msra.mxu0 %v1137
      %1248 = vmatpush.msra.mxu0 %v1135
      %1249 = vmatpush.msra.mxu0 %v1133
      %1250 = vmatmul.f32.gmra.mxu0 %v1130
      %v1251 = vpop.f32.mrf.mxu0
      %v1252 = vadd.f32 %v1188, %v1251
      %1253 = vdwg.mxu0
      %1254 = vmatpush.msra.mxu0 0.0
      %1255 = vmatpush.msra.mxu0 0.0
      %1256 = vmatpush.msra.mxu0 0.0
      %1257 = vmatpush.msra.mxu0 0.0
      %1258 = vmatpush.msra.mxu0 0.0
      %1259 = vmatpush.msra.mxu0 %v1185
      %1260 = vmatpush.msra.mxu0 %v1183
      %1261 = vmatpush.msra.mxu0 %v1181
      %1262 = vmatpush.msra.mxu0 %v1179
      %1263 = vmatpush.msra.mxu0 %v1177
      %1264 = vmatpush.msra.mxu0 %v1175
      %1265 = vmatpush.msra.mxu0 %v1173
      %1266 = vmatpush.msra.mxu0 %v1171
      %1267 = vmatpush.msra.mxu0 %v1169
      %1268 = vmatpush.msra.mxu0 %v1167
      %1269 = vmatpush.msra.mxu0 %v1165
      %1270 = vmatmul.f32.gmra.mxu0 %v1192
      %v1271 = vpop.f32.mrf.mxu0
      %v1272 = vadd.f32 %v1252, %v1271
      %1273 = vdwg.mxu0
      %vm1274 = vcmp.ge.f32.partialorder %v1232, 0.0
      %vm1275 = vcmp.ge.f32.partialorder %v1272, 0.0
      %v1276 = vmul.f32 %v1232, 0.01
      %v1277 = vmul.f32 %v1272, 0.01
      %v1278 = vsel %vm1274, %v1232, %v1276
      %v1279 = vsel %vm1275, %v1272, %v1277
      %1280 = vrot.lane.b32.xlu0 %v1278, 113
      %v1281 = vpop.permute.xlu0 %1280
      %1282 = vrot.lane.b32.xlu0 %v1279, 113
      %v1283 = vpop.permute.xlu0 %1282
      %v1284 = vsel %vm371, %v1281, %v1283
      %v1285 = vsel %vm371, %v1283, %v1281
      %1286 = vrot.lane.b32.xlu0 %v1278, 1
      %v1287 = vpop.permute.xlu0 %1286
      %1288 = vrot.lane.b32.xlu0 %v1279, 1
      %v1289 = vpop.permute.xlu0 %1288
      %v1290 = vsel %vm378, %v1287, %v1289
      %v1291 = vsel %vm378, %v1289, %v1287
      %v1292 = vsel %vm383, %v1284, %v1291
      %v1293 = vsel %vm384, %v1285, %v1290
      %1294 = vrot.lane.b32.xlu0 %v1278, 15
      %v1295 = vpop.permute.xlu0 %1294
      %1296 = vrot.lane.b32.xlu0 %v1279, 15
      %v1297 = vpop.permute.xlu0 %1296
      %v1298 = vsel %vm391, %v1295, %v1297
      %v1299 = vsel %vm391, %v1297, %v1295
      %1300 = vrot.lane.b32.xlu0 %v1278, 127
      %v1301 = vpop.permute.xlu0 %1300
      %1302 = vrot.lane.b32.xlu0 %v1279, 127
      %v1303 = vpop.permute.xlu0 %1302
      %v1304 = vsel %vm398, %v1301, %v1303
      %v1305 = vsel %vm398, %v1303, %v1301
      %v1306 = vsel %vm403, %v1299, %v1304
      %v1307 = vsel %vm404, %v1298, %v1305
      %1308 = vrot.lane.b32.xlu0 %v1292, 16
      %v1309 = vpop.permute.xlu0 %1308
      %1310 = vrot.lane.b32.xlu0 %v1293, 16
      %v1311 = vpop.permute.xlu0 %1310
      %v1312 = vsel %vm411, %v1309, %v1311
      %v1313 = vsel %vm411, %v1311, %v1309
      %1314 = vst [vmem:[#allocation3] sm:$0xff] %v1313
      %1315 = vst [vmem:[#allocation3 + $0x8] sm:$0xff] %v1312
      %1316 = vrot.lane.b32.xlu0 %v1278, 16
      %v1317 = vpop.permute.xlu0 %1316
      %1318 = vrot.lane.b32.xlu0 %v1279, 16
      %v1319 = vpop.permute.xlu0 %1318
      %v1320 = vsel %vm411, %v1317, %v1319
      %v1321 = vsel %vm411, %v1319, %v1317
      %1322 = vst [vmem:[#allocation3 + $0x10] sm:$0xff] %v1321
      %1323 = vst [vmem:[#allocation3 + $0x18] sm:$0xff] %v1320
      %1324 = vrot.lane.b32.xlu0 %v1306, 16
      %v1325 = vpop.permute.xlu0 %1324
      %1326 = vrot.lane.b32.xlu0 %v1307, 16
      %v1327 = vpop.permute.xlu0 %1326
      %v1328 = vsel %vm411, %v1325, %v1327
      %v1329 = vsel %vm411, %v1327, %v1325
      %1330 = vst [vmem:[#allocation3 + $0x20] sm:$0xff] %v1329
      %1331 = vst [vmem:[#allocation3 + $0x28] sm:$0xff] %v1328
      %1332 = vst [vmem:[#allocation3 + $0x30] sm:$0xff] %v1292
      %1333 = vst [vmem:[#allocation3 + $0x38] sm:$0xff] %v1293
      %1334 = vst [vmem:[#allocation3 + $0x40] sm:$0xff] %v1278
      %1335 = vst [vmem:[#allocation3 + $0x48] sm:$0xff] %v1279
      %1336 = vst [vmem:[#allocation3 + $0x50] sm:$0xff] %v1306
      %1337 = vst [vmem:[#allocation3 + $0x58] sm:$0xff] %v1307
      %1338 = vrot.lane.b32.xlu0 %v1292, 112
      %v1339 = vpop.permute.xlu0 %1338
      %1340 = vrot.lane.b32.xlu0 %v1293, 112
      %v1341 = vpop.permute.xlu0 %1340
      %v1342 = vsel %vm442, %v1339, %v1341
      %v1343 = vsel %vm442, %v1341, %v1339
      %1344 = vst [vmem:[#allocation3 + $0x60] sm:$0xff] %v1342
      %1345 = vst [vmem:[#allocation3 + $0x68] sm:$0xff] %v1343
      %1346 = vrot.lane.b32.xlu0 %v1278, 112
      %v1347 = vpop.permute.xlu0 %1346
      %1348 = vrot.lane.b32.xlu0 %v1279, 112
      %v1349 = vpop.permute.xlu0 %1348
      %v1350 = vsel %vm442, %v1347, %v1349
      %v1351 = vsel %vm442, %v1349, %v1347
      %1352 = vst [vmem:[#allocation3 + $0x70] sm:$0xff] %v1350
      %1353 = vst [vmem:[#allocation3 + $0x78] sm:$0xff] %v1351
      %1354 = vrot.lane.b32.xlu0 %v1306, 112
      %v1355 = vpop.permute.xlu0 %1354
      %1356 = vrot.lane.b32.xlu0 %v1307, 112
      %v1357 = vpop.permute.xlu0 %1356
      %v1358 = vsel %vm442, %v1355, %v1357
      %v1359 = vsel %vm442, %v1357, %v1355
      %1360 = vst [vmem:[#allocation3 + $0x80] sm:$0xff] %v1358
      %1361 = vst [vmem:[#allocation3 + $0x88] sm:$0xff] %v1359
      %s1362 = scalar_lea.vmem %s6, 16
      %v1363 = vld [vmem:[%s1362] sm:$0xff]
      %v1364 = vld [vmem:[#allocation3] sm:$0xff]
      %v1365 = vld [vmem:[#allocation3 + $0x8] sm:$0xff]
      %v1366 = vld [vmem:[#allocation3 + $0x10] sm:$0xff]
      %v1367 = vld [vmem:[#allocation3 + $0x18] sm:$0xff]
      %v1368 = vld [vmem:[#allocation3 + $0x20] sm:$0xff]
      %v1369 = vld [vmem:[#allocation3 + $0x28] sm:$0xff]
      %v1370 = vld [vmem:[#allocation3 + $0x30] sm:$0xff]
      %v1371 = vld [vmem:[#allocation3 + $0x38] sm:$0xff]
      %v1372 = vld [vmem:[#allocation3 + $0x40] sm:$0xff]
      %v1373 = vld [vmem:[#allocation3 + $0x48] sm:$0xff]
      %v1374 = vld [vmem:[#allocation3 + $0x50] sm:$0xff]
      %v1375 = vld [vmem:[#allocation3 + $0x58] sm:$0xff]
      %v1376 = vld [vmem:[#allocation3 + $0x60] sm:$0xff]
      %v1377 = vld [vmem:[#allocation3 + $0x68] sm:$0xff]
      %v1378 = vld [vmem:[#allocation3 + $0x70] sm:$0xff]
      %v1379 = vld [vmem:[#allocation3 + $0x78] sm:$0xff]
      %v1380 = vld [vmem:[#allocation3 + $0x80] sm:$0xff]
      %v1381 = vld [vmem:[#allocation3 + $0x88] sm:$0xff]
      %1382 = vset.pattern.permute.xlu0 5
      %1383 = vperm.xlu0 %1382, %v335
      %v1384 = vpop.permute.xlu0 %1383
      %v1387 = vsel %vm487, %v1363, 0
      %1389 = vmatpush.msra.mxu0 0.0
      %1390 = vmatpush.msra.mxu0 0.0
      %1391 = vmatpush.msra.mxu0 0.0
      %1392 = vmatpush.msra.mxu0 0.0
      %1393 = vmatpush.msra.mxu0 0.0
      %1394 = vmatpush.msra.mxu0 0.0
      %1395 = vmatpush.msra.mxu0 0.0
      %1396 = vmatpush.msra.mxu0 %v1380
      %1397 = vmatpush.msra.mxu0 %v1378
      %1398 = vmatpush.msra.mxu0 %v1376
      %1399 = vmatpush.msra.mxu0 %v1374
      %1400 = vmatpush.msra.mxu0 %v1372
      %1401 = vmatpush.msra.mxu0 %v1370
      %1402 = vmatpush.msra.mxu0 %v1368
      %1403 = vmatpush.msra.mxu0 %v1366
      %1404 = vmatpush.msra.mxu0 %v1364
      %1405 = vmatmul.f32.gmra.mxu0 %v1387
      %v1406 = vpop.f32.mrf.mxu0
      %v1407 = vadd.f32 %v1384, %v1406
      %1408 = vdwg.mxu0
      %1409 = vmatpush.msra.mxu0 0.0
      %1410 = vmatpush.msra.mxu0 0.0
      %1411 = vmatpush.msra.mxu0 0.0
      %1412 = vmatpush.msra.mxu0 0.0
      %1413 = vmatpush.msra.mxu0 0.0
      %1414 = vmatpush.msra.mxu0 0.0
      %1415 = vmatpush.msra.mxu0 0.0
      %1416 = vmatpush.msra.mxu0 %v1381
      %1417 = vmatpush.msra.mxu0 %v1379
      %1418 = vmatpush.msra.mxu0 %v1377
      %1419 = vmatpush.msra.mxu0 %v1375
      %1420 = vmatpush.msra.mxu0 %v1373
      %1421 = vmatpush.msra.mxu0 %v1371
      %1422 = vmatpush.msra.mxu0 %v1369
      %1423 = vmatpush.msra.mxu0 %v1367
      %1424 = vmatpush.msra.mxu0 %v1365
      %1425 = vmatmul.f32.gmra.mxu0 %v1387
      %v1426 = vpop.f32.mrf.mxu0
      %v1427 = vadd.f32 %v1384, %v1426
      %1428 = vdwg.mxu0
      %1429 = vrot.lane.b32.xlu0 %v1407, 113
      %v1430 = vpop.permute.xlu0 %1429
      %1431 = vrot.lane.b32.xlu0 %v1427, 113
      %v1432 = vpop.permute.xlu0 %1431
      %v1433 = vsel %vm371, %v1430, %v1432
      %v1434 = vsel %vm371, %v1432, %v1430
      %1435 = vrot.lane.b32.xlu0 %v1407, 1
      %v1436 = vpop.permute.xlu0 %1435
      %1437 = vrot.lane.b32.xlu0 %v1427, 1
      %v1438 = vpop.permute.xlu0 %1437
      %v1439 = vsel %vm378, %v1436, %v1438
      %v1440 = vsel %vm378, %v1438, %v1436
      %v1441 = vsel %vm383, %v1433, %v1440
      %v1442 = vsel %vm384, %v1434, %v1439
      %1443 = vrot.lane.b32.xlu0 %v1407, 15
      %v1444 = vpop.permute.xlu0 %1443
      %1445 = vrot.lane.b32.xlu0 %v1427, 15
      %v1446 = vpop.permute.xlu0 %1445
      %v1447 = vsel %vm391, %v1444, %v1446
      %v1448 = vsel %vm391, %v1446, %v1444
      %1449 = vrot.lane.b32.xlu0 %v1407, 127
      %v1450 = vpop.permute.xlu0 %1449
      %1451 = vrot.lane.b32.xlu0 %v1427, 127
      %v1452 = vpop.permute.xlu0 %1451
      %v1453 = vsel %vm398, %v1450, %v1452
      %v1454 = vsel %vm398, %v1452, %v1450
      %v1455 = vsel %vm403, %v1448, %v1453
      %v1456 = vsel %vm404, %v1447, %v1454
      %1457 = vrot.lane.b32.xlu0 %v1441, 16
      %v1458 = vpop.permute.xlu0 %1457
      %1459 = vrot.lane.b32.xlu0 %v1442, 16
      %v1460 = vpop.permute.xlu0 %1459
      %v1461 = vsel %vm411, %v1458, %v1460
      %v1462 = vsel %vm411, %v1460, %v1458
      %1463 = vst [vmem:[#allocation2 + $0x1b0] sm:$0xff] %v1462
      %1464 = vst [vmem:[#allocation2 + $0x1b8] sm:$0xff] %v1461
      %1465 = vrot.lane.b32.xlu0 %v1407, 16
      %v1466 = vpop.permute.xlu0 %1465
      %1467 = vrot.lane.b32.xlu0 %v1427, 16
      %v1468 = vpop.permute.xlu0 %1467
      %v1469 = vsel %vm411, %v1466, %v1468
      %v1470 = vsel %vm411, %v1468, %v1466
      %1471 = vst [vmem:[#allocation2 + $0x1c0] sm:$0xff] %v1470
      %1472 = vst [vmem:[#allocation2 + $0x1c8] sm:$0xff] %v1469
      %1473 = vrot.lane.b32.xlu0 %v1455, 16
      %v1474 = vpop.permute.xlu0 %1473
      %1475 = vrot.lane.b32.xlu0 %v1456, 16
      %v1476 = vpop.permute.xlu0 %1475
      %v1477 = vsel %vm411, %v1474, %v1476
      %v1478 = vsel %vm411, %v1476, %v1474
      %1479 = vst [vmem:[#allocation2 + $0x1d0] sm:$0xff] %v1478
      %1480 = vst [vmem:[#allocation2 + $0x1d8] sm:$0xff] %v1477
      %1481 = vst [vmem:[#allocation2 + $0x1e0] sm:$0xff] %v1441
      %1482 = vst [vmem:[#allocation2 + $0x1e8] sm:$0xff] %v1442
      %1483 = vst [vmem:[#allocation2 + $0x1f0] sm:$0xff] %v1407
      %1484 = vst [vmem:[#allocation2 + $0x1f8] sm:$0xff] %v1427
      %1485 = vst [vmem:[#allocation2 + $0x200] sm:$0xff] %v1455
      %1486 = vst [vmem:[#allocation2 + $0x208] sm:$0xff] %v1456
      %1487 = vrot.lane.b32.xlu0 %v1441, 112
      %v1488 = vpop.permute.xlu0 %1487
      %1489 = vrot.lane.b32.xlu0 %v1442, 112
      %v1490 = vpop.permute.xlu0 %1489
      %v1491 = vsel %vm442, %v1488, %v1490
      %v1492 = vsel %vm442, %v1490, %v1488
      %1493 = vst [vmem:[#allocation2 + $0x210] sm:$0xff] %v1491
      %1494 = vst [vmem:[#allocation2 + $0x218] sm:$0xff] %v1492
      %1495 = vrot.lane.b32.xlu0 %v1407, 112
      %v1496 = vpop.permute.xlu0 %1495
      %1497 = vrot.lane.b32.xlu0 %v1427, 112
      %v1498 = vpop.permute.xlu0 %1497
      %v1499 = vsel %vm442, %v1496, %v1498
      %v1500 = vsel %vm442, %v1498, %v1496
      %1501 = vst [vmem:[#allocation2 + $0x220] sm:$0xff] %v1499
      %1502 = vst [vmem:[#allocation2 + $0x228] sm:$0xff] %v1500
      %1503 = vrot.lane.b32.xlu0 %v1455, 112
      %v1504 = vpop.permute.xlu0 %1503
      %1505 = vrot.lane.b32.xlu0 %v1456, 112
      %v1506 = vpop.permute.xlu0 %1505
      %v1507 = vsel %vm442, %v1504, %v1506
      %v1508 = vsel %vm442, %v1506, %v1504
      %1509 = vst [vmem:[#allocation2 + $0x230] sm:$0xff] %v1507
      %1510 = vst [vmem:[#allocation2 + $0x238] sm:$0xff] %v1508
      %v1511 = vld [vmem:[%s4] sm:$0xff]
      %v1512 = vld [vmem:[%s4 + $0x8] sm:$0xff]
      %v1513 = vld [vmem:[%s4 + $0x10] sm:$0xff]
      %v1514 = vld [vmem:[#allocation2] sm:$0xff]
      %v1515 = vld [vmem:[#allocation2 + $0x8] sm:$0xff]
      %v1516 = vld [vmem:[#allocation2 + $0x10] sm:$0xff]
      %v1517 = vld [vmem:[#allocation2 + $0x18] sm:$0xff]
      %v1518 = vld [vmem:[#allocation2 + $0x20] sm:$0xff]
      %v1519 = vld [vmem:[#allocation2 + $0x28] sm:$0xff]
      %v1520 = vld [vmem:[#allocation2 + $0x30] sm:$0xff]
      %v1521 = vld [vmem:[#allocation2 + $0x38] sm:$0xff]
      %v1522 = vld [vmem:[#allocation2 + $0x40] sm:$0xff]
      %v1523 = vld [vmem:[#allocation2 + $0x48] sm:$0xff]
      %v1524 = vld [vmem:[#allocation2 + $0x50] sm:$0xff]
      %v1525 = vld [vmem:[#allocation2 + $0x58] sm:$0xff]
      %v1526 = vld [vmem:[#allocation2 + $0x60] sm:$0xff]
      %v1527 = vld [vmem:[#allocation2 + $0x68] sm:$0xff]
      %v1528 = vld [vmem:[#allocation2 + $0x70] sm:$0xff]
      %v1529 = vld [vmem:[#allocation2 + $0x78] sm:$0xff]
      %v1530 = vld [vmem:[#allocation2 + $0x80] sm:$0xff]
      %v1531 = vld [vmem:[#allocation2 + $0x88] sm:$0xff]
      %v1532 = vld [vmem:[#allocation2 + $0x90] sm:$0xff]
      %v1533 = vld [vmem:[#allocation2 + $0x98] sm:$0xff]
      %v1534 = vld [vmem:[#allocation2 + $0xa0] sm:$0xff]
      %v1535 = vld [vmem:[#allocation2 + $0xa8] sm:$0xff]
      %v1536 = vld [vmem:[#allocation2 + $0xb0] sm:$0xff]
      %v1537 = vld [vmem:[#allocation2 + $0xb8] sm:$0xff]
      %v1538 = vld [vmem:[#allocation2 + $0xc0] sm:$0xff]
      %v1539 = vld [vmem:[#allocation2 + $0xc8] sm:$0xff]
      %v1540 = vld [vmem:[#allocation2 + $0xd0] sm:$0xff]
      %v1541 = vld [vmem:[#allocation2 + $0xd8] sm:$0xff]
      %v1542 = vld [vmem:[#allocation2 + $0xe0] sm:$0xff]
      %v1543 = vld [vmem:[#allocation2 + $0xe8] sm:$0xff]
      %v1544 = vld [vmem:[#allocation2 + $0xf0] sm:$0xff]
      %v1545 = vld [vmem:[#allocation2 + $0xf8] sm:$0xff]
      %v1546 = vld [vmem:[#allocation2 + $0x100] sm:$0xff]
      %v1547 = vld [vmem:[#allocation2 + $0x108] sm:$0xff]
      %v1548 = vld [vmem:[#allocation2 + $0x110] sm:$0xff]
      %v1549 = vld [vmem:[#allocation2 + $0x118] sm:$0xff]
      %v1550 = vld [vmem:[#allocation2 + $0x120] sm:$0xff]
      %v1551 = vld [vmem:[#allocation2 + $0x128] sm:$0xff]
      %v1552 = vld [vmem:[#allocation2 + $0x130] sm:$0xff]
      %v1553 = vld [vmem:[#allocation2 + $0x138] sm:$0xff]
      %v1554 = vld [vmem:[#allocation2 + $0x140] sm:$0xff]
      %v1555 = vld [vmem:[#allocation2 + $0x148] sm:$0xff]
      %v1556 = vld [vmem:[#allocation2 + $0x150] sm:$0xff]
      %v1557 = vld [vmem:[#allocation2 + $0x158] sm:$0xff]
      %v1558 = vld [vmem:[#allocation2 + $0x160] sm:$0xff]
      %v1559 = vld [vmem:[#allocation2 + $0x168] sm:$0xff]
      %v1560 = vld [vmem:[#allocation2 + $0x170] sm:$0xff]
      %v1561 = vld [vmem:[#allocation2 + $0x178] sm:$0xff]
      %v1562 = vld [vmem:[#allocation2 + $0x180] sm:$0xff]
      %v1563 = vld [vmem:[#allocation2 + $0x188] sm:$0xff]
      %v1564 = vld [vmem:[#allocation2 + $0x190] sm:$0xff]
      %v1565 = vld [vmem:[#allocation2 + $0x198] sm:$0xff]
      %v1566 = vld [vmem:[#allocation2 + $0x1a0] sm:$0xff]
      %v1567 = vld [vmem:[#allocation2 + $0x1a8] sm:$0xff]
      %v1568 = vld [vmem:[#allocation2 + $0x1b0] sm:$0xff]
      %v1569 = vld [vmem:[#allocation2 + $0x1b8] sm:$0xff]
      %v1570 = vld [vmem:[#allocation2 + $0x1c0] sm:$0xff]
      %v1571 = vld [vmem:[#allocation2 + $0x1c8] sm:$0xff]
      %v1572 = vld [vmem:[#allocation2 + $0x1d0] sm:$0xff]
      %v1573 = vld [vmem:[#allocation2 + $0x1d8] sm:$0xff]
      %v1574 = vld [vmem:[#allocation2 + $0x1e0] sm:$0xff]
      %v1575 = vld [vmem:[#allocation2 + $0x1e8] sm:$0xff]
      %v1576 = vld [vmem:[#allocation2 + $0x1f0] sm:$0xff]
      %v1577 = vld [vmem:[#allocation2 + $0x1f8] sm:$0xff]
      %v1578 = vld [vmem:[#allocation2 + $0x200] sm:$0xff]
      %v1579 = vld [vmem:[#allocation2 + $0x208] sm:$0xff]
      %v1580 = vld [vmem:[#allocation2 + $0x210] sm:$0xff]
      %v1581 = vld [vmem:[#allocation2 + $0x218] sm:$0xff]
      %v1582 = vld [vmem:[#allocation2 + $0x220] sm:$0xff]
      %v1583 = vld [vmem:[#allocation2 + $0x228] sm:$0xff]
      %v1584 = vld [vmem:[#allocation2 + $0x230] sm:$0xff]
      %v1585 = vld [vmem:[#allocation2 + $0x238] sm:$0xff]
      %1586 = vset.pattern.permute.xlu0 6
      %1587 = vperm.xlu0 %1586, %v335
      %v1588 = vpop.permute.xlu0 %1587
      %vm1590 = vcmask 261120
      %v1592 = vsel %vm1590, %v1513, 0
      %1594 = vmatpush.msra.mxu0 %v1544
      %1595 = vmatpush.msra.mxu0 %v1542
      %1596 = vmatpush.msra.mxu0 %v1540
      %1597 = vmatpush.msra.mxu0 %v1538
      %1598 = vmatpush.msra.mxu0 %v1536
      %1599 = vmatpush.msra.mxu0 %v1534
      %1600 = vmatpush.msra.mxu0 %v1532
      %1601 = vmatpush.msra.mxu0 %v1530
      %1602 = vmatpush.msra.mxu0 %v1528
      %1603 = vmatpush.msra.mxu0 %v1526
      %1604 = vmatpush.msra.mxu0 %v1524
      %1605 = vmatpush.msra.mxu0 %v1522
      %1606 = vmatpush.msra.mxu0 %v1520
      %1607 = vmatpush.msra.mxu0 %v1518
      %1608 = vmatpush.msra.mxu0 %v1516
      %1609 = vmatpush.msra.mxu0 %v1514
      %1610 = vmatmul.f32.gmra.mxu0 %v1511
      %v1611 = vpop.f32.mrf.mxu0
      %v1612 = vadd.f32 %v1588, %v1611
      %1613 = vdwg.mxu0
      %1614 = vmatpush.msra.mxu0 %v1576
      %1615 = vmatpush.msra.mxu0 %v1574
      %1616 = vmatpush.msra.mxu0 %v1572
      %1617 = vmatpush.msra.mxu0 %v1570
      %1618 = vmatpush.msra.mxu0 %v1568
      %1619 = vmatpush.msra.mxu0 %v1566
      %1620 = vmatpush.msra.mxu0 %v1564
      %1621 = vmatpush.msra.mxu0 %v1562
      %1622 = vmatpush.msra.mxu0 %v1560
      %1623 = vmatpush.msra.mxu0 %v1558
      %1624 = vmatpush.msra.mxu0 %v1556
      %1625 = vmatpush.msra.mxu0 %v1554
      %1626 = vmatpush.msra.mxu0 %v1552
      %1627 = vmatpush.msra.mxu0 %v1550
      %1628 = vmatpush.msra.mxu0 %v1548
      %1629 = vmatpush.msra.mxu0 %v1546
      %1630 = vmatmul.f32.gmra.mxu0 %v1512
      %v1631 = vpop.f32.mrf.mxu0
      %v1632 = vadd.f32 %v1612, %v1631
      %1633 = vdwg.mxu0
      %1634 = vmatpush.msra.mxu0 0.0
      %1635 = vmatpush.msra.mxu0 0.0
      %1636 = vmatpush.msra.mxu0 0.0
      %1637 = vmatpush.msra.mxu0 0.0
      %1638 = vmatpush.msra.mxu0 0.0
      %1639 = vmatpush.msra.mxu0 0.0
      %1640 = vmatpush.msra.mxu0 0.0
      %1641 = vmatpush.msra.mxu0 0.0
      %1642 = vmatpush.msra.mxu0 0.0
      %1643 = vmatpush.msra.mxu0 0.0
      %1644 = vmatpush.msra.mxu0 0.0
      %1645 = vmatpush.msra.mxu0 0.0
      %1646 = vmatpush.msra.mxu0 %v1584
      %1647 = vmatpush.msra.mxu0 %v1582
      %1648 = vmatpush.msra.mxu0 %v1580
      %1649 = vmatpush.msra.mxu0 %v1578
      %1650 = vmatmul.f32.gmra.mxu0 %v1592
      %v1651 = vpop.f32.mrf.mxu0
      %v1652 = vadd.f32 %v1632, %v1651
      %1653 = vdwg.mxu0
      %1654 = vmatpush.msra.mxu0 %v1545
      %1655 = vmatpush.msra.mxu0 %v1543
      %1656 = vmatpush.msra.mxu0 %v1541
      %1657 = vmatpush.msra.mxu0 %v1539
      %1658 = vmatpush.msra.mxu0 %v1537
      %1659 = vmatpush.msra.mxu0 %v1535
      %1660 = vmatpush.msra.mxu0 %v1533
      %1661 = vmatpush.msra.mxu0 %v1531
      %1662 = vmatpush.msra.mxu0 %v1529
      %1663 = vmatpush.msra.mxu0 %v1527
      %1664 = vmatpush.msra.mxu0 %v1525
      %1665 = vmatpush.msra.mxu0 %v1523
      %1666 = vmatpush.msra.mxu0 %v1521
      %1667 = vmatpush.msra.mxu0 %v1519
      %1668 = vmatpush.msra.mxu0 %v1517
      %1669 = vmatpush.msra.mxu0 %v1515
      %1670 = vmatmul.f32.gmra.mxu0 %v1511
      %v1671 = vpop.f32.mrf.mxu0
      %v1672 = vadd.f32 %v1588, %v1671
      %1673 = vdwg.mxu0
      %1674 = vmatpush.msra.mxu0 %v1577
      %1675 = vmatpush.msra.mxu0 %v1575
      %1676 = vmatpush.msra.mxu0 %v1573
      %1677 = vmatpush.msra.mxu0 %v1571
      %1678 = vmatpush.msra.mxu0 %v1569
      %1679 = vmatpush.msra.mxu0 %v1567
      %1680 = vmatpush.msra.mxu0 %v1565
      %1681 = vmatpush.msra.mxu0 %v1563
      %1682 = vmatpush.msra.mxu0 %v1561
      %1683 = vmatpush.msra.mxu0 %v1559
      %1684 = vmatpush.msra.mxu0 %v1557
      %1685 = vmatpush.msra.mxu0 %v1555
      %1686 = vmatpush.msra.mxu0 %v1553
      %1687 = vmatpush.msra.mxu0 %v1551
      %1688 = vmatpush.msra.mxu0 %v1549
      %1689 = vmatpush.msra.mxu0 %v1547
      %1690 = vmatmul.f32.gmra.mxu0 %v1512
      %v1691 = vpop.f32.mrf.mxu0
      %v1692 = vadd.f32 %v1672, %v1691
      %1693 = vdwg.mxu0
      %1694 = vmatpush.msra.mxu0 0.0
      %1695 = vmatpush.msra.mxu0 0.0
      %1696 = vmatpush.msra.mxu0 0.0
      %1697 = vmatpush.msra.mxu0 0.0
      %1698 = vmatpush.msra.mxu0 0.0
      %1699 = vmatpush.msra.mxu0 0.0
      %1700 = vmatpush.msra.mxu0 0.0
      %1701 = vmatpush.msra.mxu0 0.0
      %1702 = vmatpush.msra.mxu0 0.0
      %1703 = vmatpush.msra.mxu0 0.0
      %1704 = vmatpush.msra.mxu0 0.0
      %1705 = vmatpush.msra.mxu0 0.0
      %1706 = vmatpush.msra.mxu0 %v1585
      %1707 = vmatpush.msra.mxu0 %v1583
      %1708 = vmatpush.msra.mxu0 %v1581
      %1709 = vmatpush.msra.mxu0 %v1579
      %1710 = vmatmul.f32.gmra.mxu0 %v1592
      %v1711 = vpop.f32.mrf.mxu0
      %v1712 = vadd.f32 %v1692, %v1711
      %1713 = vdwg.mxu0
      %vm1714 = vcmp.ge.f32.partialorder %v1652, 0.0
      %vm1715 = vcmp.ge.f32.partialorder %v1712, 0.0
      %v1716 = vmul.f32 %v1652, 0.01
      %v1717 = vmul.f32 %v1712, 0.01
      %v1718 = vsel %vm1714, %v1652, %v1716
      %v1719 = vsel %vm1715, %v1712, %v1717
      %1720 = vrot.lane.b32.xlu0 %v1718, 113
      %v1721 = vpop.permute.xlu0 %1720
      %1722 = vrot.lane.b32.xlu0 %v1719, 113
      %v1723 = vpop.permute.xlu0 %1722
      %v1724 = vsel %vm371, %v1721, %v1723
      %v1725 = vsel %vm371, %v1723, %v1721
      %1726 = vrot.lane.b32.xlu0 %v1718, 1
      %v1727 = vpop.permute.xlu0 %1726
      %1728 = vrot.lane.b32.xlu0 %v1719, 1
      %v1729 = vpop.permute.xlu0 %1728
      %v1730 = vsel %vm378, %v1727, %v1729
      %v1731 = vsel %vm378, %v1729, %v1727
      %v1732 = vsel %vm383, %v1724, %v1731
      %v1733 = vsel %vm384, %v1725, %v1730
      %1734 = vrot.lane.b32.xlu0 %v1718, 15
      %v1735 = vpop.permute.xlu0 %1734
      %1736 = vrot.lane.b32.xlu0 %v1719, 15
      %v1737 = vpop.permute.xlu0 %1736
      %v1738 = vsel %vm391, %v1735, %v1737
      %v1739 = vsel %vm391, %v1737, %v1735
      %1740 = vrot.lane.b32.xlu0 %v1718, 127
      %v1741 = vpop.permute.xlu0 %1740
      %1742 = vrot.lane.b32.xlu0 %v1719, 127
      %v1743 = vpop.permute.xlu0 %1742
      %v1744 = vsel %vm398, %v1741, %v1743
      %v1745 = vsel %vm398, %v1743, %v1741
      %v1746 = vsel %vm403, %v1739, %v1744
      %v1747 = vsel %vm404, %v1738, %v1745
      %1748 = vrot.lane.b32.xlu0 %v1732, 16
      %v1749 = vpop.permute.xlu0 %1748
      %1750 = vrot.lane.b32.xlu0 %v1733, 16
      %v1751 = vpop.permute.xlu0 %1750
      %v1752 = vsel %vm411, %v1749, %v1751
      %v1753 = vsel %vm411, %v1751, %v1749
      %1754 = vst [vmem:[#allocation3] sm:$0xff] %v1753
      %1755 = vst [vmem:[#allocation3 + $0x8] sm:$0xff] %v1752
      %1756 = vrot.lane.b32.xlu0 %v1718, 16
      %v1757 = vpop.permute.xlu0 %1756
      %1758 = vrot.lane.b32.xlu0 %v1719, 16
      %v1759 = vpop.permute.xlu0 %1758
      %v1760 = vsel %vm411, %v1757, %v1759
      %v1761 = vsel %vm411, %v1759, %v1757
      %1762 = vst [vmem:[#allocation3 + $0x10] sm:$0xff] %v1761
      %1763 = vst [vmem:[#allocation3 + $0x18] sm:$0xff] %v1760
      %1764 = vrot.lane.b32.xlu0 %v1746, 16
      %v1765 = vpop.permute.xlu0 %1764
      %1766 = vrot.lane.b32.xlu0 %v1747, 16
      %v1767 = vpop.permute.xlu0 %1766
      %v1768 = vsel %vm411, %v1765, %v1767
      %v1769 = vsel %vm411, %v1767, %v1765
      %1770 = vst [vmem:[#allocation3 + $0x20] sm:$0xff] %v1769
      %1771 = vst [vmem:[#allocation3 + $0x28] sm:$0xff] %v1768
      %1772 = vst [vmem:[#allocation3 + $0x30] sm:$0xff] %v1732
      %1773 = vst [vmem:[#allocation3 + $0x38] sm:$0xff] %v1733
      %1774 = vst [vmem:[#allocation3 + $0x40] sm:$0xff] %v1718
      %1775 = vst [vmem:[#allocation3 + $0x48] sm:$0xff] %v1719
      %1776 = vst [vmem:[#allocation3 + $0x50] sm:$0xff] %v1746
      %1777 = vst [vmem:[#allocation3 + $0x58] sm:$0xff] %v1747
      %1778 = vrot.lane.b32.xlu0 %v1732, 112
      %v1779 = vpop.permute.xlu0 %1778
      %1780 = vrot.lane.b32.xlu0 %v1733, 112
      %v1781 = vpop.permute.xlu0 %1780
      %v1782 = vsel %vm442, %v1779, %v1781
      %v1783 = vsel %vm442, %v1781, %v1779
      %1784 = vst [vmem:[#allocation3 + $0x60] sm:$0xff] %v1782
      %1785 = vst [vmem:[#allocation3 + $0x68] sm:$0xff] %v1783
      %1786 = vrot.lane.b32.xlu0 %v1718, 112
      %v1787 = vpop.permute.xlu0 %1786
      %1788 = vrot.lane.b32.xlu0 %v1719, 112
      %v1789 = vpop.permute.xlu0 %1788
      %v1790 = vsel %vm442, %v1787, %v1789
      %v1791 = vsel %vm442, %v1789, %v1787
      %1792 = vst [vmem:[#allocation3 + $0x70] sm:$0xff] %v1790
      %1793 = vst [vmem:[#allocation3 + $0x78] sm:$0xff] %v1791
      %1794 = vrot.lane.b32.xlu0 %v1746, 112
      %v1795 = vpop.permute.xlu0 %1794
      %1796 = vrot.lane.b32.xlu0 %v1747, 112
      %v1797 = vpop.permute.xlu0 %1796
      %v1798 = vsel %vm442, %v1795, %v1797
      %v1799 = vsel %vm442, %v1797, %v1795
      %1800 = vst [vmem:[#allocation3 + $0x80] sm:$0xff] %v1798
      %1801 = vst [vmem:[#allocation3 + $0x88] sm:$0xff] %v1799
      %s1802 = scalar_lea.vmem %s6, 24
      %v1803 = vld [vmem:[%s1802] sm:$0xff]
      %v1804 = vld [vmem:[#allocation3] sm:$0xff]
      %v1805 = vld [vmem:[#allocation3 + $0x8] sm:$0xff]
      %v1806 = vld [vmem:[#allocation3 + $0x10] sm:$0xff]
      %v1807 = vld [vmem:[#allocation3 + $0x18] sm:$0xff]
      %v1808 = vld [vmem:[#allocation3 + $0x20] sm:$0xff]
      %v1809 = vld [vmem:[#allocation3 + $0x28] sm:$0xff]
      %v1810 = vld [vmem:[#allocation3 + $0x30] sm:$0xff]
      %v1811 = vld [vmem:[#allocation3 + $0x38] sm:$0xff]
      %v1812 = vld [vmem:[#allocation3 + $0x40] sm:$0xff]
      %v1813 = vld [vmem:[#allocation3 + $0x48] sm:$0xff]
      %v1814 = vld [vmem:[#allocation3 + $0x50] sm:$0xff]
      %v1815 = vld [vmem:[#allocation3 + $0x58] sm:$0xff]
      %v1816 = vld [vmem:[#allocation3 + $0x60] sm:$0xff]
      %v1817 = vld [vmem:[#allocation3 + $0x68] sm:$0xff]
      %v1818 = vld [vmem:[#allocation3 + $0x70] sm:$0xff]
      %v1819 = vld [vmem:[#allocation3 + $0x78] sm:$0xff]
      %v1820 = vld [vmem:[#allocation3 + $0x80] sm:$0xff]
      %v1821 = vld [vmem:[#allocation3 + $0x88] sm:$0xff]
      %1822 = vset.pattern.permute.xlu0 7
      %1823 = vperm.xlu0 %1822, %v335
      %v1824 = vpop.permute.xlu0 %1823
      %v1827 = vsel %vm487, %v1803, 0
      %1829 = vmatpush.msra.mxu0 0.0
      %1830 = vmatpush.msra.mxu0 0.0
      %1831 = vmatpush.msra.mxu0 0.0
      %1832 = vmatpush.msra.mxu0 0.0
      %1833 = vmatpush.msra.mxu0 0.0
      %1834 = vmatpush.msra.mxu0 0.0
      %1835 = vmatpush.msra.mxu0 0.0
      %1836 = vmatpush.msra.mxu0 %v1820
      %1837 = vmatpush.msra.mxu0 %v1818
      %1838 = vmatpush.msra.mxu0 %v1816
      %1839 = vmatpush.msra.mxu0 %v1814
      %1840 = vmatpush.msra.mxu0 %v1812
      %1841 = vmatpush.msra.mxu0 %v1810
      %1842 = vmatpush.msra.mxu0 %v1808
      %1843 = vmatpush.msra.mxu0 %v1806
      %1844 = vmatpush.msra.mxu0 %v1804
      %1845 = vmatmul.f32.gmra.mxu0 %v1827
      %v1846 = vpop.f32.mrf.mxu0
      %v1847 = vadd.f32 %v1824, %v1846
      %1848 = vdwg.mxu0
      %1849 = vmatpush.msra.mxu0 0.0
      %1850 = vmatpush.msra.mxu0 0.0
      %1851 = vmatpush.msra.mxu0 0.0
      %1852 = vmatpush.msra.mxu0 0.0
      %1853 = vmatpush.msra.mxu0 0.0
      %1854 = vmatpush.msra.mxu0 0.0
      %1855 = vmatpush.msra.mxu0 0.0
      %1856 = vmatpush.msra.mxu0 %v1821
      %1857 = vmatpush.msra.mxu0 %v1819
      %1858 = vmatpush.msra.mxu0 %v1817
      %1859 = vmatpush.msra.mxu0 %v1815
      %1860 = vmatpush.msra.mxu0 %v1813
      %1861 = vmatpush.msra.mxu0 %v1811
      %1862 = vmatpush.msra.mxu0 %v1809
      %1863 = vmatpush.msra.mxu0 %v1807
      %1864 = vmatpush.msra.mxu0 %v1805
      %1865 = vmatmul.f32.gmra.mxu0 %v1827
      %v1866 = vpop.f32.mrf.mxu0
      %v1867 = vadd.f32 %v1824, %v1866
      %1868 = vdwg.mxu0
      %1869 = vrot.lane.b32.xlu0 %v1847, 113
      %v1870 = vpop.permute.xlu0 %1869
      %1871 = vrot.lane.b32.xlu0 %v1867, 113
      %v1872 = vpop.permute.xlu0 %1871
      %v1873 = vsel %vm371, %v1870, %v1872
      %v1874 = vsel %vm371, %v1872, %v1870
      %1875 = vrot.lane.b32.xlu0 %v1847, 1
      %v1876 = vpop.permute.xlu0 %1875
      %1877 = vrot.lane.b32.xlu0 %v1867, 1
      %v1878 = vpop.permute.xlu0 %1877
      %v1879 = vsel %vm378, %v1876, %v1878
      %v1880 = vsel %vm378, %v1878, %v1876
      %v1881 = vsel %vm383, %v1873, %v1880
      %v1882 = vsel %vm384, %v1874, %v1879
      %1883 = vrot.lane.b32.xlu0 %v1847, 15
      %v1884 = vpop.permute.xlu0 %1883
      %1885 = vrot.lane.b32.xlu0 %v1867, 15
      %v1886 = vpop.permute.xlu0 %1885
      %v1887 = vsel %vm391, %v1884, %v1886
      %v1888 = vsel %vm391, %v1886, %v1884
      %1889 = vrot.lane.b32.xlu0 %v1847, 127
      %v1890 = vpop.permute.xlu0 %1889
      %1891 = vrot.lane.b32.xlu0 %v1867, 127
      %v1892 = vpop.permute.xlu0 %1891
      %v1893 = vsel %vm398, %v1890, %v1892
      %v1894 = vsel %vm398, %v1892, %v1890
      %v1895 = vsel %vm403, %v1888, %v1893
      %v1896 = vsel %vm404, %v1887, %v1894
      %1897 = vrot.lane.b32.xlu0 %v1881, 16
      %v1898 = vpop.permute.xlu0 %1897
      %1899 = vrot.lane.b32.xlu0 %v1882, 16
      %v1900 = vpop.permute.xlu0 %1899
      %v1901 = vsel %vm411, %v1898, %v1900
      %v1902 = vsel %vm411, %v1900, %v1898
      %1903 = vst [vmem:[#allocation2 + $0x240] sm:$0xff] %v1902
      %1904 = vst [vmem:[#allocation2 + $0x248] sm:$0xff] %v1901
      %1905 = vrot.lane.b32.xlu0 %v1847, 16
      %v1906 = vpop.permute.xlu0 %1905
      %1907 = vrot.lane.b32.xlu0 %v1867, 16
      %v1908 = vpop.permute.xlu0 %1907
      %v1909 = vsel %vm411, %v1906, %v1908
      %v1910 = vsel %vm411, %v1908, %v1906
      %1911 = vst [vmem:[#allocation2 + $0x250] sm:$0xff] %v1910
      %1912 = vst [vmem:[#allocation2 + $0x258] sm:$0xff] %v1909
      %1913 = vrot.lane.b32.xlu0 %v1895, 16
      %v1914 = vpop.permute.xlu0 %1913
      %1915 = vrot.lane.b32.xlu0 %v1896, 16
      %v1916 = vpop.permute.xlu0 %1915
      %v1917 = vsel %vm411, %v1914, %v1916
      %v1918 = vsel %vm411, %v1916, %v1914
      %1919 = vst [vmem:[#allocation2 + $0x260] sm:$0xff] %v1918
      %1920 = vst [vmem:[#allocation2 + $0x268] sm:$0xff] %v1917
      %1921 = vst [vmem:[#allocation2 + $0x270] sm:$0xff] %v1881
      %1922 = vst [vmem:[#allocation2 + $0x278] sm:$0xff] %v1882
      %1923 = vst [vmem:[#allocation2 + $0x280] sm:$0xff] %v1847
      %1924 = vst [vmem:[#allocation2 + $0x288] sm:$0xff] %v1867
      %1925 = vst [vmem:[#allocation2 + $0x290] sm:$0xff] %v1895
      %1926 = vst [vmem:[#allocation2 + $0x298] sm:$0xff] %v1896
      %1927 = vrot.lane.b32.xlu0 %v1881, 112
      %v1928 = vpop.permute.xlu0 %1927
      %1929 = vrot.lane.b32.xlu0 %v1882, 112
      %v1930 = vpop.permute.xlu0 %1929
      %v1931 = vsel %vm442, %v1928, %v1930
      %v1932 = vsel %vm442, %v1930, %v1928
      %1933 = vst [vmem:[#allocation2 + $0x2a0] sm:$0xff] %v1931
      %1934 = vst [vmem:[#allocation2 + $0x2a8] sm:$0xff] %v1932
      %1935 = vrot.lane.b32.xlu0 %v1847, 112
      %v1936 = vpop.permute.xlu0 %1935
      %1937 = vrot.lane.b32.xlu0 %v1867, 112
      %v1938 = vpop.permute.xlu0 %1937
      %v1939 = vsel %vm442, %v1936, %v1938
      %v1940 = vsel %vm442, %v1938, %v1936
      %1941 = vst [vmem:[#allocation2 + $0x2b0] sm:$0xff] %v1939
      %1942 = vst [vmem:[#allocation2 + $0x2b8] sm:$0xff] %v1940
      %1943 = vrot.lane.b32.xlu0 %v1895, 112
      %v1944 = vpop.permute.xlu0 %1943
      %1945 = vrot.lane.b32.xlu0 %v1896, 112
      %v1946 = vpop.permute.xlu0 %1945
      %v1947 = vsel %vm442, %v1944, %v1946
      %v1948 = vsel %vm442, %v1946, %v1944
      %1949 = vst [vmem:[#allocation2 + $0x2c0] sm:$0xff] %v1947
      %1950 = vst [vmem:[#allocation2 + $0x2c8] sm:$0xff] %v1948
      %v1951 = vld [vmem:[%s5] sm:$0xff]
      %v1952 = vld [vmem:[%s5 + $0x8] sm:$0xff]
      %v1953 = vld [vmem:[%s5 + $0x10] sm:$0xff]
      %v1954 = vld [vmem:[#allocation2] sm:$0xff]
      %v1955 = vld [vmem:[#allocation2 + $0x8] sm:$0xff]
      %v1956 = vld [vmem:[#allocation2 + $0x10] sm:$0xff]
      %v1957 = vld [vmem:[#allocation2 + $0x18] sm:$0xff]
      %v1958 = vld [vmem:[#allocation2 + $0x20] sm:$0xff]
      %v1959 = vld [vmem:[#allocation2 + $0x28] sm:$0xff]
      %v1960 = vld [vmem:[#allocation2 + $0x30] sm:$0xff]
      %v1961 = vld [vmem:[#allocation2 + $0x38] sm:$0xff]
      %v1962 = vld [vmem:[#allocation2 + $0x40] sm:$0xff]
      %v1963 = vld [vmem:[#allocation2 + $0x48] sm:$0xff]
      %v1964 = vld [vmem:[#allocation2 + $0x50] sm:$0xff]
      %v1965 = vld [vmem:[#allocation2 + $0x58] sm:$0xff]
      %v1966 = vld [vmem:[#allocation2 + $0x60] sm:$0xff]
      %v1967 = vld [vmem:[#allocation2 + $0x68] sm:$0xff]
      %v1968 = vld [vmem:[#allocation2 + $0x70] sm:$0xff]
      %v1969 = vld [vmem:[#allocation2 + $0x78] sm:$0xff]
      %v1970 = vld [vmem:[#allocation2 + $0x80] sm:$0xff]
      %v1971 = vld [vmem:[#allocation2 + $0x88] sm:$0xff]
      %v1972 = vld [vmem:[#allocation2 + $0x90] sm:$0xff]
      %v1973 = vld [vmem:[#allocation2 + $0x98] sm:$0xff]
      %v1974 = vld [vmem:[#allocation2 + $0xa0] sm:$0xff]
      %v1975 = vld [vmem:[#allocation2 + $0xa8] sm:$0xff]
      %v1976 = vld [vmem:[#allocation2 + $0xb0] sm:$0xff]
      %v1977 = vld [vmem:[#allocation2 + $0xb8] sm:$0xff]
      %v1978 = vld [vmem:[#allocation2 + $0xc0] sm:$0xff]
      %v1979 = vld [vmem:[#allocation2 + $0xc8] sm:$0xff]
      %v1980 = vld [vmem:[#allocation2 + $0xd0] sm:$0xff]
      %v1981 = vld [vmem:[#allocation2 + $0xd8] sm:$0xff]
      %v1982 = vld [vmem:[#allocation2 + $0xe0] sm:$0xff]
      %v1983 = vld [vmem:[#allocation2 + $0xe8] sm:$0xff]
      %v1984 = vld [vmem:[#allocation2 + $0xf0] sm:$0xff]
      %v1985 = vld [vmem:[#allocation2 + $0xf8] sm:$0xff]
      %v1986 = vld [vmem:[#allocation2 + $0x100] sm:$0xff]
      %v1987 = vld [vmem:[#allocation2 + $0x108] sm:$0xff]
      %v1988 = vld [vmem:[#allocation2 + $0x110] sm:$0xff]
      %v1989 = vld [vmem:[#allocation2 + $0x118] sm:$0xff]
      %v1990 = vld [vmem:[#allocation2 + $0x120] sm:$0xff]
      %v1991 = vld [vmem:[#allocation2 + $0x128] sm:$0xff]
      %v1992 = vld [vmem:[#allocation2 + $0x130] sm:$0xff]
      %v1993 = vld [vmem:[#allocation2 + $0x138] sm:$0xff]
      %v1994 = vld [vmem:[#allocation2 + $0x140] sm:$0xff]
      %v1995 = vld [vmem:[#allocation2 + $0x148] sm:$0xff]
      %v1996 = vld [vmem:[#allocation2 + $0x150] sm:$0xff]
      %v1997 = vld [vmem:[#allocation2 + $0x158] sm:$0xff]
      %v1998 = vld [vmem:[#allocation2 + $0x160] sm:$0xff]
      %v1999 = vld [vmem:[#allocation2 + $0x168] sm:$0xff]
      %v2000 = vld [vmem:[#allocation2 + $0x170] sm:$0xff]
      %v2001 = vld [vmem:[#allocation2 + $0x178] sm:$0xff]
      %v2002 = vld [vmem:[#allocation2 + $0x180] sm:$0xff]
      %v2003 = vld [vmem:[#allocation2 + $0x188] sm:$0xff]
      %v2004 = vld [vmem:[#allocation2 + $0x190] sm:$0xff]
      %v2005 = vld [vmem:[#allocation2 + $0x198] sm:$0xff]
      %v2006 = vld [vmem:[#allocation2 + $0x1a0] sm:$0xff]
      %v2007 = vld [vmem:[#allocation2 + $0x1a8] sm:$0xff]
      %v2008 = vld [vmem:[#allocation2 + $0x1b0] sm:$0xff]
      %v2009 = vld [vmem:[#allocation2 + $0x1b8] sm:$0xff]
      %v2010 = vld [vmem:[#allocation2 + $0x1c0] sm:$0xff]
      %v2011 = vld [vmem:[#allocation2 + $0x1c8] sm:$0xff]
      %v2012 = vld [vmem:[#allocation2 + $0x1d0] sm:$0xff]
      %v2013 = vld [vmem:[#allocation2 + $0x1d8] sm:$0xff]
      %v2014 = vld [vmem:[#allocation2 + $0x1e0] sm:$0xff]
      %v2015 = vld [vmem:[#allocation2 + $0x1e8] sm:$0xff]
      %v2016 = vld [vmem:[#allocation2 + $0x1f0] sm:$0xff]
      %v2017 = vld [vmem:[#allocation2 + $0x1f8] sm:$0xff]
      %v2018 = vld [vmem:[#allocation2 + $0x200] sm:$0xff]
      %v2019 = vld [vmem:[#allocation2 + $0x208] sm:$0xff]
      %v2020 = vld [vmem:[#allocation2 + $0x210] sm:$0xff]
      %v2021 = vld [vmem:[#allocation2 + $0x218] sm:$0xff]
      %v2022 = vld [vmem:[#allocation2 + $0x220] sm:$0xff]
      %v2023 = vld [vmem:[#allocation2 + $0x228] sm:$0xff]
      %v2024 = vld [vmem:[#allocation2 + $0x230] sm:$0xff]
      %v2025 = vld [vmem:[#allocation2 + $0x238] sm:$0xff]
      %v2026 = vld [vmem:[#allocation2 + $0x240] sm:$0xff]
      %v2027 = vld [vmem:[#allocation2 + $0x248] sm:$0xff]
      %v2028 = vld [vmem:[#allocation2 + $0x250] sm:$0xff]
      %v2029 = vld [vmem:[#allocation2 + $0x258] sm:$0xff]
      %v2030 = vld [vmem:[#allocation2 + $0x260] sm:$0xff]
      %v2031 = vld [vmem:[#allocation2 + $0x268] sm:$0xff]
      %v2032 = vld [vmem:[#allocation2 + $0x270] sm:$0xff]
      %v2033 = vld [vmem:[#allocation2 + $0x278] sm:$0xff]
      %v2034 = vld [vmem:[#allocation2 + $0x280] sm:$0xff]
      %v2035 = vld [vmem:[#allocation2 + $0x288] sm:$0xff]
      %v2036 = vld [vmem:[#allocation2 + $0x290] sm:$0xff]
      %v2037 = vld [vmem:[#allocation2 + $0x298] sm:$0xff]
      %v2038 = vld [vmem:[#allocation2 + $0x2a0] sm:$0xff]
      %v2039 = vld [vmem:[#allocation2 + $0x2a8] sm:$0xff]
      %v2040 = vld [vmem:[#allocation2 + $0x2b0] sm:$0xff]
      %v2041 = vld [vmem:[#allocation2 + $0x2b8] sm:$0xff]
      %v2042 = vld [vmem:[#allocation2 + $0x2c0] sm:$0xff]
      %v2043 = vld [vmem:[#allocation2 + $0x2c8] sm:$0xff]
      %2044 = vset.pattern.permute.xlu0 8
      %2045 = vperm.xlu0 %2044, %v335
      %v2046 = vpop.permute.xlu0 %2045
      %vm2048 = vcmask 850944
      %v2050 = vsel %vm2048, %v1953, 0
      %2052 = vmatpush.msra.mxu0 %v1984
      %2053 = vmatpush.msra.mxu0 %v1982
      %2054 = vmatpush.msra.mxu0 %v1980
      %2055 = vmatpush.msra.mxu0 %v1978
      %2056 = vmatpush.msra.mxu0 %v1976
      %2057 = vmatpush.msra.mxu0 %v1974
      %2058 = vmatpush.msra.mxu0 %v1972
      %2059 = vmatpush.msra.mxu0 %v1970
      %2060 = vmatpush.msra.mxu0 %v1968
      %2061 = vmatpush.msra.mxu0 %v1966
      %2062 = vmatpush.msra.mxu0 %v1964
      %2063 = vmatpush.msra.mxu0 %v1962
      %2064 = vmatpush.msra.mxu0 %v1960
      %2065 = vmatpush.msra.mxu0 %v1958
      %2066 = vmatpush.msra.mxu0 %v1956
      %2067 = vmatpush.msra.mxu0 %v1954
      %2068 = vmatmul.f32.gmra.mxu0 %v1951
      %v2069 = vpop.f32.mrf.mxu0
      %v2070 = vadd.f32 %v2046, %v2069
      %2071 = vdwg.mxu0
      %2072 = vmatpush.msra.mxu0 %v2016
      %2073 = vmatpush.msra.mxu0 %v2014
      %2074 = vmatpush.msra.mxu0 %v2012
      %2075 = vmatpush.msra.mxu0 %v2010
      %2076 = vmatpush.msra.mxu0 %v2008
      %2077 = vmatpush.msra.mxu0 %v2006
      %2078 = vmatpush.msra.mxu0 %v2004
      %2079 = vmatpush.msra.mxu0 %v2002
      %2080 = vmatpush.msra.mxu0 %v2000
      %2081 = vmatpush.msra.mxu0 %v1998
      %2082 = vmatpush.msra.mxu0 %v1996
      %2083 = vmatpush.msra.mxu0 %v1994
      %2084 = vmatpush.msra.mxu0 %v1992
      %2085 = vmatpush.msra.mxu0 %v1990
      %2086 = vmatpush.msra.mxu0 %v1988
      %2087 = vmatpush.msra.mxu0 %v1986
      %2088 = vmatmul.f32.gmra.mxu0 %v1952
      %v2089 = vpop.f32.mrf.mxu0
      %v2090 = vadd.f32 %v2070, %v2089
      %2091 = vdwg.mxu0
      %2092 = vmatpush.msra.mxu0 0.0
      %2093 = vmatpush.msra.mxu0 0.0
      %2094 = vmatpush.msra.mxu0 0.0
      %2095 = vmatpush.msra.mxu0 %v2042
      %2096 = vmatpush.msra.mxu0 %v2040
      %2097 = vmatpush.msra.mxu0 %v2038
      %2098 = vmatpush.msra.mxu0 %v2036
      %2099 = vmatpush.msra.mxu0 %v2034
      %2100 = vmatpush.msra.mxu0 %v2032
      %2101 = vmatpush.msra.mxu0 %v2030
      %2102 = vmatpush.msra.mxu0 %v2028
      %2103 = vmatpush.msra.mxu0 %v2026
      %2104 = vmatpush.msra.mxu0 %v2024
      %2105 = vmatpush.msra.mxu0 %v2022
      %2106 = vmatpush.msra.mxu0 %v2020
      %2107 = vmatpush.msra.mxu0 %v2018
      %2108 = vmatmul.f32.gmra.mxu0 %v2050
      %v2109 = vpop.f32.mrf.mxu0
      %v2110 = vadd.f32 %v2090, %v2109
      %2111 = vdwg.mxu0
      %2112 = vmatpush.msra.mxu0 %v1985
      %2113 = vmatpush.msra.mxu0 %v1983
      %2114 = vmatpush.msra.mxu0 %v1981
      %2115 = vmatpush.msra.mxu0 %v1979
      %2116 = vmatpush.msra.mxu0 %v1977
      %2117 = vmatpush.msra.mxu0 %v1975
      %2118 = vmatpush.msra.mxu0 %v1973
      %2119 = vmatpush.msra.mxu0 %v1971
      %2120 = vmatpush.msra.mxu0 %v1969
      %2121 = vmatpush.msra.mxu0 %v1967
      %2122 = vmatpush.msra.mxu0 %v1965
      %2123 = vmatpush.msra.mxu0 %v1963
      %2124 = vmatpush.msra.mxu0 %v1961
      %2125 = vmatpush.msra.mxu0 %v1959
      %2126 = vmatpush.msra.mxu0 %v1957
      %2127 = vmatpush.msra.mxu0 %v1955
      %2128 = vmatmul.f32.gmra.mxu0 %v1951
      %v2129 = vpop.f32.mrf.mxu0
      %v2130 = vadd.f32 %v2046, %v2129
      %2131 = vdwg.mxu0
      %2132 = vmatpush.msra.mxu0 %v2017
      %2133 = vmatpush.msra.mxu0 %v2015
      %2134 = vmatpush.msra.mxu0 %v2013
      %2135 = vmatpush.msra.mxu0 %v2011
      %2136 = vmatpush.msra.mxu0 %v2009
      %2137 = vmatpush.msra.mxu0 %v2007
      %2138 = vmatpush.msra.mxu0 %v2005
      %2139 = vmatpush.msra.mxu0 %v2003
      %2140 = vmatpush.msra.mxu0 %v2001
      %2141 = vmatpush.msra.mxu0 %v1999
      %2142 = vmatpush.msra.mxu0 %v1997
      %2143 = vmatpush.msra.mxu0 %v1995
      %2144 = vmatpush.msra.mxu0 %v1993
      %2145 = vmatpush.msra.mxu0 %v1991
      %2146 = vmatpush.msra.mxu0 %v1989
      %2147 = vmatpush.msra.mxu0 %v1987
      %2148 = vmatmul.f32.gmra.mxu0 %v1952
      %v2149 = vpop.f32.mrf.mxu0
      %v2150 = vadd.f32 %v2130, %v2149
      %2151 = vdwg.mxu0
      %2152 = vmatpush.msra.mxu0 0.0
      %2153 = vmatpush.msra.mxu0 0.0
      %2154 = vmatpush.msra.mxu0 0.0
      %2155 = vmatpush.msra.mxu0 %v2043
      %2156 = vmatpush.msra.mxu0 %v2041
      %2157 = vmatpush.msra.mxu0 %v2039
      %2158 = vmatpush.msra.mxu0 %v2037
      %2159 = vmatpush.msra.mxu0 %v2035
      %2160 = vmatpush.msra.mxu0 %v2033
      %2161 = vmatpush.msra.mxu0 %v2031
      %2162 = vmatpush.msra.mxu0 %v2029
      %2163 = vmatpush.msra.mxu0 %v2027
      %2164 = vmatpush.msra.mxu0 %v2025
      %2165 = vmatpush.msra.mxu0 %v2023
      %2166 = vmatpush.msra.mxu0 %v2021
      %2167 = vmatpush.msra.mxu0 %v2019
      %2168 = vmatmul.f32.gmra.mxu0 %v2050
      %v2169 = vpop.f32.mrf.mxu0
      %v2170 = vadd.f32 %v2150, %v2169
      %2171 = vdwg.mxu0
      %vm2172 = vcmp.ge.f32.partialorder %v2110, 0.0
      %vm2173 = vcmp.ge.f32.partialorder %v2170, 0.0
      %v2174 = vmul.f32 %v2110, 0.01
      %v2175 = vmul.f32 %v2170, 0.01
      %v2176 = vsel %vm2172, %v2110, %v2174
      %v2177 = vsel %vm2173, %v2170, %v2175
      %2178 = vrot.lane.b32.xlu0 %v2176, 113
      %v2179 = vpop.permute.xlu0 %2178
      %2180 = vrot.lane.b32.xlu0 %v2177, 113
      %v2181 = vpop.permute.xlu0 %2180
      %v2182 = vsel %vm371, %v2179, %v2181
      %v2183 = vsel %vm371, %v2181, %v2179
      %2184 = vrot.lane.b32.xlu0 %v2176, 1
      %v2185 = vpop.permute.xlu0 %2184
      %2186 = vrot.lane.b32.xlu0 %v2177, 1
      %v2187 = vpop.permute.xlu0 %2186
      %v2188 = vsel %vm378, %v2185, %v2187
      %v2189 = vsel %vm378, %v2187, %v2185
      %v2190 = vsel %vm383, %v2182, %v2189
      %v2191 = vsel %vm384, %v2183, %v2188
      %2192 = vrot.lane.b32.xlu0 %v2176, 15
      %v2193 = vpop.permute.xlu0 %2192
      %2194 = vrot.lane.b32.xlu0 %v2177, 15
      %v2195 = vpop.permute.xlu0 %2194
      %v2196 = vsel %vm391, %v2193, %v2195
      %v2197 = vsel %vm391, %v2195, %v2193
      %2198 = vrot.lane.b32.xlu0 %v2176, 127
      %v2199 = vpop.permute.xlu0 %2198
      %2200 = vrot.lane.b32.xlu0 %v2177, 127
      %v2201 = vpop.permute.xlu0 %2200
      %v2202 = vsel %vm398, %v2199, %v2201
      %v2203 = vsel %vm398, %v2201, %v2199
      %v2204 = vsel %vm403, %v2197, %v2202
      %v2205 = vsel %vm404, %v2196, %v2203
      %2206 = vrot.lane.b32.xlu0 %v2190, 16
      %v2207 = vpop.permute.xlu0 %2206
      %2208 = vrot.lane.b32.xlu0 %v2191, 16
      %v2209 = vpop.permute.xlu0 %2208
      %v2210 = vsel %vm411, %v2207, %v2209
      %v2211 = vsel %vm411, %v2209, %v2207
      %2212 = vst [vmem:[#allocation3] sm:$0xff] %v2211
      %2213 = vst [vmem:[#allocation3 + $0x8] sm:$0xff] %v2210
      %2214 = vrot.lane.b32.xlu0 %v2176, 16
      %v2215 = vpop.permute.xlu0 %2214
      %2216 = vrot.lane.b32.xlu0 %v2177, 16
      %v2217 = vpop.permute.xlu0 %2216
      %v2218 = vsel %vm411, %v2215, %v2217
      %v2219 = vsel %vm411, %v2217, %v2215
      %2220 = vst [vmem:[#allocation3 + $0x10] sm:$0xff] %v2219
      %2221 = vst [vmem:[#allocation3 + $0x18] sm:$0xff] %v2218
      %2222 = vrot.lane.b32.xlu0 %v2204, 16
      %v2223 = vpop.permute.xlu0 %2222
      %2224 = vrot.lane.b32.xlu0 %v2205, 16
      %v2225 = vpop.permute.xlu0 %2224
      %v2226 = vsel %vm411, %v2223, %v2225
      %v2227 = vsel %vm411, %v2225, %v2223
      %2228 = vst [vmem:[#allocation3 + $0x20] sm:$0xff] %v2227
      %2229 = vst [vmem:[#allocation3 + $0x28] sm:$0xff] %v2226
      %2230 = vst [vmem:[#allocation3 + $0x30] sm:$0xff] %v2190
      %2231 = vst [vmem:[#allocation3 + $0x38] sm:$0xff] %v2191
      %2232 = vst [vmem:[#allocation3 + $0x40] sm:$0xff] %v2176
      %2233 = vst [vmem:[#allocation3 + $0x48] sm:$0xff] %v2177
      %2234 = vst [vmem:[#allocation3 + $0x50] sm:$0xff] %v2204
      %2235 = vst [vmem:[#allocation3 + $0x58] sm:$0xff] %v2205
      %2236 = vrot.lane.b32.xlu0 %v2190, 112
      %v2237 = vpop.permute.xlu0 %2236
      %2238 = vrot.lane.b32.xlu0 %v2191, 112
      %v2239 = vpop.permute.xlu0 %2238
      %v2240 = vsel %vm442, %v2237, %v2239
      %v2241 = vsel %vm442, %v2239, %v2237
      %2242 = vst [vmem:[#allocation3 + $0x60] sm:$0xff] %v2240
      %2243 = vst [vmem:[#allocation3 + $0x68] sm:$0xff] %v2241
      %2244 = vrot.lane.b32.xlu0 %v2176, 112
      %v2245 = vpop.permute.xlu0 %2244
      %2246 = vrot.lane.b32.xlu0 %v2177, 112
      %v2247 = vpop.permute.xlu0 %2246
      %v2248 = vsel %vm442, %v2245, %v2247
      %v2249 = vsel %vm442, %v2247, %v2245
      %2250 = vst [vmem:[#allocation3 + $0x70] sm:$0xff] %v2248
      %2251 = vst [vmem:[#allocation3 + $0x78] sm:$0xff] %v2249
      %2252 = vrot.lane.b32.xlu0 %v2204, 112
      %v2253 = vpop.permute.xlu0 %2252
      %2254 = vrot.lane.b32.xlu0 %v2205, 112
      %v2255 = vpop.permute.xlu0 %2254
      %v2256 = vsel %vm442, %v2253, %v2255
      %v2257 = vsel %vm442, %v2255, %v2253
      %2258 = vst [vmem:[#allocation3 + $0x80] sm:$0xff] %v2256
      %2259 = vst [vmem:[#allocation3 + $0x88] sm:$0xff] %v2257
      %s2260 = scalar_lea.vmem %s6, 32
      %v2261 = vld [vmem:[%s2260] sm:$0xff]
      %v2262 = vld [vmem:[#allocation3] sm:$0xff]
      %v2263 = vld [vmem:[#allocation3 + $0x8] sm:$0xff]
      %v2264 = vld [vmem:[#allocation3 + $0x10] sm:$0xff]
      %v2265 = vld [vmem:[#allocation3 + $0x18] sm:$0xff]
      %v2266 = vld [vmem:[#allocation3 + $0x20] sm:$0xff]
      %v2267 = vld [vmem:[#allocation3 + $0x28] sm:$0xff]
      %v2268 = vld [vmem:[#allocation3 + $0x30] sm:$0xff]
      %v2269 = vld [vmem:[#allocation3 + $0x38] sm:$0xff]
      %v2270 = vld [vmem:[#allocation3 + $0x40] sm:$0xff]
      %v2271 = vld [vmem:[#allocation3 + $0x48] sm:$0xff]
      %v2272 = vld [vmem:[#allocation3 + $0x50] sm:$0xff]
      %v2273 = vld [vmem:[#allocation3 + $0x58] sm:$0xff]
      %v2274 = vld [vmem:[#allocation3 + $0x60] sm:$0xff]
      %v2275 = vld [vmem:[#allocation3 + $0x68] sm:$0xff]
      %v2276 = vld [vmem:[#allocation3 + $0x70] sm:$0xff]
      %v2277 = vld [vmem:[#allocation3 + $0x78] sm:$0xff]
      %v2278 = vld [vmem:[#allocation3 + $0x80] sm:$0xff]
      %v2279 = vld [vmem:[#allocation3 + $0x88] sm:$0xff]
      %2280 = vset.pattern.permute.xlu0 9
      %2281 = vperm.xlu0 %2280, %v335
      %v2282 = vpop.permute.xlu0 %2281
      %v2285 = vsel %vm487, %v2261, 0
      %2287 = vmatpush.msra.mxu0 0.0
      %2288 = vmatpush.msra.mxu0 0.0
      %2289 = vmatpush.msra.mxu0 0.0
      %2290 = vmatpush.msra.mxu0 0.0
      %2291 = vmatpush.msra.mxu0 0.0
      %2292 = vmatpush.msra.mxu0 0.0
      %2293 = vmatpush.msra.mxu0 0.0
      %2294 = vmatpush.msra.mxu0 %v2278
      %2295 = vmatpush.msra.mxu0 %v2276
      %2296 = vmatpush.msra.mxu0 %v2274
      %2297 = vmatpush.msra.mxu0 %v2272
      %2298 = vmatpush.msra.mxu0 %v2270
      %2299 = vmatpush.msra.mxu0 %v2268
      %2300 = vmatpush.msra.mxu0 %v2266
      %2301 = vmatpush.msra.mxu0 %v2264
      %2302 = vmatpush.msra.mxu0 %v2262
      %2303 = vmatmul.f32.gmra.mxu0 %v2285
      %v2304 = vpop.f32.mrf.mxu0
      %v2305 = vadd.f32 %v2282, %v2304
      %2306 = vdwg.mxu0
      %2307 = vmatpush.msra.mxu0 0.0
      %2308 = vmatpush.msra.mxu0 0.0
      %2309 = vmatpush.msra.mxu0 0.0
      %2310 = vmatpush.msra.mxu0 0.0
      %2311 = vmatpush.msra.mxu0 0.0
      %2312 = vmatpush.msra.mxu0 0.0
      %2313 = vmatpush.msra.mxu0 0.0
      %2314 = vmatpush.msra.mxu0 %v2279
      %2315 = vmatpush.msra.mxu0 %v2277
      %2316 = vmatpush.msra.mxu0 %v2275
      %2317 = vmatpush.msra.mxu0 %v2273
      %2318 = vmatpush.msra.mxu0 %v2271
      %2319 = vmatpush.msra.mxu0 %v2269
      %2320 = vmatpush.msra.mxu0 %v2267
      %2321 = vmatpush.msra.mxu0 %v2265
      %2322 = vmatpush.msra.mxu0 %v2263
      %2323 = vmatmul.f32.gmra.mxu0 %v2285
      %v2324 = vpop.f32.mrf.mxu0
      %v2325 = vadd.f32 %v2282, %v2324
      %2326 = vdwg.mxu0
      %2327 = vrot.lane.b32.xlu0 %v2305, 113
      %v2328 = vpop.permute.xlu0 %2327
      %2329 = vrot.lane.b32.xlu0 %v2325, 113
      %v2330 = vpop.permute.xlu0 %2329
      %v2331 = vsel %vm371, %v2328, %v2330
      %v2332 = vsel %vm371, %v2330, %v2328
      %2333 = vrot.lane.b32.xlu0 %v2305, 1
      %v2334 = vpop.permute.xlu0 %2333
      %2335 = vrot.lane.b32.xlu0 %v2325, 1
      %v2336 = vpop.permute.xlu0 %2335
      %v2337 = vsel %vm378, %v2334, %v2336
      %v2338 = vsel %vm378, %v2336, %v2334
      %v2339 = vsel %vm383, %v2331, %v2338
      %v2340 = vsel %vm384, %v2332, %v2337
      %2341 = vrot.lane.b32.xlu0 %v2305, 15
      %v2342 = vpop.permute.xlu0 %2341
      %2343 = vrot.lane.b32.xlu0 %v2325, 15
      %v2344 = vpop.permute.xlu0 %2343
      %v2345 = vsel %vm391, %v2342, %v2344
      %v2346 = vsel %vm391, %v2344, %v2342
      %2347 = vrot.lane.b32.xlu0 %v2305, 127
      %v2348 = vpop.permute.xlu0 %2347
      %2349 = vrot.lane.b32.xlu0 %v2325, 127
      %v2350 = vpop.permute.xlu0 %2349
      %v2351 = vsel %vm398, %v2348, %v2350
      %v2352 = vsel %vm398, %v2350, %v2348
      %v2353 = vsel %vm403, %v2346, %v2351
      %v2354 = vsel %vm404, %v2345, %v2352
      %2355 = vrot.lane.b32.xlu0 %v2339, 16
      %v2356 = vpop.permute.xlu0 %2355
      %2357 = vrot.lane.b32.xlu0 %v2340, 16
      %v2358 = vpop.permute.xlu0 %2357
      %v2359 = vsel %vm411, %v2356, %v2358
      %v2360 = vsel %vm411, %v2358, %v2356
      %2361 = vst [vmem:[#allocation2 + $0x2d0] sm:$0xff] %v2360
      %2362 = vst [vmem:[#allocation2 + $0x2d8] sm:$0xff] %v2359
      %2363 = vrot.lane.b32.xlu0 %v2305, 16
      %v2364 = vpop.permute.xlu0 %2363
      %2365 = vrot.lane.b32.xlu0 %v2325, 16
      %v2366 = vpop.permute.xlu0 %2365
      %v2367 = vsel %vm411, %v2364, %v2366
      %v2368 = vsel %vm411, %v2366, %v2364
      %2369 = vst [vmem:[#allocation2 + $0x2e0] sm:$0xff] %v2368
      %2370 = vst [vmem:[#allocation2 + $0x2e8] sm:$0xff] %v2367
      %2371 = vrot.lane.b32.xlu0 %v2353, 16
      %v2372 = vpop.permute.xlu0 %2371
      %2373 = vrot.lane.b32.xlu0 %v2354, 16
      %v2374 = vpop.permute.xlu0 %2373
      %v2375 = vsel %vm411, %v2372, %v2374
      %v2376 = vsel %vm411, %v2374, %v2372
      %2377 = vst [vmem:[#allocation2 + $0x2f0] sm:$0xff] %v2376
      %2378 = vst [vmem:[#allocation2 + $0x2f8] sm:$0xff] %v2375
      %2379 = vst [vmem:[#allocation2 + $0x300] sm:$0xff] %v2339
      %2380 = vst [vmem:[#allocation2 + $0x308] sm:$0xff] %v2340
      %2381 = vst [vmem:[#allocation2 + $0x310] sm:$0xff] %v2305
      %2382 = vst [vmem:[#allocation2 + $0x318] sm:$0xff] %v2325
      %2383 = vst [vmem:[#allocation2 + $0x320] sm:$0xff] %v2353
      %2384 = vst [vmem:[#allocation2 + $0x328] sm:$0xff] %v2354
      %2385 = vrot.lane.b32.xlu0 %v2339, 112
      %v2386 = vpop.permute.xlu0 %2385
      %2387 = vrot.lane.b32.xlu0 %v2340, 112
      %v2388 = vpop.permute.xlu0 %2387
      %v2389 = vsel %vm442, %v2386, %v2388
      %v2390 = vsel %vm442, %v2388, %v2386
      %2391 = vst [vmem:[#allocation2 + $0x330] sm:$0xff] %v2389
      %2392 = vst [vmem:[#allocation2 + $0x338] sm:$0xff] %v2390
      %2393 = vrot.lane.b32.xlu0 %v2305, 112
      %v2394 = vpop.permute.xlu0 %2393
      %2395 = vrot.lane.b32.xlu0 %v2325, 112
      %v2396 = vpop.permute.xlu0 %2395
      %v2397 = vsel %vm442, %v2394, %v2396
      %v2398 = vsel %vm442, %v2396, %v2394
      %2399 = vst [vmem:[#allocation2 + $0x340] sm:$0xff] %v2397
      %2400 = vst [vmem:[#allocation2 + $0x348] sm:$0xff] %v2398
      %2401 = vrot.lane.b32.xlu0 %v2353, 112
      %v2402 = vpop.permute.xlu0 %2401
      %2403 = vrot.lane.b32.xlu0 %v2354, 112
      %v2404 = vpop.permute.xlu0 %2403
      %v2405 = vsel %vm442, %v2402, %v2404
      %v2406 = vsel %vm442, %v2404, %v2402
      %2407 = vst [vmem:[#allocation2 + $0x350] sm:$0xff] %v2405
      %2408 = vst [vmem:[#allocation2 + $0x358] sm:$0xff] %v2406
      %v2409 = vld [vmem:[%s7] sm:$0xff]
      %v2410 = vld [vmem:[%s7 + $0x8] sm:$0xff]
      %v2411 = vld [vmem:[%s7 + $0x10] sm:$0xff]
      %v2412 = vld [vmem:[%s7 + $0x18] sm:$0xff]
      %v2413 = vld [vmem:[#allocation2] sm:$0xff]
      %v2414 = vld [vmem:[#allocation2 + $0x8] sm:$0xff]
      %v2415 = vld [vmem:[#allocation2 + $0x10] sm:$0xff]
      %v2416 = vld [vmem:[#allocation2 + $0x18] sm:$0xff]
      %v2417 = vld [vmem:[#allocation2 + $0x20] sm:$0xff]
      %v2418 = vld [vmem:[#allocation2 + $0x28] sm:$0xff]
      %v2419 = vld [vmem:[#allocation2 + $0x30] sm:$0xff]
      %v2420 = vld [vmem:[#allocation2 + $0x38] sm:$0xff]
      %v2421 = vld [vmem:[#allocation2 + $0x40] sm:$0xff]
      %v2422 = vld [vmem:[#allocation2 + $0x48] sm:$0xff]
      %v2423 = vld [vmem:[#allocation2 + $0x50] sm:$0xff]
      %v2424 = vld [vmem:[#allocation2 + $0x58] sm:$0xff]
      %v2425 = vld [vmem:[#allocation2 + $0x60] sm:$0xff]
      %v2426 = vld [vmem:[#allocation2 + $0x68] sm:$0xff]
      %v2427 = vld [vmem:[#allocation2 + $0x70] sm:$0xff]
      %v2428 = vld [vmem:[#allocation2 + $0x78] sm:$0xff]
      %v2429 = vld [vmem:[#allocation2 + $0x80] sm:$0xff]
      %v2430 = vld [vmem:[#allocation2 + $0x88] sm:$0xff]
      %v2431 = vld [vmem:[#allocation2 + $0x90] sm:$0xff]
      %v2432 = vld [vmem:[#allocation2 + $0x98] sm:$0xff]
      %v2433 = vld [vmem:[#allocation2 + $0xa0] sm:$0xff]
      %v2434 = vld [vmem:[#allocation2 + $0xa8] sm:$0xff]
      %v2435 = vld [vmem:[#allocation2 + $0xb0] sm:$0xff]
      %v2436 = vld [vmem:[#allocation2 + $0xb8] sm:$0xff]
      %v2437 = vld [vmem:[#allocation2 + $0xc0] sm:$0xff]
      %v2438 = vld [vmem:[#allocation2 + $0xc8] sm:$0xff]
      %v2439 = vld [vmem:[#allocation2 + $0xd0] sm:$0xff]
      %v2440 = vld [vmem:[#allocation2 + $0xd8] sm:$0xff]
      %v2441 = vld [vmem:[#allocation2 + $0xe0] sm:$0xff]
      %v2442 = vld [vmem:[#allocation2 + $0xe8] sm:$0xff]
      %v2443 = vld [vmem:[#allocation2 + $0xf0] sm:$0xff]
      %v2444 = vld [vmem:[#allocation2 + $0xf8] sm:$0xff]
      %v2445 = vld [vmem:[#allocation2 + $0x100] sm:$0xff]
      %v2446 = vld [vmem:[#allocation2 + $0x108] sm:$0xff]
      %v2447 = vld [vmem:[#allocation2 + $0x110] sm:$0xff]
      %v2448 = vld [vmem:[#allocation2 + $0x118] sm:$0xff]
      %v2449 = vld [vmem:[#allocation2 + $0x120] sm:$0xff]
      %v2450 = vld [vmem:[#allocation2 + $0x128] sm:$0xff]
      %v2451 = vld [vmem:[#allocation2 + $0x130] sm:$0xff]
      %v2452 = vld [vmem:[#allocation2 + $0x138] sm:$0xff]
      %v2453 = vld [vmem:[#allocation2 + $0x140] sm:$0xff]
      %v2454 = vld [vmem:[#allocation2 + $0x148] sm:$0xff]
      %v2455 = vld [vmem:[#allocation2 + $0x150] sm:$0xff]
      %v2456 = vld [vmem:[#allocation2 + $0x158] sm:$0xff]
      %v2457 = vld [vmem:[#allocation2 + $0x160] sm:$0xff]
      %v2458 = vld [vmem:[#allocation2 + $0x168] sm:$0xff]
      %v2459 = vld [vmem:[#allocation2 + $0x170] sm:$0xff]
      %v2460 = vld [vmem:[#allocation2 + $0x178] sm:$0xff]
      %v2461 = vld [vmem:[#allocation2 + $0x180] sm:$0xff]
      %v2462 = vld [vmem:[#allocation2 + $0x188] sm:$0xff]
      %v2463 = vld [vmem:[#allocation2 + $0x190] sm:$0xff]
      %v2464 = vld [vmem:[#allocation2 + $0x198] sm:$0xff]
      %v2465 = vld [vmem:[#allocation2 + $0x1a0] sm:$0xff]
      %v2466 = vld [vmem:[#allocation2 + $0x1a8] sm:$0xff]
      %v2467 = vld [vmem:[#allocation2 + $0x1b0] sm:$0xff]
      %v2468 = vld [vmem:[#allocation2 + $0x1b8] sm:$0xff]
      %v2469 = vld [vmem:[#allocation2 + $0x1c0] sm:$0xff]
      %v2470 = vld [vmem:[#allocation2 + $0x1c8] sm:$0xff]
      %v2471 = vld [vmem:[#allocation2 + $0x1d0] sm:$0xff]
      %v2472 = vld [vmem:[#allocation2 + $0x1d8] sm:$0xff]
      %v2473 = vld [vmem:[#allocation2 + $0x1e0] sm:$0xff]
      %v2474 = vld [vmem:[#allocation2 + $0x1e8] sm:$0xff]
      %v2475 = vld [vmem:[#allocation2 + $0x1f0] sm:$0xff]
      %v2476 = vld [vmem:[#allocation2 + $0x1f8] sm:$0xff]
      %v2477 = vld [vmem:[#allocation2 + $0x200] sm:$0xff]
      %v2478 = vld [vmem:[#allocation2 + $0x208] sm:$0xff]
      %v2479 = vld [vmem:[#allocation2 + $0x210] sm:$0xff]
      %v2480 = vld [vmem:[#allocation2 + $0x218] sm:$0xff]
      %v2481 = vld [vmem:[#allocation2 + $0x220] sm:$0xff]
      %v2482 = vld [vmem:[#allocation2 + $0x228] sm:$0xff]
      %v2483 = vld [vmem:[#allocation2 + $0x230] sm:$0xff]
      %v2484 = vld [vmem:[#allocation2 + $0x238] sm:$0xff]
      %v2485 = vld [vmem:[#allocation2 + $0x240] sm:$0xff]
      %v2486 = vld [vmem:[#allocation2 + $0x248] sm:$0xff]
      %v2487 = vld [vmem:[#allocation2 + $0x250] sm:$0xff]
      %v2488 = vld [vmem:[#allocation2 + $0x258] sm:$0xff]
      %v2489 = vld [vmem:[#allocation2 + $0x260] sm:$0xff]
      %v2490 = vld [vmem:[#allocation2 + $0x268] sm:$0xff]
      %v2491 = vld [vmem:[#allocation2 + $0x270] sm:$0xff]
      %v2492 = vld [vmem:[#allocation2 + $0x278] sm:$0xff]
      %v2493 = vld [vmem:[#allocation2 + $0x280] sm:$0xff]
      %v2494 = vld [vmem:[#allocation2 + $0x288] sm:$0xff]
      %v2495 = vld [vmem:[#allocation2 + $0x290] sm:$0xff]
      %v2496 = vld [vmem:[#allocation2 + $0x298] sm:$0xff]
      %v2497 = vld [vmem:[#allocation2 + $0x2a0] sm:$0xff]
      %v2498 = vld [vmem:[#allocation2 + $0x2a8] sm:$0xff]
      %v2499 = vld [vmem:[#allocation2 + $0x2b0] sm:$0xff]
      %v2500 = vld [vmem:[#allocation2 + $0x2b8] sm:$0xff]
      %v2501 = vld [vmem:[#allocation2 + $0x2c0] sm:$0xff]
      %v2502 = vld [vmem:[#allocation2 + $0x2c8] sm:$0xff]
      %v2503 = vld [vmem:[#allocation2 + $0x2d0] sm:$0xff]
      %v2504 = vld [vmem:[#allocation2 + $0x2d8] sm:$0xff]
      %v2505 = vld [vmem:[#allocation2 + $0x2e0] sm:$0xff]
      %v2506 = vld [vmem:[#allocation2 + $0x2e8] sm:$0xff]
      %v2507 = vld [vmem:[#allocation2 + $0x2f0] sm:$0xff]
      %v2508 = vld [vmem:[#allocation2 + $0x2f8] sm:$0xff]
      %v2509 = vld [vmem:[#allocation2 + $0x300] sm:$0xff]
      %v2510 = vld [vmem:[#allocation2 + $0x308] sm:$0xff]
      %v2511 = vld [vmem:[#allocation2 + $0x310] sm:$0xff]
      %v2512 = vld [vmem:[#allocation2 + $0x318] sm:$0xff]
      %v2513 = vld [vmem:[#allocation2 + $0x320] sm:$0xff]
      %v2514 = vld [vmem:[#allocation2 + $0x328] sm:$0xff]
      %v2515 = vld [vmem:[#allocation2 + $0x330] sm:$0xff]
      %v2516 = vld [vmem:[#allocation2 + $0x338] sm:$0xff]
      %v2517 = vld [vmem:[#allocation2 + $0x340] sm:$0xff]
      %v2518 = vld [vmem:[#allocation2 + $0x348] sm:$0xff]
      %v2519 = vld [vmem:[#allocation2 + $0x350] sm:$0xff]
      %v2520 = vld [vmem:[#allocation2 + $0x358] sm:$0xff]
      %2521 = vset.pattern.permute.xlu0 10
      %2522 = vperm.xlu0 %2521, %v335
      %v2523 = vpop.permute.xlu0 %2522
      %vm2525 = vcmask 392192
      %v2527 = vsel %vm2525, %v2412, 0
      %2529 = vmatpush.msra.mxu0 %v2443
      %2530 = vmatpush.msra.mxu0 %v2441
      %2531 = vmatpush.msra.mxu0 %v2439
      %2532 = vmatpush.msra.mxu0 %v2437
      %2533 = vmatpush.msra.mxu0 %v2435
      %2534 = vmatpush.msra.mxu0 %v2433
      %2535 = vmatpush.msra.mxu0 %v2431
      %2536 = vmatpush.msra.mxu0 %v2429
      %2537 = vmatpush.msra.mxu0 %v2427
      %2538 = vmatpush.msra.mxu0 %v2425
      %2539 = vmatpush.msra.mxu0 %v2423
      %2540 = vmatpush.msra.mxu0 %v2421
      %2541 = vmatpush.msra.mxu0 %v2419
      %2542 = vmatpush.msra.mxu0 %v2417
      %2543 = vmatpush.msra.mxu0 %v2415
      %2544 = vmatpush.msra.mxu0 %v2413
      %2545 = vmatmul.f32.gmra.mxu0 %v2409
      %v2546 = vpop.f32.mrf.mxu0
      %v2547 = vadd.f32 %v2523, %v2546
      %2548 = vdwg.mxu0
      %2549 = vmatpush.msra.mxu0 %v2475
      %2550 = vmatpush.msra.mxu0 %v2473
      %2551 = vmatpush.msra.mxu0 %v2471
      %2552 = vmatpush.msra.mxu0 %v2469
      %2553 = vmatpush.msra.mxu0 %v2467
      %2554 = vmatpush.msra.mxu0 %v2465
      %2555 = vmatpush.msra.mxu0 %v2463
      %2556 = vmatpush.msra.mxu0 %v2461
      %2557 = vmatpush.msra.mxu0 %v2459
      %2558 = vmatpush.msra.mxu0 %v2457
      %2559 = vmatpush.msra.mxu0 %v2455
      %2560 = vmatpush.msra.mxu0 %v2453
      %2561 = vmatpush.msra.mxu0 %v2451
      %2562 = vmatpush.msra.mxu0 %v2449
      %2563 = vmatpush.msra.mxu0 %v2447
      %2564 = vmatpush.msra.mxu0 %v2445
      %2565 = vmatmul.f32.gmra.mxu0 %v2410
      %v2566 = vpop.f32.mrf.mxu0
      %v2567 = vadd.f32 %v2547, %v2566
      %2568 = vdwg.mxu0
      %2569 = vmatpush.msra.mxu0 %v2507
      %2570 = vmatpush.msra.mxu0 %v2505
      %2571 = vmatpush.msra.mxu0 %v2503
      %2572 = vmatpush.msra.mxu0 %v2501
      %2573 = vmatpush.msra.mxu0 %v2499
      %2574 = vmatpush.msra.mxu0 %v2497
      %2575 = vmatpush.msra.mxu0 %v2495
      %2576 = vmatpush.msra.mxu0 %v2493
      %2577 = vmatpush.msra.mxu0 %v2491
      %2578 = vmatpush.msra.mxu0 %v2489
      %2579 = vmatpush.msra.mxu0 %v2487
      %2580 = vmatpush.msra.mxu0 %v2485
      %2581 = vmatpush.msra.mxu0 %v2483
      %2582 = vmatpush.msra.mxu0 %v2481
      %2583 = vmatpush.msra.mxu0 %v2479
      %2584 = vmatpush.msra.mxu0 %v2477
      %2585 = vmatmul.f32.gmra.mxu0 %v2411
      %v2586 = vpop.f32.mrf.mxu0
      %v2587 = vadd.f32 %v2567, %v2586
      %2588 = vdwg.mxu0
      %2589 = vmatpush.msra.mxu0 0.0
      %2590 = vmatpush.msra.mxu0 0.0
      %2591 = vmatpush.msra.mxu0 0.0
      %2592 = vmatpush.msra.mxu0 0.0
      %2593 = vmatpush.msra.mxu0 0.0
      %2594 = vmatpush.msra.mxu0 0.0
      %2595 = vmatpush.msra.mxu0 0.0
      %2596 = vmatpush.msra.mxu0 0.0
      %2597 = vmatpush.msra.mxu0 0.0
      %2598 = vmatpush.msra.mxu0 0.0
      %2599 = vmatpush.msra.mxu0 %v2519
      %2600 = vmatpush.msra.mxu0 %v2517
      %2601 = vmatpush.msra.mxu0 %v2515
      %2602 = vmatpush.msra.mxu0 %v2513
      %2603 = vmatpush.msra.mxu0 %v2511
      %2604 = vmatpush.msra.mxu0 %v2509
      %2605 = vmatmul.f32.gmra.mxu0 %v2527
      %v2606 = vpop.f32.mrf.mxu0
      %v2607 = vadd.f32 %v2587, %v2606
      %2608 = vdwg.mxu0
      %2609 = vmatpush.msra.mxu0 %v2444
      %2610 = vmatpush.msra.mxu0 %v2442
      %2611 = vmatpush.msra.mxu0 %v2440
      %2612 = vmatpush.msra.mxu0 %v2438
      %2613 = vmatpush.msra.mxu0 %v2436
      %2614 = vmatpush.msra.mxu0 %v2434
      %2615 = vmatpush.msra.mxu0 %v2432
      %2616 = vmatpush.msra.mxu0 %v2430
      %2617 = vmatpush.msra.mxu0 %v2428
      %2618 = vmatpush.msra.mxu0 %v2426
      %2619 = vmatpush.msra.mxu0 %v2424
      %2620 = vmatpush.msra.mxu0 %v2422
      %2621 = vmatpush.msra.mxu0 %v2420
      %2622 = vmatpush.msra.mxu0 %v2418
      %2623 = vmatpush.msra.mxu0 %v2416
      %2624 = vmatpush.msra.mxu0 %v2414
      %2625 = vmatmul.f32.gmra.mxu0 %v2409
      %v2626 = vpop.f32.mrf.mxu0
      %v2627 = vadd.f32 %v2523, %v2626
      %2628 = vdwg.mxu0
      %2629 = vmatpush.msra.mxu0 %v2476
      %2630 = vmatpush.msra.mxu0 %v2474
      %2631 = vmatpush.msra.mxu0 %v2472
      %2632 = vmatpush.msra.mxu0 %v2470
      %2633 = vmatpush.msra.mxu0 %v2468
      %2634 = vmatpush.msra.mxu0 %v2466
      %2635 = vmatpush.msra.mxu0 %v2464
      %2636 = vmatpush.msra.mxu0 %v2462
      %2637 = vmatpush.msra.mxu0 %v2460
      %2638 = vmatpush.msra.mxu0 %v2458
      %2639 = vmatpush.msra.mxu0 %v2456
      %2640 = vmatpush.msra.mxu0 %v2454
      %2641 = vmatpush.msra.mxu0 %v2452
      %2642 = vmatpush.msra.mxu0 %v2450
      %2643 = vmatpush.msra.mxu0 %v2448
      %2644 = vmatpush.msra.mxu0 %v2446
      %2645 = vmatmul.f32.gmra.mxu0 %v2410
      %v2646 = vpop.f32.mrf.mxu0
      %v2647 = vadd.f32 %v2627, %v2646
      %2648 = vdwg.mxu0
      %2649 = vmatpush.msra.mxu0 %v2508
      %2650 = vmatpush.msra.mxu0 %v2506
      %2651 = vmatpush.msra.mxu0 %v2504
      %2652 = vmatpush.msra.mxu0 %v2502
      %2653 = vmatpush.msra.mxu0 %v2500
      %2654 = vmatpush.msra.mxu0 %v2498
      %2655 = vmatpush.msra.mxu0 %v2496
      %2656 = vmatpush.msra.mxu0 %v2494
      %2657 = vmatpush.msra.mxu0 %v2492
      %2658 = vmatpush.msra.mxu0 %v2490
      %2659 = vmatpush.msra.mxu0 %v2488
      %2660 = vmatpush.msra.mxu0 %v2486
      %2661 = vmatpush.msra.mxu0 %v2484
      %2662 = vmatpush.msra.mxu0 %v2482
      %2663 = vmatpush.msra.mxu0 %v2480
      %2664 = vmatpush.msra.mxu0 %v2478
      %2665 = vmatmul.f32.gmra.mxu0 %v2411
      %v2666 = vpop.f32.mrf.mxu0
      %v2667 = vadd.f32 %v2647, %v2666
      %2668 = vdwg.mxu0
      %2669 = vmatpush.msra.mxu0 0.0
      %2670 = vmatpush.msra.mxu0 0.0
      %2671 = vmatpush.msra.mxu0 0.0
      %2672 = vmatpush.msra.mxu0 0.0
      %2673 = vmatpush.msra.mxu0 0.0
      %2674 = vmatpush.msra.mxu0 0.0
      %2675 = vmatpush.msra.mxu0 0.0
      %2676 = vmatpush.msra.mxu0 0.0
      %2677 = vmatpush.msra.mxu0 0.0
      %2678 = vmatpush.msra.mxu0 0.0
      %2679 = vmatpush.msra.mxu0 %v2520
      %2680 = vmatpush.msra.mxu0 %v2518
      %2681 = vmatpush.msra.mxu0 %v2516
      %2682 = vmatpush.msra.mxu0 %v2514
      %2683 = vmatpush.msra.mxu0 %v2512
      %2684 = vmatpush.msra.mxu0 %v2510
      %2685 = vmatmul.f32.gmra.mxu0 %v2527
      %v2686 = vpop.f32.mrf.mxu0
      %v2687 = vadd.f32 %v2667, %v2686
      %2688 = vdwg.mxu0
      %vm2689 = vcmp.ge.f32.partialorder %v2607, 0.0
      %vm2690 = vcmp.ge.f32.partialorder %v2687, 0.0
      %v2691 = vmul.f32 %v2607, 0.01
      %v2692 = vmul.f32 %v2687, 0.01
      %v2693 = vsel %vm2689, %v2607, %v2691
      %v2694 = vsel %vm2690, %v2687, %v2692
      %v2695 = vadd.f32 %v2693, %v333
      %v2696 = vadd.f32 %v2694, %v334
      %2697 = vst [vmem:[%s332] sm:$0xff] %v2695
      %2698 = vst [vmem:[%s332 + $0x8] sm:$0xff] %v2696
      %p2699 = scmp.lt.s32.totalorder %s20, 1
      %s2700 = scalar_select %p2699, %s20, 1
      %s2701 = smul.addr %s2700, 2
      %s2702 = smul.addr %s2701, 8
      %s2703 = scalar_lea.vmem %s9, %s2702
      // Predicated region
      $region57: #{dense_block_forward.1} parent=55 // pred_check
        %p2704 = pneg %p232
      $region58: #{dense_block_forward.1} parent=55 // pred_check_branch
        %2706 = sbr.rel (%p2704) target = $region60
      $region59: #{dense_block_forward.1} parent=55 // pred_region
        _
      $region60: #{dense_block_forward.1} parent=55 // pred_fallthru
        _
    $region56: #{dense_block_forward.1} parent=5 // pred_fallthru
      _
    %p2707 = scmp.le.s32.totalorder 2, %s15
    // Predicated region
    $region61: #{dense_block_forward.1} parent=5 // pred_check
      %p2708 = pneg %p2707
    $region62: #{dense_block_forward.1} parent=5 // pred_check_branch
      %2710 = sbr.rel (%p2708) target = $region64
    $region63: #{dense_block_forward.1} parent=5 // pred_region
      %s2711 = ssub.s32 %s15, 2
      // Predicated region
      $region65: #{dense_block_forward.1} parent=63 // pred_check
        %p2712 = pneg %p238
      $region66: #{dense_block_forward.1} parent=63 // pred_check_branch
        %2714 = sbr.rel (%p2712) target = $region68
      $region67: #{dense_block_forward.1} parent=63 // pred_region
        %p2715 = scmp.lt.s32.totalorder %s21, 1
        %s2716 = scalar_select %p2715, %s21, 1
        %s2717 = smul.addr %s2716, 2
        %s2718 = smul.addr %s2717, 8
        %s2719 = scalar_lea.vmem %s9, %s2718
      $region68: #{dense_block_forward.1} parent=63 // pred_fallthru
        _
    $region64: #{dense_block_forward.1} parent=5 // pred_fallthru
      _
  $region6: #{dense_block_forward.1} parent=0 // loop_footer
    %s19 = sadd.s32 1, %s15
  $region7: #{dense_block_forward.1} parent=0 // loop_footer_branch
    %14 = sbr.rel target = $region3
  $region8: #{dense_block_forward.1} parent=0 // loop_exit
    _

</llo_original>
